<compile_context>
chip_gen: v5e
topology: v5e:2x2
jax: 0.10.0
libtpu: 0.0.40
codegen_flags: <defaults>
</compile_context>

<pallas_src>
import numpy as np
import jax
import jax.numpy as jnp
from jax.experimental import pallas as pl
from jax.experimental.pallas import tpu as pltpu


def _cup_kernel(x_ref, w_ref, b_ref, o_ref):
    # x_ref : (1, H+2, W+2, 2*Cin)   padded (NOT dilated) input, [real | imag] channels,
    #                                resident across H tiles (constant block index).
    # w_ref : (4, 4, 2*Cin, 2*Cout)  [phase=2*ph+pw, tap=2*th+tw] complex-block weights.
    # b_ref : (1, 2*Cout)            combined bias [b_r - b_i | b_r + b_i].
    # o_ref : (1, 4, TH*W, 2*Cout)   per-phase dense output slab for this H tile.
    i = pl.program_id(1)                       # H-tile index
    _, _, THW, C2out = o_ref.shape
    Wd = x_ref.shape[2] - 2                    # un-padded width
    TH = THW // Wd
    C2in = x_ref.shape[-1]
    row0 = pl.multiple_of(i * TH, TH)          # first un-padded output-row "a" of this tile

    bias = b_ref[...]                          # (1, 2*Cout), broadcasts over rows

    for ph in range(2):
        for pw in range(2):
            p = 2 * ph + pw
            acc = jnp.zeros((THW, C2out), jnp.float32)
            for th in range(2):
                for tw in range(2):
                    t = 2 * th + tw
                    # window of the padded input feeding output phase (ph, pw), tap (th, tw)
                    win = x_ref[0,
                                pl.ds(row0 + ph + th, TH),
                                pl.ds(pw + tw, Wd),
                                :]                         # (TH, W, 2*Cin)
                    acc = acc + jnp.dot(win.reshape(THW, C2in),
                                        w_ref[p, t],
                                        preferred_element_type=jnp.float32)
            # bias + complex_relu (ReLU on real and imaginary halves independently)
            o_ref[0, p] = jnp.maximum(acc + bias, 0.0)


def cup_forward(x_r, x_i, w_r, w_i, b_r, b_i, *, tile_h=None, use_bf16=False):
    """CUp forward (ConvTranspose2d k=4, s=2, p=1 + complex ReLU).

    x_r/x_i: (N, Cin, H, W) float32; w_r/w_i: (Cin, Cout, 4, 4); b_r/b_i: (Cout,).
    Returns (out_r, out_i), each (N, Cout, 2H, 2W) float32 (NCHW)."""
    N, Cin, H, W = x_r.shape
    _, Cout, KH, KW = w_r.shape
    assert (KH, KW) == (4, 4), "CUp uses a fixed 4x4 transposed-conv kernel"
    OH, OW = 2 * H, 2 * W
    comp_dtype = jnp.bfloat16 if use_bf16 else jnp.float32

    # ---- H-tile selection (largest divisor of H <= 8, keep TH*W sublane-aligned) ----
    if tile_h is None:
        tile_h = 1
        for cand in range(1, min(H, 8) + 1):
            if H % cand == 0:
                tile_h = cand
    if H % tile_h != 0 or (tile_h != H and (tile_h * W) % 8 != 0):
        tile_h = H
    n_tiles = H // tile_h

    # ---- input glue: NCHW -> NHWC, merge real/imag channels, pad spatial by 1 ----
    def nhwc(x):
        return jnp.transpose(x, (0, 2, 3, 1)).astype(comp_dtype)

    x2 = jnp.concatenate([nhwc(x_r), nhwc(x_i)], axis=-1)           # (N, H, W, 2*Cin)
    x2 = jnp.pad(x2, ((0, 0), (1, 1), (1, 1), (0, 0)))              # (N, H+2, W+2, 2*Cin)

    # ---- weight glue: flip spatially, complex-block form, phase/tap split ----
    wfr = jnp.transpose(w_r[:, :, ::-1, ::-1], (2, 3, 0, 1)).astype(jnp.float32)  # (4,4,Cin,Cout)
    wfi = jnp.transpose(w_i[:, :, ::-1, ::-1], (2, 3, 0, 1)).astype(jnp.float32)
    top = jnp.concatenate([wfr, wfi], axis=-1)                      # rows for xr channels
    bot = jnp.concatenate([-wfi, wfr], axis=-1)                     # rows for xi channels
    wc_full = jnp.concatenate([top, bot], axis=-2)                  # (4, 4, 2*Cin, 2*Cout)
    wc = jnp.stack([
        jnp.stack([wc_full[ph + 2 * th, pw + 2 * tw]
                   for th in range(2) for tw in range(2)], axis=0)
        for ph in range(2) for pw in range(2)], axis=0).astype(comp_dtype)  # (4,4,2Cin,2Cout)

    # ---- bias glue: real cols get (b_r - b_i), imaginary cols get (b_r + b_i) ----
    bc = jnp.concatenate([b_r - b_i, b_r + b_i]).reshape(1, 2 * Cout).astype(jnp.float32)

    out = pl.pallas_call(
        _cup_kernel,
        out_shape=jax.ShapeDtypeStruct((N, 4, H * W, 2 * Cout), jnp.float32),
        grid_spec=pltpu.PrefetchScalarGridSpec(
            num_scalar_prefetch=0,
            grid=(N, n_tiles),
            in_specs=[
                # full padded image per n; constant over the H-tile axis -> stays resident
                pl.BlockSpec((1, H + 2, W + 2, 2 * Cin), lambda n, i: (n, 0, 0, 0)),
                pl.BlockSpec((4, 4, 2 * Cin, 2 * Cout), lambda n, i: (0, 0, 0, 0)),
                pl.BlockSpec((1, 2 * Cout), lambda n, i: (0, 0)),
            ],
            out_specs=pl.BlockSpec((1, 4, tile_h * W, 2 * Cout),
                                   lambda n, i: (n, 0, i, 0)),
        ),
        compiler_params=pltpu.CompilerParams(
            dimension_semantics=("parallel", "parallel"),
            vmem_limit_bytes=48 * 1024 * 1024),
    )(x2, wc, bc)

    # ---- output glue: (N, ph*2+pw, a*W+b, 2*Cout) -> interleaved NCHW real/imag ----
    out = out.reshape(N, 2, 2, H, W, 2 * Cout)
    out = jnp.transpose(out, (0, 3, 1, 4, 2, 5)).reshape(N, OH, OW, 2 * Cout)
    o_r = jnp.transpose(out[..., :Cout], (0, 3, 1, 2))
    o_i = jnp.transpose(out[..., Cout:], (0, 3, 1, 2))
    return o_r, o_i


# ------------------------- naive numpy reference -------------------------
def _ref_conv_transpose(x, w, b, stride=2, padding=1):
    N, Cin, H, W = x.shape
    _, Cout, KH, KW = w.shape
    OH = (H - 1) * stride - 2 * padding + KH
    OW = (W - 1) * stride - 2 * padding + KW
    out = np.zeros((N, Cout, OH, OW), np.float32)
    for ih in range(H):
        for iw in range(W):
            for kh in range(KH):
                for kw in range(KW):
                    oh = ih * stride - padding + kh
                    ow = iw * stride - padding + kw
                    if 0 <= oh < OH and 0 <= ow < OW:
                        out[:, :, oh, ow] += x[:, :, ih, iw] @ w[:, :, kh, kw]
    return out + b[None, :, None, None]


if __name__ == "__main__":
    N, Cin, Cout, H, W, K = 2, 4, 8, 16, 16, 4

    key = jax.random.PRNGKey(0)
    k1, k2, k3, k4, k5, k6 = jax.random.split(key, 6)
    x_r = jax.random.normal(k1, (N, Cin, H, W), jnp.float32)
    x_i = jax.random.normal(k2, (N, Cin, H, W), jnp.float32)

    bound = 1.0 / np.sqrt(Cin * K * K)   # PyTorch-like uniform init bound
    w_r = jax.random.uniform(k3, (Cin, Cout, K, K), jnp.float32, -bound, bound)
    w_i = jax.random.uniform(k4, (Cin, Cout, K, K), jnp.float32, -bound, bound)
    b_r = jax.random.uniform(k5, (Cout,), jnp.float32, -bound, bound)
    b_i = jax.random.uniform(k6, (Cout,), jnp.float32, -bound, bound)

    out_r, out_i = cup_forward(x_r, x_i, w_r, w_i, b_r, b_i)
    out_r, out_i = jax.block_until_ready((out_r, out_i))

    # correctness check against a naive conv-transpose reference
    xr_np, xi_np = np.asarray(x_r), np.asarray(x_i)
    wr_np, wi_np = np.asarray(w_r), np.asarray(w_i)
    br_np, bi_np = np.asarray(b_r), np.asarray(b_i)
    yr = _ref_conv_transpose(xr_np, wr_np, br_np) - _ref_conv_transpose(xi_np, wi_np, bi_np)
    yi = _ref_conv_transpose(xi_np, wr_np, br_np) + _ref_conv_transpose(xr_np, wi_np, bi_np)
    ref_r = np.maximum(yr, 0.0)
    ref_i = np.maximum(yi, 0.0)

    np.testing.assert_allclose(np.asarray(out_r), ref_r, rtol=1e-4, atol=1e-4)
    np.testing.assert_allclose(np.asarray(out_i), ref_i, rtol=1e-4, atol=1e-4)
    print("KERNEL_OK")
</pallas_src>

<mosaic_0001>
module attributes {stable_mosaic.version = 11 : i64} {
  func.func @_cup_kernel(%arg0: i32, %arg1: i32, %arg2: memref<1x18x18x8xf32, #tpu.memory_space<vmem>>, %arg3: memref<4x4x8x16xf32, #tpu.memory_space<vmem>>, %arg4: memref<1x16xf32, #tpu.memory_space<vmem>>, %arg5: memref<1x4x128x16xf32, #tpu.memory_space<vmem>>) attributes {dimension_semantics = [#tpu.dimension_semantics<parallel>, #tpu.dimension_semantics<parallel>], iteration_bounds = array<i64: 2, 2>, scalar_prefetch = 0 : i64, scratch_operands = 0 : i64, tpu.core_type = #tpu.core_type<tc>, window_params = [{transform_indices = @transform_0, window_bounds = array<i64: 1, 18, 18, 8>}, {pipeline_mode = #tpu.pipeline_mode<synchronous>, transform_indices = @transform_1, window_bounds = array<i64: 4, 4, 8, 16>}, {pipeline_mode = #tpu.pipeline_mode<synchronous>, transform_indices = @transform_2, window_bounds = array<i64: 1, 16>}, {transform_indices = @transform_3, window_bounds = array<i64: 1, 4, 128, 16>}]} {
    %c8_i32 = arith.constant 8 : i32
    %0 = arith.muli %arg1, %c8_i32 : i32
    %1 = tpu.assume_multiple %0, 8 : i32
    %c0 = arith.constant 0 : index
    %c0_0 = arith.constant 0 : index
    %2 = vector.load %arg4[%c0, %c0_0] : memref<1x16xf32, #tpu.memory_space<vmem>>, vector<1x16xf32>
    %cst = arith.constant 0.000000e+00 : f32
    %3 = vector.broadcast %cst : f32 to vector<128x16xf32>
    %c0_i32 = arith.constant 0 : i32
    %4 = arith.addi %1, %c0_i32 : i32
    %c0_i32_1 = arith.constant 0 : i32
    %5 = arith.addi %4, %c0_i32_1 : i32
    %c0_2 = arith.constant 0 : index
    %6 = arith.index_cast %5 : i32 to index
    %c0_3 = arith.constant 0 : index
    %c0_4 = arith.constant 0 : index
    %7 = vector.load %arg2[%c0_2, %6, %c0_3, %c0_4] : memref<1x18x18x8xf32, #tpu.memory_space<vmem>>, vector<1x8x16x8xf32>
    %8 = vector.shape_cast %7 : vector<1x8x16x8xf32> to vector<8x16x8xf32>
    %9 = vector.shape_cast %8 : vector<8x16x8xf32> to vector<128x8xf32>
    %c0_5 = arith.constant 0 : index
    %c0_6 = arith.constant 0 : index
    %c0_7 = arith.constant 0 : index
    %c0_8 = arith.constant 0 : index
    %10 = vector.load %arg3[%c0_5, %c0_6, %c0_7, %c0_8] : memref<4x4x8x16xf32, #tpu.memory_space<vmem>>, vector<1x1x8x16xf32>
    %11 = vector.shape_cast %10 : vector<1x1x8x16xf32> to vector<8x16xf32>
    %cst_9 = arith.constant dense<0.000000e+00> : vector<128x16xf32>
    %12 = tpu.matmul %9, %11, %cst_9 {dimension_numbers = #tpu.dot_dimension_numbers<[1], [0], [0], [1], [0, 0, 1, 1], [], []>} : vector<128x8xf32>, vector<8x16xf32>, vector<128x16xf32> -> vector<128x16xf32>
    %13 = arith.addf %3, %12 : vector<128x16xf32>
    %c0_i32_10 = arith.constant 0 : i32
    %14 = arith.addi %1, %c0_i32_10 : i32
    %c0_i32_11 = arith.constant 0 : i32
    %15 = arith.addi %14, %c0_i32_11 : i32
    %c0_12 = arith.constant 0 : index
    %16 = arith.index_cast %15 : i32 to index
    %c1 = arith.constant 1 : index
    %c0_13 = arith.constant 0 : index
    %17 = vector.load %arg2[%c0_12, %16, %c1, %c0_13] : memref<1x18x18x8xf32, #tpu.memory_space<vmem>>, vector<1x8x16x8xf32>
    %18 = vector.shape_cast %17 : vector<1x8x16x8xf32> to vector<8x16x8xf32>
    %19 = vector.shape_cast %18 : vector<8x16x8xf32> to vector<128x8xf32>
    %c0_14 = arith.constant 0 : index
    %c1_15 = arith.constant 1 : index
    %c0_16 = arith.constant 0 : index
    %c0_17 = arith.constant 0 : index
    %20 = vector.load %arg3[%c0_14, %c1_15, %c0_16, %c0_17] : memref<4x4x8x16xf32, #tpu.memory_space<vmem>>, vector<1x1x8x16xf32>
    %21 = vector.shape_cast %20 : vector<1x1x8x16xf32> to vector<8x16xf32>
    %cst_18 = arith.constant dense<0.000000e+00> : vector<128x16xf32>
    %22 = tpu.matmul %19, %21, %cst_18 {dimension_numbers = #tpu.dot_dimension_numbers<[1], [0], [0], [1], [0, 0, 1, 1], [], []>} : vector<128x8xf32>, vector<8x16xf32>, vector<128x16xf32> -> vector<128x16xf32>
    %23 = arith.addf %13, %22 : vector<128x16xf32>
    %c0_i32_19 = arith.constant 0 : i32
    %24 = arith.addi %1, %c0_i32_19 : i32
    %c1_i32 = arith.constant 1 : i32
    %25 = arith.addi %24, %c1_i32 : i32
    %c0_20 = arith.constant 0 : index
    %26 = arith.index_cast %25 : i32 to index
    %c0_21 = arith.constant 0 : index
    %c0_22 = arith.constant 0 : index
    %27 = vector.load %arg2[%c0_20, %26, %c0_21, %c0_22] : memref<1x18x18x8xf32, #tpu.memory_space<vmem>>, vector<1x8x16x8xf32>
    %28 = vector.shape_cast %27 : vector<1x8x16x8xf32> to vector<8x16x8xf32>
    %29 = vector.shape_cast %28 : vector<8x16x8xf32> to vector<128x8xf32>
    %c0_23 = arith.constant 0 : index
    %c2 = arith.constant 2 : index
    %c0_24 = arith.constant 0 : index
    %c0_25 = arith.constant 0 : index
    %30 = vector.load %arg3[%c0_23, %c2, %c0_24, %c0_25] : memref<4x4x8x16xf32, #tpu.memory_space<vmem>>, vector<1x1x8x16xf32>
    %31 = vector.shape_cast %30 : vector<1x1x8x16xf32> to vector<8x16xf32>
    %cst_26 = arith.constant dense<0.000000e+00> : vector<128x16xf32>
    %32 = tpu.matmul %29, %31, %cst_26 {dimension_numbers = #tpu.dot_dimension_numbers<[1], [0], [0], [1], [0, 0, 1, 1], [], []>} : vector<128x8xf32>, vector<8x16xf32>, vector<128x16xf32> -> vector<128x16xf32>
    %33 = arith.addf %23, %32 : vector<128x16xf32>
    %c0_i32_27 = arith.constant 0 : i32
    %34 = arith.addi %1, %c0_i32_27 : i32
    %c1_i32_28 = arith.constant 1 : i32
    %35 = arith.addi %34, %c1_i32_28 : i32
    %c0_29 = arith.constant 0 : index
    %36 = arith.index_cast %35 : i32 to index
    %c1_30 = arith.constant 1 : index
    %c0_31 = arith.constant 0 : index
    %37 = vector.load %arg2[%c0_29, %36, %c1_30, %c0_31] : memref<1x18x18x8xf32, #tpu.memory_space<vmem>>, vector<1x8x16x8xf32>
    %38 = vector.shape_cast %37 : vector<1x8x16x8xf32> to vector<8x16x8xf32>
    %39 = vector.shape_cast %38 : vector<8x16x8xf32> to vector<128x8xf32>
    %c0_32 = arith.constant 0 : index
    %c3 = arith.constant 3 : index
    %c0_33 = arith.constant 0 : index
    %c0_34 = arith.constant 0 : index
    %40 = vector.load %arg3[%c0_32, %c3, %c0_33, %c0_34] : memref<4x4x8x16xf32, #tpu.memory_space<vmem>>, vector<1x1x8x16xf32>
    %41 = vector.shape_cast %40 : vector<1x1x8x16xf32> to vector<8x16xf32>
    %cst_35 = arith.constant dense<0.000000e+00> : vector<128x16xf32>
    %42 = tpu.matmul %39, %41, %cst_35 {dimension_numbers = #tpu.dot_dimension_numbers<[1], [0], [0], [1], [0, 0, 1, 1], [], []>} : vector<128x8xf32>, vector<8x16xf32>, vector<128x16xf32> -> vector<128x16xf32>
    %43 = arith.addf %33, %42 : vector<128x16xf32>
    %44 = vector.broadcast %2 : vector<1x16xf32> to vector<128x16xf32>
    %45 = arith.addf %43, %44 : vector<128x16xf32>
    %cst_36 = arith.constant 0.000000e+00 : f32
    %46 = vector.broadcast %cst_36 : f32 to vector<128x16xf32>
    %47 = arith.maximumf %45, %46 : vector<128x16xf32>
    %c0_37 = arith.constant 0 : index
    %c0_38 = arith.constant 0 : index
    %c0_39 = arith.constant 0 : index
    %c0_40 = arith.constant 0 : index
    %48 = vector.load %arg5[%c0_37, %c0_38, %c0_39, %c0_40] : memref<1x4x128x16xf32, #tpu.memory_space<vmem>>, vector<1x1x128x16xf32>
    %49 = vector.shape_cast %48 : vector<1x1x128x16xf32> to vector<128x16xf32>
    %50 = vector.shape_cast %47 : vector<128x16xf32> to vector<1x1x128x16xf32>
    tpu.vector_store %arg5[%c0_37, %c0_38, %c0_39, %c0_40], %50 {strides = array<i32>} : memref<1x4x128x16xf32, #tpu.memory_space<vmem>>, vector<1x1x128x16xf32>,
    %cst_41 = arith.constant 0.000000e+00 : f32
    %51 = vector.broadcast %cst_41 : f32 to vector<128x16xf32>
    %c0_i32_42 = arith.constant 0 : i32
    %52 = arith.addi %1, %c0_i32_42 : i32
    %c0_i32_43 = arith.constant 0 : i32
    %53 = arith.addi %52, %c0_i32_43 : i32
    %c0_44 = arith.constant 0 : index
    %54 = arith.index_cast %53 : i32 to index
    %c1_45 = arith.constant 1 : index
    %c0_46 = arith.constant 0 : index
    %55 = vector.load %arg2[%c0_44, %54, %c1_45, %c0_46] : memref<1x18x18x8xf32, #tpu.memory_space<vmem>>, vector<1x8x16x8xf32>
    %56 = vector.shape_cast %55 : vector<1x8x16x8xf32> to vector<8x16x8xf32>
    %57 = vector.shape_cast %56 : vector<8x16x8xf32> to vector<128x8xf32>
    %c1_47 = arith.constant 1 : index
    %c0_48 = arith.constant 0 : index
    %c0_49 = arith.constant 0 : index
    %c0_50 = arith.constant 0 : index
    %58 = vector.load %arg3[%c1_47, %c0_48, %c0_49, %c0_50] : memref<4x4x8x16xf32, #tpu.memory_space<vmem>>, vector<1x1x8x16xf32>
    %59 = vector.shape_cast %58 : vector<1x1x8x16xf32> to vector<8x16xf32>
    %cst_51 = arith.constant dense<0.000000e+00> : vector<128x16xf32>
    %60 = tpu.matmul %57, %59, %cst_51 {dimension_numbers = #tpu.dot_dimension_numbers<[1], [0], [0], [1], [0, 0, 1, 1], [], []>} : vector<128x8xf32>, vector<8x16xf32>, vector<128x16xf32> -> vector<128x16xf32>
    %61 = arith.addf %51, %60 : vector<128x16xf32>
    %c0_i32_52 = arith.constant 0 : i32
    %62 = arith.addi %1, %c0_i32_52 : i32
    %c0_i32_53 = arith.constant 0 : i32
    %63 = arith.addi %62, %c0_i32_53 : i32
    %c0_54 = arith.constant 0 : index
    %64 = arith.index_cast %63 : i32 to index
    %c2_55 = arith.constant 2 : index
    %c0_56 = arith.constant 0 : index
    %65 = vector.load %arg2[%c0_54, %64, %c2_55, %c0_56] : memref<1x18x18x8xf32, #tpu.memory_space<vmem>>, vector<1x8x16x8xf32>
    %66 = vector.shape_cast %65 : vector<1x8x16x8xf32> to vector<8x16x8xf32>
    %67 = vector.shape_cast %66 : vector<8x16x8xf32> to vector<128x8xf32>
    %c1_57 = arith.constant 1 : index
    %c1_58 = arith.constant 1 : index
    %c0_59 = arith.constant 0 : index
    %c0_60 = arith.constant 0 : index
    %68 = vector.load %arg3[%c1_57, %c1_58, %c0_59, %c0_60] : memref<4x4x8x16xf32, #tpu.memory_space<vmem>>, vector<1x1x8x16xf32>
    %69 = vector.shape_cast %68 : vector<1x1x8x16xf32> to vector<8x16xf32>
    %cst_61 = arith.constant dense<0.000000e+00> : vector<128x16xf32>
    %70 = tpu.matmul %67, %69, %cst_61 {dimension_numbers = #tpu.dot_dimension_numbers<[1], [0], [0], [1], [0, 0, 1, 1], [], []>} : vector<128x8xf32>, vector<8x16xf32>, vector<128x16xf32> -> vector<128x16xf32>
    %71 = arith.addf %61, %70 : vector<128x16xf32>
    %c0_i32_62 = arith.constant 0 : i32
    %72 = arith.addi %1, %c0_i32_62 : i32
    %c1_i32_63 = arith.constant 1 : i32
    %73 = arith.addi %72, %c1_i32_63 : i32
    %c0_64 = arith.constant 0 : index
    %74 = arith.index_cast %73 : i32 to index
    %c1_65 = arith.constant 1 : index
    %c0_66 = arith.constant 0 : index
    %75 = vector.load %arg2[%c0_64, %74, %c1_65, %c0_66] : memref<1x18x18x8xf32, #tpu.memory_space<vmem>>, vector<1x8x16x8xf32>
    %76 = vector.shape_cast %75 : vector<1x8x16x8xf32> to vector<8x16x8xf32>
    %77 = vector.shape_cast %76 : vector<8x16x8xf32> to vector<128x8xf32>
    %c1_67 = arith.constant 1 : index
    %c2_68 = arith.constant 2 : index
    %c0_69 = arith.constant 0 : index
    %c0_70 = arith.constant 0 : index
    %78 = vector.load %arg3[%c1_67, %c2_68, %c0_69, %c0_70] : memref<4x4x8x16xf32, #tpu.memory_space<vmem>>, vector<1x1x8x16xf32>
    %79 = vector.shape_cast %78 : vector<1x1x8x16xf32> to vector<8x16xf32>
    %cst_71 = arith.constant dense<0.000000e+00> : vector<128x16xf32>
    %80 = tpu.matmul %77, %79, %cst_71 {dimension_numbers = #tpu.dot_dimension_numbers<[1], [0], [0], [1], [0, 0, 1, 1], [], []>} : vector<128x8xf32>, vector<8x16xf32>, vector<128x16xf32> -> vector<128x16xf32>
    %81 = arith.addf %71, %80 : vector<128x16xf32>
    %c0_i32_72 = arith.constant 0 : i32
    %82 = arith.addi %1, %c0_i32_72 : i32
    %c1_i32_73 = arith.constant 1 : i32
    %83 = arith.addi %82, %c1_i32_73 : i32
    %c0_74 = arith.constant 0 : index
    %84 = arith.index_cast %83 : i32 to index
    %c2_75 = arith.constant 2 : index
    %c0_76 = arith.constant 0 : index
    %85 = vector.load %arg2[%c0_74, %84, %c2_75, %c0_76] : memref<1x18x18x8xf32, #tpu.memory_space<vmem>>, vector<1x8x16x8xf32>
    %86 = vector.shape_cast %85 : vector<1x8x16x8xf32> to vector<8x16x8xf32>
    %87 = vector.shape_cast %86 : vector<8x16x8xf32> to vector<128x8xf32>
    %c1_77 = arith.constant 1 : index
    %c3_78 = arith.constant 3 : index
    %c0_79 = arith.constant 0 : index
    %c0_80 = arith.constant 0 : index
    %88 = vector.load %arg3[%c1_77, %c3_78, %c0_79, %c0_80] : memref<4x4x8x16xf32, #tpu.memory_space<vmem>>, vector<1x1x8x16xf32>
    %89 = vector.shape_cast %88 : vector<1x1x8x16xf32> to vector<8x16xf32>
    %cst_81 = arith.constant dense<0.000000e+00> : vector<128x16xf32>
    %90 = tpu.matmul %87, %89, %cst_81 {dimension_numbers = #tpu.dot_dimension_numbers<[1], [0], [0], [1], [0, 0, 1, 1], [], []>} : vector<128x8xf32>, vector<8x16xf32>, vector<128x16xf32> -> vector<128x16xf32>
    %91 = arith.addf %81, %90 : vector<128x16xf32>
    %92 = vector.broadcast %2 : vector<1x16xf32> to vector<128x16xf32>
    %93 = arith.addf %91, %92 : vector<128x16xf32>
    %cst_82 = arith.constant 0.000000e+00 : f32
    %94 = vector.broadcast %cst_82 : f32 to vector<128x16xf32>
    %95 = arith.maximumf %93, %94 : vector<128x16xf32>
    %c0_83 = arith.constant 0 : index
    %c1_84 = arith.constant 1 : index
    %c0_85 = arith.constant 0 : index
    %c0_86 = arith.constant 0 : index
    %96 = vector.load %arg5[%c0_83, %c1_84, %c0_85, %c0_86] : memref<1x4x128x16xf32, #tpu.memory_space<vmem>>, vector<1x1x128x16xf32>
    %97 = vector.shape_cast %96 : vector<1x1x128x16xf32> to vector<128x16xf32>
    %98 = vector.shape_cast %95 : vector<128x16xf32> to vector<1x1x128x16xf32>
    tpu.vector_store %arg5[%c0_83, %c1_84, %c0_85, %c0_86], %98 {strides = array<i32>} : memref<1x4x128x16xf32, #tpu.memory_space<vmem>>, vector<1x1x128x16xf32>,
    %cst_87 = arith.constant 0.000000e+00 : f32
    %99 = vector.broadcast %cst_87 : f32 to vector<128x16xf32>
    %c1_i32_88 = arith.constant 1 : i32
    %100 = arith.addi %1, %c1_i32_88 : i32
    %c0_i32_89 = arith.constant 0 : i32
    %101 = arith.addi %100, %c0_i32_89 : i32
    %c0_90 = arith.constant 0 : index
    %102 = arith.index_cast %101 : i32 to index
    %c0_91 = arith.constant 0 : index
    %c0_92 = arith.constant 0 : index
    %103 = vector.load %arg2[%c0_90, %102, %c0_91, %c0_92] : memref<1x18x18x8xf32, #tpu.memory_space<vmem>>, vector<1x8x16x8xf32>
    %104 = vector.shape_cast %103 : vector<1x8x16x8xf32> to vector<8x16x8xf32>
    %105 = vector.shape_cast %104 : vector<8x16x8xf32> to vector<128x8xf32>
    %c2_93 = arith.constant 2 : index
    %c0_94 = arith.constant 0 : index
    %c0_95 = arith.constant 0 : index
    %c0_96 = arith.constant 0 : index
    %106 = vector.load %arg3[%c2_93, %c0_94, %c0_95, %c0_96] : memref<4x4x8x16xf32, #tpu.memory_space<vmem>>, vector<1x1x8x16xf32>
    %107 = vector.shape_cast %106 : vector<1x1x8x16xf32> to vector<8x16xf32>
    %cst_97 = arith.constant dense<0.000000e+00> : vector<128x16xf32>
    %108 = tpu.matmul %105, %107, %cst_97 {dimension_numbers = #tpu.dot_dimension_numbers<[1], [0], [0], [1], [0, 0, 1, 1], [], []>} : vector<128x8xf32>, vector<8x16xf32>, vector<128x16xf32> -> vector<128x16xf32>
    %109 = arith.addf %99, %108 : vector<128x16xf32>
    %c1_i32_98 = arith.constant 1 : i32
    %110 = arith.addi %1, %c1_i32_98 : i32
    %c0_i32_99 = arith.constant 0 : i32
    %111 = arith.addi %110, %c0_i32_99 : i32
    %c0_100 = arith.constant 0 : index
    %112 = arith.index_cast %111 : i32 to index
    %c1_101 = arith.constant 1 : index
    %c0_102 = arith.constant 0 : index
    %113 = vector.load %arg2[%c0_100, %112, %c1_101, %c0_102] : memref<1x18x18x8xf32, #tpu.memory_space<vmem>>, vector<1x8x16x8xf32>
    %114 = vector.shape_cast %113 : vector<1x8x16x8xf32> to vector<8x16x8xf32>
    %115 = vector.shape_cast %114 : vector<8x16x8xf32> to vector<128x8xf32>
    %c2_103 = arith.constant 2 : index
    %c1_104 = arith.constant 1 : index
    %c0_105 = arith.constant 0 : index
    %c0_106 = arith.constant 0 : index
    %116 = vector.load %arg3[%c2_103, %c1_104, %c0_105, %c0_106] : memref<4x4x8x16xf32, #tpu.memory_space<vmem>>, vector<1x1x8x16xf32>
    %117 = vector.shape_cast %116 : vector<1x1x8x16xf32> to vector<8x16xf32>
    %cst_107 = arith.constant dense<0.000000e+00> : vector<128x16xf32>
    %118 = tpu.matmul %115, %117, %cst_107 {dimension_numbers = #tpu.dot_dimension_numbers<[1], [0], [0], [1], [0, 0, 1, 1], [], []>} : vector<128x8xf32>, vector<8x16xf32>, vector<128x16xf32> -> vector<128x16xf32>
    %119 = arith.addf %109, %118 : vector<128x16xf32>
    %c1_i32_108 = arith.constant 1 : i32
    %120 = arith.addi %1, %c1_i32_108 : i32
    %c1_i32_109 = arith.constant 1 : i32
    %121 = arith.addi %120, %c1_i32_109 : i32
    %c0_110 = arith.constant 0 : index
    %122 = arith.index_cast %121 : i32 to index
    %c0_111 = arith.constant 0 : index
    %c0_112 = arith.constant 0 : index
    %123 = vector.load %arg2[%c0_110, %122, %c0_111, %c0_112] : memref<1x18x18x8xf32, #tpu.memory_space<vmem>>, vector<1x8x16x8xf32>
    %124 = vector.shape_cast %123 : vector<1x8x16x8xf32> to vector<8x16x8xf32>
    %125 = vector.shape_cast %124 : vector<8x16x8xf32> to vector<128x8xf32>
    %c2_113 = arith.constant 2 : index
    %c2_114 = arith.constant 2 : index
    %c0_115 = arith.constant 0 : index
    %c0_116 = arith.constant 0 : index
    %126 = vector.load %arg3[%c2_113, %c2_114, %c0_115, %c0_116] : memref<4x4x8x16xf32, #tpu.memory_space<vmem>>, vector<1x1x8x16xf32>
    %127 = vector.shape_cast %126 : vector<1x1x8x16xf32> to vector<8x16xf32>
    %cst_117 = arith.constant dense<0.000000e+00> : vector<128x16xf32>
    %128 = tpu.matmul %125, %127, %cst_117 {dimension_numbers = #tpu.dot_dimension_numbers<[1], [0], [0], [1], [0, 0, 1, 1], [], []>} : vector<128x8xf32>, vector<8x16xf32>, vector<128x16xf32> -> vector<128x16xf32>
    %129 = arith.addf %119, %128 : vector<128x16xf32>
    %c1_i32_118 = arith.constant 1 : i32
    %130 = arith.addi %1, %c1_i32_118 : i32
    %c1_i32_119 = arith.constant 1 : i32
    %131 = arith.addi %130, %c1_i32_119 : i32
    %c0_120 = arith.constant 0 : index
    %132 = arith.index_cast %131 : i32 to index
    %c1_121 = arith.constant 1 : index
    %c0_122 = arith.constant 0 : index
    %133 = vector.load %arg2[%c0_120, %132, %c1_121, %c0_122] : memref<1x18x18x8xf32, #tpu.memory_space<vmem>>, vector<1x8x16x8xf32>
    %134 = vector.shape_cast %133 : vector<1x8x16x8xf32> to vector<8x16x8xf32>
    %135 = vector.shape_cast %134 : vector<8x16x8xf32> to vector<128x8xf32>
    %c2_123 = arith.constant 2 : index
    %c3_124 = arith.constant 3 : index
    %c0_125 = arith.constant 0 : index
    %c0_126 = arith.constant 0 : index
    %136 = vector.load %arg3[%c2_123, %c3_124, %c0_125, %c0_126] : memref<4x4x8x16xf32, #tpu.memory_space<vmem>>, vector<1x1x8x16xf32>
    %137 = vector.shape_cast %136 : vector<1x1x8x16xf32> to vector<8x16xf32>
    %cst_127 = arith.constant dense<0.000000e+00> : vector<128x16xf32>
    %138 = tpu.matmul %135, %137, %cst_127 {dimension_numbers = #tpu.dot_dimension_numbers<[1], [0], [0], [1], [0, 0, 1, 1], [], []>} : vector<128x8xf32>, vector<8x16xf32>, vector<128x16xf32> -> vector<128x16xf32>
    %139 = arith.addf %129, %138 : vector<128x16xf32>
    %140 = vector.broadcast %2 : vector<1x16xf32> to vector<128x16xf32>
    %141 = arith.addf %139, %140 : vector<128x16xf32>
    %cst_128 = arith.constant 0.000000e+00 : f32
    %142 = vector.broadcast %cst_128 : f32 to vector<128x16xf32>
    %143 = arith.maximumf %141, %142 : vector<128x16xf32>
    %c0_129 = arith.constant 0 : index
    %c2_130 = arith.constant 2 : index
    %c0_131 = arith.constant 0 : index
    %c0_132 = arith.constant 0 : index
    %144 = vector.load %arg5[%c0_129, %c2_130, %c0_131, %c0_132] : memref<1x4x128x16xf32, #tpu.memory_space<vmem>>, vector<1x1x128x16xf32>
    %145 = vector.shape_cast %144 : vector<1x1x128x16xf32> to vector<128x16xf32>
    %146 = vector.shape_cast %143 : vector<128x16xf32> to vector<1x1x128x16xf32>
    tpu.vector_store %arg5[%c0_129, %c2_130, %c0_131, %c0_132], %146 {strides = array<i32>} : memref<1x4x128x16xf32, #tpu.memory_space<vmem>>, vector<1x1x128x16xf32>,
    %cst_133 = arith.constant 0.000000e+00 : f32
    %147 = vector.broadcast %cst_133 : f32 to vector<128x16xf32>
    %c1_i32_134 = arith.constant 1 : i32
    %148 = arith.addi %1, %c1_i32_134 : i32
    %c0_i32_135 = arith.constant 0 : i32
    %149 = arith.addi %148, %c0_i32_135 : i32
    %c0_136 = arith.constant 0 : index
    %150 = arith.index_cast %149 : i32 to index
    %c1_137 = arith.constant 1 : index
    %c0_138 = arith.constant 0 : index
    %151 = vector.load %arg2[%c0_136, %150, %c1_137, %c0_138] : memref<1x18x18x8xf32, #tpu.memory_space<vmem>>, vector<1x8x16x8xf32>
    %152 = vector.shape_cast %151 : vector<1x8x16x8xf32> to vector<8x16x8xf32>
    %153 = vector.shape_cast %152 : vector<8x16x8xf32> to vector<128x8xf32>
    %c3_139 = arith.constant 3 : index
    %c0_140 = arith.constant 0 : index
    %c0_141 = arith.constant 0 : index
    %c0_142 = arith.constant 0 : index
    %154 = vector.load %arg3[%c3_139, %c0_140, %c0_141, %c0_142] : memref<4x4x8x16xf32, #tpu.memory_space<vmem>>, vector<1x1x8x16xf32>
    %155 = vector.shape_cast %154 : vector<1x1x8x16xf32> to vector<8x16xf32>
    %cst_143 = arith.constant dense<0.000000e+00> : vector<128x16xf32>
    %156 = tpu.matmul %153, %155, %cst_143 {dimension_numbers = #tpu.dot_dimension_numbers<[1], [0], [0], [1], [0, 0, 1, 1], [], []>} : vector<128x8xf32>, vector<8x16xf32>, vector<128x16xf32> -> vector<128x16xf32>
    %157 = arith.addf %147, %156 : vector<128x16xf32>
    %c1_i32_144 = arith.constant 1 : i32
    %158 = arith.addi %1, %c1_i32_144 : i32
    %c0_i32_145 = arith.constant 0 : i32
    %159 = arith.addi %158, %c0_i32_145 : i32
    %c0_146 = arith.constant 0 : index
    %160 = arith.index_cast %159 : i32 to index
    %c2_147 = arith.constant 2 : index
    %c0_148 = arith.constant 0 : index
    %161 = vector.load %arg2[%c0_146, %160, %c2_147, %c0_148] : memref<1x18x18x8xf32, #tpu.memory_space<vmem>>, vector<1x8x16x8xf32>
    %162 = vector.shape_cast %161 : vector<1x8x16x8xf32> to vector<8x16x8xf32>
    %163 = vector.shape_cast %162 : vector<8x16x8xf32> to vector<128x8xf32>
    %c3_149 = arith.constant 3 : index
    %c1_150 = arith.constant 1 : index
    %c0_151 = arith.constant 0 : index
    %c0_152 = arith.constant 0 : index
    %164 = vector.load %arg3[%c3_149, %c1_150, %c0_151, %c0_152] : memref<4x4x8x16xf32, #tpu.memory_space<vmem>>, vector<1x1x8x16xf32>
    %165 = vector.shape_cast %164 : vector<1x1x8x16xf32> to vector<8x16xf32>
    %cst_153 = arith.constant dense<0.000000e+00> : vector<128x16xf32>
    %166 = tpu.matmul %163, %165, %cst_153 {dimension_numbers = #tpu.dot_dimension_numbers<[1], [0], [0], [1], [0, 0, 1, 1], [], []>} : vector<128x8xf32>, vector<8x16xf32>, vector<128x16xf32> -> vector<128x16xf32>
    %167 = arith.addf %157, %166 : vector<128x16xf32>
    %c1_i32_154 = arith.constant 1 : i32
    %168 = arith.addi %1, %c1_i32_154 : i32
    %c1_i32_155 = arith.constant 1 : i32
    %169 = arith.addi %168, %c1_i32_155 : i32
    %c0_156 = arith.constant 0 : index
    %170 = arith.index_cast %169 : i32 to index
    %c1_157 = arith.constant 1 : index
    %c0_158 = arith.constant 0 : index
    %171 = vector.load %arg2[%c0_156, %170, %c1_157, %c0_158] : memref<1x18x18x8xf32, #tpu.memory_space<vmem>>, vector<1x8x16x8xf32>
    %172 = vector.shape_cast %171 : vector<1x8x16x8xf32> to vector<8x16x8xf32>
    %173 = vector.shape_cast %172 : vector<8x16x8xf32> to vector<128x8xf32>
    %c3_159 = arith.constant 3 : index
    %c2_160 = arith.constant 2 : index
    %c0_161 = arith.constant 0 : index
    %c0_162 = arith.constant 0 : index
    %174 = vector.load %arg3[%c3_159, %c2_160, %c0_161, %c0_162] : memref<4x4x8x16xf32, #tpu.memory_space<vmem>>, vector<1x1x8x16xf32>
    %175 = vector.shape_cast %174 : vector<1x1x8x16xf32> to vector<8x16xf32>
    %cst_163 = arith.constant dense<0.000000e+00> : vector<128x16xf32>
    %176 = tpu.matmul %173, %175, %cst_163 {dimension_numbers = #tpu.dot_dimension_numbers<[1], [0], [0], [1], [0, 0, 1, 1], [], []>} : vector<128x8xf32>, vector<8x16xf32>, vector<128x16xf32> -> vector<128x16xf32>
    %177 = arith.addf %167, %176 : vector<128x16xf32>
    %c1_i32_164 = arith.constant 1 : i32
    %178 = arith.addi %1, %c1_i32_164 : i32
    %c1_i32_165 = arith.constant 1 : i32
    %179 = arith.addi %178, %c1_i32_165 : i32
    %c0_166 = arith.constant 0 : index
    %180 = arith.index_cast %179 : i32 to index
    %c2_167 = arith.constant 2 : index
    %c0_168 = arith.constant 0 : index
    %181 = vector.load %arg2[%c0_166, %180, %c2_167, %c0_168] : memref<1x18x18x8xf32, #tpu.memory_space<vmem>>, vector<1x8x16x8xf32>
    %182 = vector.shape_cast %181 : vector<1x8x16x8xf32> to vector<8x16x8xf32>
    %183 = vector.shape_cast %182 : vector<8x16x8xf32> to vector<128x8xf32>
    %c3_169 = arith.constant 3 : index
    %c3_170 = arith.constant 3 : index
    %c0_171 = arith.constant 0 : index
    %c0_172 = arith.constant 0 : index
    %184 = vector.load %arg3[%c3_169, %c3_170, %c0_171, %c0_172] : memref<4x4x8x16xf32, #tpu.memory_space<vmem>>, vector<1x1x8x16xf32>
    %185 = vector.shape_cast %184 : vector<1x1x8x16xf32> to vector<8x16xf32>
    %cst_173 = arith.constant dense<0.000000e+00> : vector<128x16xf32>
    %186 = tpu.matmul %183, %185, %cst_173 {dimension_numbers = #tpu.dot_dimension_numbers<[1], [0], [0], [1], [0, 0, 1, 1], [], []>} : vector<128x8xf32>, vector<8x16xf32>, vector<128x16xf32> -> vector<128x16xf32>
    %187 = arith.addf %177, %186 : vector<128x16xf32>
    %188 = vector.broadcast %2 : vector<1x16xf32> to vector<128x16xf32>
    %189 = arith.addf %187, %188 : vector<128x16xf32>
    %cst_174 = arith.constant 0.000000e+00 : f32
    %190 = vector.broadcast %cst_174 : f32 to vector<128x16xf32>
    %191 = arith.maximumf %189, %190 : vector<128x16xf32>
    %c0_175 = arith.constant 0 : index
    %c3_176 = arith.constant 3 : index
    %c0_177 = arith.constant 0 : index
    %c0_178 = arith.constant 0 : index
    %192 = vector.load %arg5[%c0_175, %c3_176, %c0_177, %c0_178] : memref<1x4x128x16xf32, #tpu.memory_space<vmem>>, vector<1x1x128x16xf32>
    %193 = vector.shape_cast %192 : vector<1x1x128x16xf32> to vector<128x16xf32>
    %194 = vector.shape_cast %191 : vector<128x16xf32> to vector<1x1x128x16xf32>
    tpu.vector_store %arg5[%c0_175, %c3_176, %c0_177, %c0_178], %194 {strides = array<i32>} : memref<1x4x128x16xf32, #tpu.memory_space<vmem>>, vector<1x1x128x16xf32>,
    return
  }
  func.func @transform_0(%arg0: i32, %arg1: i32) -> (i32, i32, i32, i32) {
    %c0_i32 = arith.constant 0 : i32
    %c0_i32_0 = arith.constant 0 : i32
    %c0_i32_1 = arith.constant 0 : i32
    %c0_i32_2 = arith.constant 0 : i32
    return %arg0, %c0_i32, %c0_i32_0, %c0_i32_1 : i32, i32, i32, i32
  }
  func.func @transform_1(%arg0: i32, %arg1: i32) -> (i32, i32, i32, i32) {
    %c0_i32 = arith.constant 0 : i32
    %c0_i32_0 = arith.constant 0 : i32
    %c0_i32_1 = arith.constant 0 : i32
    %c0_i32_2 = arith.constant 0 : i32
    %c0_i32_3 = arith.constant 0 : i32
    return %c0_i32, %c0_i32_0, %c0_i32_1, %c0_i32_2 : i32, i32, i32, i32
  }
  func.func @transform_2(%arg0: i32, %arg1: i32) -> (i32, i32) {
    %c0_i32 = arith.constant 0 : i32
    %c0_i32_0 = arith.constant 0 : i32
    %c0_i32_1 = arith.constant 0 : i32
    return %c0_i32, %c0_i32_0 : i32, i32
  }
  func.func @transform_3(%arg0: i32, %arg1: i32) -> (i32, i32, i32, i32) {
    %c0_i32 = arith.constant 0 : i32
    %c0_i32_0 = arith.constant 0 : i32
    %c0_i32_1 = arith.constant 0 : i32
    return %arg0, %c0_i32, %arg1, %c0_i32_0 : i32, i32, i32, i32
  }
}

</mosaic_0001>

<llo_original>
// kernel: tpu_custom_call.1
$region0: #{tpu_custom_call.1}
  #allocation0 [shape = 'u32[]', space=smem, size = 0x4, offset = 0x4, fixed_abs, tag = 'smem constant byte address 0x4 - core index']
  #allocation1 [shape = 'u32[72,128]{1,0:T(1,128)}', space=vmem, size = 0x9000, scoped, tag = 'internal scratch']
  %s0 = inlined_call_operand.vmem [shape: f32[2,18,18,8], index: 0, kind: input, shape index: {}]
  %s1 = inlined_call_operand.vmem [shape: f32[4,4,8,16], index: 1, kind: input, shape index: {}]
  %s2 = inlined_call_operand.vmem [shape: f32[1,16], index: 2, kind: input, shape index: {}]
  %s3 = inlined_call_operand.vmem [shape: f32[2,4,256,16], index: 3, kind: output, shape index: {}]
  %s4 = sld [smem:[#allocation0]]
  $region79: #{tpu_custom_call.1} parent=0
    _
  %s6 = ssub.s32 1, %s4
  %s7 = scalar_select 0, %s6, %s4
  $region1: #{tpu_custom_call.1} parent=0
    #allocation2 [shape = 'u8[524288]{0}', space=vmem, size = 0x80000, scoped, tag = 'output window, operand 0']
    loop: start=0, step=1, limit=6
    $region2: #{tpu_custom_call.1} parent=1 // loop_pre_header
      _
    $region3: #{tpu_custom_call.1} parent=1 // loop_header
      %s9 = sphi 0, %s13
      %p10 = scmp.ge.s32.totalorder %s9, 6
      %s16 = sphi 0, %s28
      %s17 = sphi 0, %s24
      %s18 = sphi 0, %s16
      %s19 = sphi 0, %s17
      %s20 = sphi 0, %s18
      %s21 = sphi 0, %s19
      %s31 = sphi 0, %s33
      %s34 = sphi 0, %s31
      %s35 = sphi 0, %s34
      %s51 = sphi 0, %s35
      %s55 = sphi 0, %s55
      %s57 = sphi 0, %s55
      %s58 = sphi 0, %s57
      %s72 = sphi 0, %s58
      %s76 = sphi 0, %s76
      %s78 = sphi 0, %s76
      %s79 = sphi 0, %s78
      %s93 = sphi 0, %s79
      %s101 = sphi 0, %s103
      %s104 = sphi 0, %s101
      %s105 = sphi 0, %s104
      %s121 = sphi 0, %s105
    $region4: #{tpu_custom_call.1} parent=1 // loop_header_branch
      %12 = sbr.rel (%p10) target = $region8
    $region5: #{tpu_custom_call.1} parent=1 // loop_body
      %s14 = ssub.s32 %s9, 1
      %s15 = ssub.s32 %s9, 2
      %s22 = sadd.s32 1, %s17
      %p23 = scmp.ge.s32.totalorder %s22, 2
      %s24 = scalar_select %p23, 0, %s22
      %s25 = sadd.s32 1, %s16
      %s26 = scalar_select %p23, %s25, %s16
      %p27 = scmp.ge.s32.totalorder %s26, 2
      %s28 = scalar_select %p27, 0, %s26
      %s29 = ssub.s32 %s16, %s28
      %p30 = scmp.eq.s32.totalorder %s29, 0
      %s32 = sadd.s32 %s31, 1
      %s33 = scalar_select %p30, %s31, %s32
      %p36 = pneg %p30
      %p37 = scmp.eq.s32.totalorder %s9, 3
      %p38 = por %p36, %p37
      %p39 = scmp.ne.s32.totalorder %s31, %s34
      %p40 = scmp.eq.s32.totalorder %s9, 0
      %p41 = por %p39, %p40
      %p42 = scmp.ne.s32.totalorder %s31, %s34
      %p43 = scmp.eq.s32.totalorder %s14, 3
      %p44 = por %p42, %p43
      %p45 = scmp.ne.s32.totalorder %s34, %s35
      %p46 = scmp.eq.s32.totalorder %s14, 0
      %p47 = por %p45, %p46
      %p48 = scmp.ne.s32.totalorder %s34, %s35
      %p49 = scmp.eq.s32.totalorder %s15, 3
      %p50 = por %p48, %p49
      %p52 = scmp.ne.s32.totalorder %s35, %s51
      %p53 = scmp.eq.s32.totalorder %s15, 0
      %p54 = por %p52, %p53
      %s56 = sadd.s32 %s55, 1
      %p59 = scmp.eq.s32.totalorder %s9, 3
      %p60 = scmp.ne.s32.totalorder %s55, %s57
      %p61 = scmp.eq.s32.totalorder %s9, 0
      %p62 = por %p60, %p61
      %p63 = scmp.ne.s32.totalorder %s55, %s57
      %p64 = scmp.eq.s32.totalorder %s14, 3
      %p65 = por %p63, %p64
      %p66 = scmp.ne.s32.totalorder %s57, %s58
      %p67 = scmp.eq.s32.totalorder %s14, 0
      %p68 = por %p66, %p67
      %p69 = scmp.ne.s32.totalorder %s57, %s58
      %p70 = scmp.eq.s32.totalorder %s15, 3
      %p71 = por %p69, %p70
      %p73 = scmp.ne.s32.totalorder %s58, %s72
      %p74 = scmp.eq.s32.totalorder %s15, 0
      %p75 = por %p73, %p74
      %s77 = sadd.s32 %s76, 1
      %p80 = scmp.eq.s32.totalorder %s9, 3
      %p81 = scmp.ne.s32.totalorder %s76, %s78
      %p82 = scmp.eq.s32.totalorder %s9, 0
      %p83 = por %p81, %p82
      %p84 = scmp.ne.s32.totalorder %s76, %s78
      %p85 = scmp.eq.s32.totalorder %s14, 3
      %p86 = por %p84, %p85
      %p87 = scmp.ne.s32.totalorder %s78, %s79
      %p88 = scmp.eq.s32.totalorder %s14, 0
      %p89 = por %p87, %p88
      %p90 = scmp.ne.s32.totalorder %s78, %s79
      %p91 = scmp.eq.s32.totalorder %s15, 3
      %p92 = por %p90, %p91
      %p94 = scmp.ne.s32.totalorder %s79, %s93
      %p95 = scmp.eq.s32.totalorder %s15, 0
      %p96 = por %p94, %p95
      %s97 = ssub.s32 %s16, %s28
      %s98 = ssub.s32 %s17, %s24
      %s99 = sor.u32 %s97, %s98
      %p100 = scmp.eq.s32.totalorder %s99, 0
      %s102 = sadd.s32 %s101, 1
      %s103 = scalar_select %p100, %s101, %s102
      %p106 = pneg %p100
      %p107 = scmp.eq.s32.totalorder %s9, 3
      %p108 = por %p106, %p107
      %p109 = scmp.ne.s32.totalorder %s101, %s104
      %p110 = scmp.eq.s32.totalorder %s9, 0
      %p111 = por %p109, %p110
      %p112 = scmp.ne.s32.totalorder %s101, %s104
      %p113 = scmp.eq.s32.totalorder %s14, 3
      %p114 = por %p112, %p113
      %p115 = scmp.ne.s32.totalorder %s104, %s105
      %p116 = scmp.eq.s32.totalorder %s14, 0
      %p117 = por %p115, %p116
      %p118 = scmp.ne.s32.totalorder %s104, %s105
      %p119 = scmp.eq.s32.totalorder %s15, 3
      %p120 = por %p118, %p119
      %p122 = scmp.ne.s32.totalorder %s105, %s121
      %p123 = scmp.eq.s32.totalorder %s15, 0
      %p124 = por %p122, %p123
      %p125 = scmp.le.s32.totalorder 1, %s9
      %p126 = scmp.lt.s32.totalorder %s9, 5
      %p127 = pnand %p125, %p126
      %p128 = pneg %p127
      // Predicated region
      $region9: #{tpu_custom_call.1} parent=5 // pred_check
        _
      $region10: #{tpu_custom_call.1} parent=5 // pred_check_branch
        %130 = sbr.rel (%p127) target = $region12
      $region11: #{tpu_custom_call.1} parent=5 // pred_region
        %s131 = ssub.s32 %s9, 1
        // Predicated region
        $region13: #{tpu_custom_call.1} parent=11 // pred_check
          %p132 = pneg %p68
        $region14: #{tpu_custom_call.1} parent=11 // pred_check_branch
          %134 = sbr.rel (%p132) target = $region16
        $region15: #{tpu_custom_call.1} parent=11 // pred_region
          _
        $region16: #{tpu_custom_call.1} parent=11 // pred_fallthru
          _
        // Predicated region
        $region17: #{tpu_custom_call.1} parent=11 // pred_check
          %p135 = pneg %p89
        $region18: #{tpu_custom_call.1} parent=11 // pred_check_branch
          %137 = sbr.rel (%p135) target = $region20
        $region19: #{tpu_custom_call.1} parent=11 // pred_region
          _
        $region20: #{tpu_custom_call.1} parent=11 // pred_fallthru
          _
      $region12: #{tpu_custom_call.1} parent=5 // pred_fallthru
        _
      %p138 = scmp.lt.s32.totalorder %s9, 4
      // Predicated region
      $region21: #{tpu_custom_call.1} parent=5 // pred_check
        %p139 = pneg %p138
      $region22: #{tpu_custom_call.1} parent=5 // pred_check_branch
        %141 = sbr.rel (%p139) target = $region24
      $region23: #{tpu_custom_call.1} parent=5 // pred_region
        // Predicated region
        $region25: #{tpu_custom_call.1} parent=23 // pred_check
          %p142 = pneg %p41
        $region26: #{tpu_custom_call.1} parent=23 // pred_check_branch
          %144 = sbr.rel (%p142) target = $region28
        $region27: #{tpu_custom_call.1} parent=23 // pred_region
          %p145 = scmp.lt.s32.totalorder %s16, 1
          %s146 = scalar_select %p145, %s16, 1
          %s147 = smul.addr %s146, 54
          %s148 = smul.addr %s147, 8
          %s149 = scalar_lea.vmem %s0, %s148
        $region28: #{tpu_custom_call.1} parent=23 // pred_fallthru
          _
      $region24: #{tpu_custom_call.1} parent=5 // pred_fallthru
        _
      %p150 = scmp.le.s32.totalorder 1, %s9
      %p151 = scmp.lt.s32.totalorder %s9, 5
      %p152 = pnand %p150, %p151
      %p153 = pneg %p152
      // Predicated region
      $region29: #{tpu_custom_call.1} parent=5 // pred_check
        _
      $region30: #{tpu_custom_call.1} parent=5 // pred_check_branch
        %155 = sbr.rel (%p152) target = $region32
      $region31: #{tpu_custom_call.1} parent=5 // pred_region
        %s156 = ssub.s32 %s9, 1
        %p157 = scmp.lt.s32.totalorder %s18, 1
        %s158 = scalar_select %p157, %s18, 1
        %s159 = smul.addr %s158, 54
        %s160 = smul.addr %s159, 8
        %s161 = scalar_lea.vmem %s0, %s160
        %p162 = pneg %p47
        %p163 = pneg %p44
        %p164 = pneg %p68
        %p165 = pneg %p65
        %p166 = pneg %p89
        %p167 = pneg %p86
        %p168 = pneg %p117
        %p169 = pneg %p114
        %s170 = sand.u32 %s104, 1
        %s171 = sand.u32 %s104, 1
        %s172 = smul.addr %s171, 512
        %s173 = scalar_lea.vmem [#allocation2], %s172
        %p174 = scmp.lt.s32.totalorder %s18, 1
        %s175 = scalar_select %p174, %s18, 1
        %s176 = smul.addr %s175, 54
        %s177 = smul.addr %s176, 8
        %s178 = scalar_lea.vmem %s0, %s177
        %s179 = smul.u32 16, %s19
        %s180 = smul.u32 %s19, 8
        %v181 = vld [vmem:[%s2] sm:$0x1]
        %s182 = smul.u32 %s180, 24
        %s183 = scalar_lea.vmem %s178, %s182
        %v184 = vld [vmem:[%s183] sm:$0xff]
        %v185 = vld [vmem:[%s183 + $0x8] sm:$0xff]
        %v186 = vld [vmem:[%s183 + $0x18] sm:$0xff]
        %v187 = vld [vmem:[%s183 + $0x20] sm:$0xff]
        %v188 = vld [vmem:[%s183 + $0x30] sm:$0xff]
        %v189 = vld [vmem:[%s183 + $0x38] sm:$0xff]
        %v190 = vld [vmem:[%s183 + $0x48] sm:$0xff]
        %v191 = vld [vmem:[%s183 + $0x50] sm:$0xff]
        %v192 = vld [vmem:[%s183 + $0x60] sm:$0xff]
        %v193 = vld [vmem:[%s183 + $0x68] sm:$0xff]
        %v194 = vld [vmem:[%s183 + $0x78] sm:$0xff]
        %v195 = vld [vmem:[%s183 + $0x80] sm:$0xff]
        %v196 = vld [vmem:[%s183 + $0x90] sm:$0xff]
        %v197 = vld [vmem:[%s183 + $0x98] sm:$0xff]
        %v198 = vld [vmem:[%s183 + $0xa8] sm:$0xff]
        %v199 = vld [vmem:[%s183 + $0xb0] sm:$0xff]
        %v200 = vld [vmem:[%s1] sm:$0xff]
        %v201 = vld [vmem:[%s183 + $0x1] sm:$0xff]
        %v202 = vld [vmem:[%s183 + $0x9] sm:$0xff]
        %v203 = vld [vmem:[%s183 + $0x19] sm:$0xff]
        %v204 = vld [vmem:[%s183 + $0x21] sm:$0xff]
        %v205 = vld [vmem:[%s183 + $0x31] sm:$0xff]
        %v206 = vld [vmem:[%s183 + $0x39] sm:$0xff]
        %v207 = vld [vmem:[%s183 + $0x49] sm:$0xff]
        %v208 = vld [vmem:[%s183 + $0x51] sm:$0xff]
        %v209 = vld [vmem:[%s183 + $0x61] sm:$0xff]
        %v210 = vld [vmem:[%s183 + $0x69] sm:$0xff]
        %v211 = vld [vmem:[%s183 + $0x79] sm:$0xff]
        %v212 = vld [vmem:[%s183 + $0x81] sm:$0xff]
        %v213 = vld [vmem:[%s183 + $0x91] sm:$0xff]
        %v214 = vld [vmem:[%s183 + $0x99] sm:$0xff]
        %v215 = vld [vmem:[%s183 + $0xa9] sm:$0xff]
        %v216 = vld [vmem:[%s183 + $0xb1] sm:$0xff]
        %s217 = scalar_lea.vmem %s1, 8
        %v218 = vld [vmem:[%s217] sm:$0xff]
        %vm219 = vcmask 64512
        %v221 = vsel %vm219, %v201, 0
        %v224 = vsel %vm219, %v202, 0
        %v227 = vsel %vm219, %v203, 0
        %v230 = vsel %vm219, %v204, 0
        %v233 = vsel %vm219, %v205, 0
        %v236 = vsel %vm219, %v206, 0
        %v239 = vsel %vm219, %v207, 0
        %v242 = vsel %vm219, %v208, 0
        %v245 = vsel %vm219, %v209, 0
        %v248 = vsel %vm219, %v210, 0
        %v251 = vsel %vm219, %v211, 0
        %v254 = vsel %vm219, %v212, 0
        %v257 = vsel %vm219, %v213, 0
        %v260 = vsel %vm219, %v214, 0
        %v263 = vsel %vm219, %v215, 0
        %v266 = vsel %vm219, %v216, 0
        %268 = vmatpush.msra.mxu0 0.0
        %269 = vmatpush.msra.mxu0 0.0
        %270 = vmatpush.msra.mxu0 0.0
        %271 = vmatpush.msra.mxu0 0.0
        %272 = vmatpush.msra.mxu0 0.0
        %273 = vmatpush.msra.mxu0 0.0
        %274 = vmatpush.msra.mxu0 0.0
        %275 = vmatpush.msra.mxu0 0.0
        %276 = vmatpush.msra.mxu0 0.0
        %277 = vmatpush.msra.mxu0 0.0
        %278 = vmatpush.msra.mxu0 0.0
        %279 = vmatpush.msra.mxu0 0.0
        %280 = vmatpush.msra.mxu0 0.0
        %281 = vmatpush.msra.mxu0 0.0
        %282 = vmatpush.msra.mxu0 0.0
        %283 = vmatpush.msra.mxu0 %v218
        %284 = vmatmul.f32.gmra.mxu0 %v221
        %v285 = vpop.f32.mrf.mxu0
        %v286 = vadd.f32 0.0, %v285
        %287 = vmatmul.f32.gmra.mxu0 %v224
        %v288 = vpop.f32.mrf.mxu0
        %v289 = vadd.f32 0.0, %v288
        %290 = vmatmul.f32.gmra.mxu0 %v227
        %v291 = vpop.f32.mrf.mxu0
        %v292 = vadd.f32 0.0, %v291
        %293 = vmatmul.f32.gmra.mxu0 %v230
        %v294 = vpop.f32.mrf.mxu0
        %v295 = vadd.f32 0.0, %v294
        %296 = vmatmul.f32.gmra.mxu0 %v233
        %v297 = vpop.f32.mrf.mxu0
        %v298 = vadd.f32 0.0, %v297
        %299 = vmatmul.f32.gmra.mxu0 %v236
        %v300 = vpop.f32.mrf.mxu0
        %v301 = vadd.f32 0.0, %v300
        %302 = vmatmul.f32.gmra.mxu0 %v239
        %v303 = vpop.f32.mrf.mxu0
        %v304 = vadd.f32 0.0, %v303
        %305 = vmatmul.f32.gmra.mxu0 %v242
        %v306 = vpop.f32.mrf.mxu0
        %v307 = vadd.f32 0.0, %v306
        %308 = vmatmul.f32.gmra.mxu0 %v245
        %v309 = vpop.f32.mrf.mxu0
        %v310 = vadd.f32 0.0, %v309
        %311 = vmatmul.f32.gmra.mxu0 %v248
        %v312 = vpop.f32.mrf.mxu0
        %v313 = vadd.f32 0.0, %v312
        %314 = vmatmul.f32.gmra.mxu0 %v251
        %v315 = vpop.f32.mrf.mxu0
        %v316 = vadd.f32 0.0, %v315
        %317 = vmatmul.f32.gmra.mxu0 %v254
        %v318 = vpop.f32.mrf.mxu0
        %v319 = vadd.f32 0.0, %v318
        %320 = vmatmul.f32.gmra.mxu0 %v257
        %v321 = vpop.f32.mrf.mxu0
        %v322 = vadd.f32 0.0, %v321
        %323 = vmatmul.f32.gmra.mxu0 %v260
        %v324 = vpop.f32.mrf.mxu0
        %v325 = vadd.f32 0.0, %v324
        %326 = vmatmul.f32.gmra.mxu0 %v263
        %v327 = vpop.f32.mrf.mxu0
        %v328 = vadd.f32 0.0, %v327
        %329 = vmatmul.f32.gmra.mxu0 %v266
        %v330 = vpop.f32.mrf.mxu0
        %v331 = vadd.f32 0.0, %v330
        %332 = vdwg.mxu0
        %v334 = vsel %vm219, %v184, 0
        %v337 = vsel %vm219, %v185, 0
        %v340 = vsel %vm219, %v186, 0
        %v343 = vsel %vm219, %v187, 0
        %v346 = vsel %vm219, %v188, 0
        %v349 = vsel %vm219, %v189, 0
        %v352 = vsel %vm219, %v190, 0
        %v355 = vsel %vm219, %v191, 0
        %v358 = vsel %vm219, %v192, 0
        %v361 = vsel %vm219, %v193, 0
        %v364 = vsel %vm219, %v194, 0
        %v367 = vsel %vm219, %v195, 0
        %v370 = vsel %vm219, %v196, 0
        %v373 = vsel %vm219, %v197, 0
        %v376 = vsel %vm219, %v198, 0
        %v379 = vsel %vm219, %v199, 0
        %381 = vmatpush.msra.mxu0 0.0
        %382 = vmatpush.msra.mxu0 0.0
        %383 = vmatpush.msra.mxu0 0.0
        %384 = vmatpush.msra.mxu0 0.0
        %385 = vmatpush.msra.mxu0 0.0
        %386 = vmatpush.msra.mxu0 0.0
        %387 = vmatpush.msra.mxu0 0.0
        %388 = vmatpush.msra.mxu0 0.0
        %389 = vmatpush.msra.mxu0 0.0
        %390 = vmatpush.msra.mxu0 0.0
        %391 = vmatpush.msra.mxu0 0.0
        %392 = vmatpush.msra.mxu0 0.0
        %393 = vmatpush.msra.mxu0 0.0
        %394 = vmatpush.msra.mxu0 0.0
        %395 = vmatpush.msra.mxu0 0.0
        %396 = vmatpush.msra.mxu0 %v200
        %397 = vmatmul.f32.gmra.mxu0 %v334
        %v398 = vpop.f32.mrf.mxu0
        %v399 = vadd.f32 %v286, %v398
        %400 = vmatmul.f32.gmra.mxu0 %v337
        %v401 = vpop.f32.mrf.mxu0
        %v402 = vadd.f32 %v289, %v401
        %403 = vmatmul.f32.gmra.mxu0 %v340
        %v404 = vpop.f32.mrf.mxu0
        %v405 = vadd.f32 %v292, %v404
        %406 = vmatmul.f32.gmra.mxu0 %v343
        %v407 = vpop.f32.mrf.mxu0
        %v408 = vadd.f32 %v295, %v407
        %409 = vmatmul.f32.gmra.mxu0 %v346
        %v410 = vpop.f32.mrf.mxu0
        %v411 = vadd.f32 %v298, %v410
        %412 = vmatmul.f32.gmra.mxu0 %v349
        %v413 = vpop.f32.mrf.mxu0
        %v414 = vadd.f32 %v301, %v413
        %415 = vmatmul.f32.gmra.mxu0 %v352
        %v416 = vpop.f32.mrf.mxu0
        %v417 = vadd.f32 %v304, %v416
        %418 = vmatmul.f32.gmra.mxu0 %v355
        %v419 = vpop.f32.mrf.mxu0
        %v420 = vadd.f32 %v307, %v419
        %421 = vmatmul.f32.gmra.mxu0 %v358
        %v422 = vpop.f32.mrf.mxu0
        %v423 = vadd.f32 %v310, %v422
        %424 = vmatmul.f32.gmra.mxu0 %v361
        %v425 = vpop.f32.mrf.mxu0
        %v426 = vadd.f32 %v313, %v425
        %427 = vmatmul.f32.gmra.mxu0 %v364
        %v428 = vpop.f32.mrf.mxu0
        %v429 = vadd.f32 %v316, %v428
        %430 = vmatmul.f32.gmra.mxu0 %v367
        %v431 = vpop.f32.mrf.mxu0
        %v432 = vadd.f32 %v319, %v431
        %433 = vmatmul.f32.gmra.mxu0 %v370
        %v434 = vpop.f32.mrf.mxu0
        %v435 = vadd.f32 %v322, %v434
        %436 = vmatmul.f32.gmra.mxu0 %v373
        %v437 = vpop.f32.mrf.mxu0
        %v438 = vadd.f32 %v325, %v437
        %439 = vmatmul.f32.gmra.mxu0 %v376
        %v440 = vpop.f32.mrf.mxu0
        %v441 = vadd.f32 %v328, %v440
        %442 = vmatmul.f32.gmra.mxu0 %v379
        %v443 = vpop.f32.mrf.mxu0
        %v444 = vadd.f32 %v331, %v443
        %445 = vdwg.mxu0
        %s446 = sadd.s32 %s180, 1
        %s447 = smul.u32 %s446, 24
        %s448 = scalar_lea.vmem %s178, %s447
        %v449 = vld [vmem:[%s448] sm:$0xff]
        %v450 = vld [vmem:[%s448 + $0x8] sm:$0xff]
        %v451 = vld [vmem:[%s448 + $0x18] sm:$0xff]
        %v452 = vld [vmem:[%s448 + $0x20] sm:$0xff]
        %v453 = vld [vmem:[%s448 + $0x30] sm:$0xff]
        %v454 = vld [vmem:[%s448 + $0x38] sm:$0xff]
        %v455 = vld [vmem:[%s448 + $0x48] sm:$0xff]
        %v456 = vld [vmem:[%s448 + $0x50] sm:$0xff]
        %v457 = vld [vmem:[%s448 + $0x60] sm:$0xff]
        %v458 = vld [vmem:[%s448 + $0x68] sm:$0xff]
        %v459 = vld [vmem:[%s448 + $0x78] sm:$0xff]
        %v460 = vld [vmem:[%s448 + $0x80] sm:$0xff]
        %v461 = vld [vmem:[%s448 + $0x90] sm:$0xff]
        %v462 = vld [vmem:[%s448 + $0x98] sm:$0xff]
        %v463 = vld [vmem:[%s448 + $0xa8] sm:$0xff]
        %v464 = vld [vmem:[%s448 + $0xb0] sm:$0xff]
        %s465 = scalar_lea.vmem %s1, 16
        %v466 = vld [vmem:[%s465] sm:$0xff]
        %v468 = vsel %vm219, %v449, 0
        %v471 = vsel %vm219, %v450, 0
        %v474 = vsel %vm219, %v451, 0
        %v477 = vsel %vm219, %v452, 0
        %v480 = vsel %vm219, %v453, 0
        %v483 = vsel %vm219, %v454, 0
        %v486 = vsel %vm219, %v455, 0
        %v489 = vsel %vm219, %v456, 0
        %v492 = vsel %vm219, %v457, 0
        %v495 = vsel %vm219, %v458, 0
        %v498 = vsel %vm219, %v459, 0
        %v501 = vsel %vm219, %v460, 0
        %v504 = vsel %vm219, %v461, 0
        %v507 = vsel %vm219, %v462, 0
        %v510 = vsel %vm219, %v463, 0
        %v513 = vsel %vm219, %v464, 0
        %515 = vmatpush.msra.mxu0 0.0
        %516 = vmatpush.msra.mxu0 0.0
        %517 = vmatpush.msra.mxu0 0.0
        %518 = vmatpush.msra.mxu0 0.0
        %519 = vmatpush.msra.mxu0 0.0
        %520 = vmatpush.msra.mxu0 0.0
        %521 = vmatpush.msra.mxu0 0.0
        %522 = vmatpush.msra.mxu0 0.0
        %523 = vmatpush.msra.mxu0 0.0
        %524 = vmatpush.msra.mxu0 0.0
        %525 = vmatpush.msra.mxu0 0.0
        %526 = vmatpush.msra.mxu0 0.0
        %527 = vmatpush.msra.mxu0 0.0
        %528 = vmatpush.msra.mxu0 0.0
        %529 = vmatpush.msra.mxu0 0.0
        %530 = vmatpush.msra.mxu0 %v466
        %531 = vmatmul.f32.gmra.mxu0 %v468
        %v532 = vpop.f32.mrf.mxu0
        %v533 = vadd.f32 0.0, %v532
        %534 = vmatmul.f32.gmra.mxu0 %v471
        %v535 = vpop.f32.mrf.mxu0
        %v536 = vadd.f32 0.0, %v535
        %537 = vmatmul.f32.gmra.mxu0 %v474
        %v538 = vpop.f32.mrf.mxu0
        %v539 = vadd.f32 0.0, %v538
        %540 = vmatmul.f32.gmra.mxu0 %v477
        %v541 = vpop.f32.mrf.mxu0
        %v542 = vadd.f32 0.0, %v541
        %543 = vmatmul.f32.gmra.mxu0 %v480
        %v544 = vpop.f32.mrf.mxu0
        %v545 = vadd.f32 0.0, %v544
        %546 = vmatmul.f32.gmra.mxu0 %v483
        %v547 = vpop.f32.mrf.mxu0
        %v548 = vadd.f32 0.0, %v547
        %549 = vmatmul.f32.gmra.mxu0 %v486
        %v550 = vpop.f32.mrf.mxu0
        %v551 = vadd.f32 0.0, %v550
        %552 = vmatmul.f32.gmra.mxu0 %v489
        %v553 = vpop.f32.mrf.mxu0
        %v554 = vadd.f32 0.0, %v553
        %555 = vmatmul.f32.gmra.mxu0 %v492
        %v556 = vpop.f32.mrf.mxu0
        %v557 = vadd.f32 0.0, %v556
        %558 = vmatmul.f32.gmra.mxu0 %v495
        %v559 = vpop.f32.mrf.mxu0
        %v560 = vadd.f32 0.0, %v559
        %561 = vmatmul.f32.gmra.mxu0 %v498
        %v562 = vpop.f32.mrf.mxu0
        %v563 = vadd.f32 0.0, %v562
        %564 = vmatmul.f32.gmra.mxu0 %v501
        %v565 = vpop.f32.mrf.mxu0
        %v566 = vadd.f32 0.0, %v565
        %567 = vmatmul.f32.gmra.mxu0 %v504
        %v568 = vpop.f32.mrf.mxu0
        %v569 = vadd.f32 0.0, %v568
        %570 = vmatmul.f32.gmra.mxu0 %v507
        %v571 = vpop.f32.mrf.mxu0
        %v572 = vadd.f32 0.0, %v571
        %573 = vmatmul.f32.gmra.mxu0 %v510
        %v574 = vpop.f32.mrf.mxu0
        %v575 = vadd.f32 0.0, %v574
        %576 = vmatmul.f32.gmra.mxu0 %v513
        %v577 = vpop.f32.mrf.mxu0
        %v578 = vadd.f32 0.0, %v577
        %579 = vdwg.mxu0
        %v580 = vadd.f32 %v399, %v533
        %v581 = vadd.f32 %v402, %v536
        %v582 = vadd.f32 %v405, %v539
        %v583 = vadd.f32 %v408, %v542
        %v584 = vadd.f32 %v411, %v545
        %v585 = vadd.f32 %v414, %v548
        %v586 = vadd.f32 %v417, %v551
        %v587 = vadd.f32 %v420, %v554
        %v588 = vadd.f32 %v423, %v557
        %v589 = vadd.f32 %v426, %v560
        %v590 = vadd.f32 %v429, %v563
        %v591 = vadd.f32 %v432, %v566
        %v592 = vadd.f32 %v435, %v569
        %v593 = vadd.f32 %v438, %v572
        %v594 = vadd.f32 %v441, %v575
        %v595 = vadd.f32 %v444, %v578
        %v596 = vld [vmem:[%s448 + $0x1] sm:$0xff]
        %v597 = vld [vmem:[%s448 + $0x9] sm:$0xff]
        %v598 = vld [vmem:[%s448 + $0x19] sm:$0xff]
        %v599 = vld [vmem:[%s448 + $0x21] sm:$0xff]
        %v600 = vld [vmem:[%s448 + $0x31] sm:$0xff]
        %v601 = vld [vmem:[%s448 + $0x39] sm:$0xff]
        %v602 = vld [vmem:[%s448 + $0x49] sm:$0xff]
        %v603 = vld [vmem:[%s448 + $0x51] sm:$0xff]
        %v604 = vld [vmem:[%s448 + $0x61] sm:$0xff]
        %v605 = vld [vmem:[%s448 + $0x69] sm:$0xff]
        %v606 = vld [vmem:[%s448 + $0x79] sm:$0xff]
        %v607 = vld [vmem:[%s448 + $0x81] sm:$0xff]
        %v608 = vld [vmem:[%s448 + $0x91] sm:$0xff]
        %v609 = vld [vmem:[%s448 + $0x99] sm:$0xff]
        %v610 = vld [vmem:[%s448 + $0xa9] sm:$0xff]
        %v611 = vld [vmem:[%s448 + $0xb1] sm:$0xff]
        %s612 = scalar_lea.vmem %s1, 24
        %v613 = vld [vmem:[%s612] sm:$0xff]
        %v615 = vsel %vm219, %v596, 0
        %v618 = vsel %vm219, %v597, 0
        %v621 = vsel %vm219, %v598, 0
        %v624 = vsel %vm219, %v599, 0
        %v627 = vsel %vm219, %v600, 0
        %v630 = vsel %vm219, %v601, 0
        %v633 = vsel %vm219, %v602, 0
        %v636 = vsel %vm219, %v603, 0
        %v639 = vsel %vm219, %v604, 0
        %v642 = vsel %vm219, %v605, 0
        %v645 = vsel %vm219, %v606, 0
        %v648 = vsel %vm219, %v607, 0
        %v651 = vsel %vm219, %v608, 0
        %v654 = vsel %vm219, %v609, 0
        %v657 = vsel %vm219, %v610, 0
        %v660 = vsel %vm219, %v611, 0
        %662 = vmatpush.msra.mxu0 0.0
        %663 = vmatpush.msra.mxu0 0.0
        %664 = vmatpush.msra.mxu0 0.0
        %665 = vmatpush.msra.mxu0 0.0
        %666 = vmatpush.msra.mxu0 0.0
        %667 = vmatpush.msra.mxu0 0.0
        %668 = vmatpush.msra.mxu0 0.0
        %669 = vmatpush.msra.mxu0 0.0
        %670 = vmatpush.msra.mxu0 0.0
        %671 = vmatpush.msra.mxu0 0.0
        %672 = vmatpush.msra.mxu0 0.0
        %673 = vmatpush.msra.mxu0 0.0
        %674 = vmatpush.msra.mxu0 0.0
        %675 = vmatpush.msra.mxu0 0.0
        %676 = vmatpush.msra.mxu0 0.0
        %677 = vmatpush.msra.mxu0 %v613
        %678 = vmatmul.f32.gmra.mxu0 %v615
        %v679 = vpop.f32.mrf.mxu0
        %v680 = vadd.f32 0.0, %v679
        %681 = vmatmul.f32.gmra.mxu0 %v618
        %v682 = vpop.f32.mrf.mxu0
        %v683 = vadd.f32 0.0, %v682
        %684 = vmatmul.f32.gmra.mxu0 %v621
        %v685 = vpop.f32.mrf.mxu0
        %v686 = vadd.f32 0.0, %v685
        %687 = vmatmul.f32.gmra.mxu0 %v624
        %v688 = vpop.f32.mrf.mxu0
        %v689 = vadd.f32 0.0, %v688
        %690 = vmatmul.f32.gmra.mxu0 %v627
        %v691 = vpop.f32.mrf.mxu0
        %v692 = vadd.f32 0.0, %v691
        %693 = vmatmul.f32.gmra.mxu0 %v630
        %v694 = vpop.f32.mrf.mxu0
        %v695 = vadd.f32 0.0, %v694
        %696 = vmatmul.f32.gmra.mxu0 %v633
        %v697 = vpop.f32.mrf.mxu0
        %v698 = vadd.f32 0.0, %v697
        %699 = vmatmul.f32.gmra.mxu0 %v636
        %v700 = vpop.f32.mrf.mxu0
        %v701 = vadd.f32 0.0, %v700
        %702 = vmatmul.f32.gmra.mxu0 %v639
        %v703 = vpop.f32.mrf.mxu0
        %v704 = vadd.f32 0.0, %v703
        %705 = vmatmul.f32.gmra.mxu0 %v642
        %v706 = vpop.f32.mrf.mxu0
        %v707 = vadd.f32 0.0, %v706
        %708 = vmatmul.f32.gmra.mxu0 %v645
        %v709 = vpop.f32.mrf.mxu0
        %v710 = vadd.f32 0.0, %v709
        %711 = vmatmul.f32.gmra.mxu0 %v648
        %v712 = vpop.f32.mrf.mxu0
        %v713 = vadd.f32 0.0, %v712
        %714 = vmatmul.f32.gmra.mxu0 %v651
        %v715 = vpop.f32.mrf.mxu0
        %v716 = vadd.f32 0.0, %v715
        %717 = vmatmul.f32.gmra.mxu0 %v654
        %v718 = vpop.f32.mrf.mxu0
        %v719 = vadd.f32 0.0, %v718
        %720 = vmatmul.f32.gmra.mxu0 %v657
        %v721 = vpop.f32.mrf.mxu0
        %v722 = vadd.f32 0.0, %v721
        %723 = vmatmul.f32.gmra.mxu0 %v660
        %v724 = vpop.f32.mrf.mxu0
        %v725 = vadd.f32 0.0, %v724
        %726 = vdwg.mxu0
        %v727 = vadd.f32 %v580, %v680
        %v728 = vadd.f32 %v581, %v683
        %v729 = vadd.f32 %v582, %v686
        %v730 = vadd.f32 %v583, %v689
        %v731 = vadd.f32 %v584, %v692
        %v732 = vadd.f32 %v585, %v695
        %v733 = vadd.f32 %v586, %v698
        %v734 = vadd.f32 %v587, %v701
        %v735 = vadd.f32 %v588, %v704
        %v736 = vadd.f32 %v589, %v707
        %v737 = vadd.f32 %v590, %v710
        %v738 = vadd.f32 %v591, %v713
        %v739 = vadd.f32 %v592, %v716
        %v740 = vadd.f32 %v593, %v719
        %v741 = vadd.f32 %v594, %v722
        %v742 = vadd.f32 %v595, %v725
        %v744 = vperm.slane %v181, 0
        %v746 = vadd.f32 %v727, %v744
        %v747 = vadd.f32 %v728, %v744
        %v748 = vadd.f32 %v729, %v744
        %v749 = vadd.f32 %v730, %v744
        %v750 = vadd.f32 %v731, %v744
        %v751 = vadd.f32 %v732, %v744
        %v752 = vadd.f32 %v733, %v744
        %v753 = vadd.f32 %v734, %v744
        %v754 = vadd.f32 %v735, %v744
        %v755 = vadd.f32 %v736, %v744
        %v756 = vadd.f32 %v737, %v744
        %v757 = vadd.f32 %v738, %v744
        %v758 = vadd.f32 %v739, %v744
        %v759 = vadd.f32 %v740, %v744
        %v760 = vadd.f32 %v741, %v744
        %v761 = vadd.f32 %v742, %v744
        %v762 = vmax.f32 %v746, 0.0
        %v763 = vmax.f32 %v747, 0.0
        %v764 = vmax.f32 %v748, 0.0
        %v765 = vmax.f32 %v749, 0.0
        %v766 = vmax.f32 %v750, 0.0
        %v767 = vmax.f32 %v751, 0.0
        %v768 = vmax.f32 %v752, 0.0
        %v769 = vmax.f32 %v753, 0.0
        %v770 = vmax.f32 %v754, 0.0
        %v771 = vmax.f32 %v755, 0.0
        %v772 = vmax.f32 %v756, 0.0
        %v773 = vmax.f32 %v757, 0.0
        %v774 = vmax.f32 %v758, 0.0
        %v775 = vmax.f32 %v759, 0.0
        %v776 = vmax.f32 %v760, 0.0
        %v777 = vmax.f32 %v761, 0.0
        %vm778 = vcmask 130048
        %779 = vst.msk [vmem:[%s173] sm:$0xff] %vm778, %v762
        %780 = vst.msk [vmem:[%s173 + $0x8] sm:$0xff] %vm778, %v763
        %781 = vst.msk [vmem:[%s173 + $0x10] sm:$0xff] %vm778, %v764
        %782 = vst.msk [vmem:[%s173 + $0x18] sm:$0xff] %vm778, %v765
        %783 = vst.msk [vmem:[%s173 + $0x20] sm:$0xff] %vm778, %v766
        %784 = vst.msk [vmem:[%s173 + $0x28] sm:$0xff] %vm778, %v767
        %785 = vst.msk [vmem:[%s173 + $0x30] sm:$0xff] %vm778, %v768
        %786 = vst.msk [vmem:[%s173 + $0x38] sm:$0xff] %vm778, %v769
        %787 = vst.msk [vmem:[%s173 + $0x40] sm:$0xff] %vm778, %v770
        %788 = vst.msk [vmem:[%s173 + $0x48] sm:$0xff] %vm778, %v771
        %789 = vst.msk [vmem:[%s173 + $0x50] sm:$0xff] %vm778, %v772
        %790 = vst.msk [vmem:[%s173 + $0x58] sm:$0xff] %vm778, %v773
        %791 = vst.msk [vmem:[%s173 + $0x60] sm:$0xff] %vm778, %v774
        %792 = vst.msk [vmem:[%s173 + $0x68] sm:$0xff] %vm778, %v775
        %793 = vst.msk [vmem:[%s173 + $0x70] sm:$0xff] %vm778, %v776
        %794 = vst.msk [vmem:[%s173 + $0x78] sm:$0xff] %vm778, %v777
        %v795 = vld [vmem:[%s183 + $0x1] sm:$0xff]
        %v796 = vld [vmem:[%s183 + $0x9] sm:$0xff]
        %v797 = vld [vmem:[%s183 + $0x19] sm:$0xff]
        %v798 = vld [vmem:[%s183 + $0x21] sm:$0xff]
        %v799 = vld [vmem:[%s183 + $0x31] sm:$0xff]
        %v800 = vld [vmem:[%s183 + $0x39] sm:$0xff]
        %v801 = vld [vmem:[%s183 + $0x49] sm:$0xff]
        %v802 = vld [vmem:[%s183 + $0x51] sm:$0xff]
        %v803 = vld [vmem:[%s183 + $0x61] sm:$0xff]
        %v804 = vld [vmem:[%s183 + $0x69] sm:$0xff]
        %v805 = vld [vmem:[%s183 + $0x79] sm:$0xff]
        %v806 = vld [vmem:[%s183 + $0x81] sm:$0xff]
        %v807 = vld [vmem:[%s183 + $0x91] sm:$0xff]
        %v808 = vld [vmem:[%s183 + $0x99] sm:$0xff]
        %v809 = vld [vmem:[%s183 + $0xa9] sm:$0xff]
        %v810 = vld [vmem:[%s183 + $0xb1] sm:$0xff]
        %s811 = scalar_lea.vmem %s1, 32
        %v812 = vld [vmem:[%s811] sm:$0xff]
        %v813 = vld [vmem:[%s183 + $0x2] sm:$0xff]
        %v814 = vld [vmem:[%s183 + $0xa] sm:$0xff]
        %v815 = vld [vmem:[%s183 + $0x1a] sm:$0xff]
        %v816 = vld [vmem:[%s183 + $0x22] sm:$0xff]
        %v817 = vld [vmem:[%s183 + $0x32] sm:$0xff]
        %v818 = vld [vmem:[%s183 + $0x3a] sm:$0xff]
        %v819 = vld [vmem:[%s183 + $0x4a] sm:$0xff]
        %v820 = vld [vmem:[%s183 + $0x52] sm:$0xff]
        %v821 = vld [vmem:[%s183 + $0x62] sm:$0xff]
        %v822 = vld [vmem:[%s183 + $0x6a] sm:$0xff]
        %v823 = vld [vmem:[%s183 + $0x7a] sm:$0xff]
        %v824 = vld [vmem:[%s183 + $0x82] sm:$0xff]
        %v825 = vld [vmem:[%s183 + $0x92] sm:$0xff]
        %v826 = vld [vmem:[%s183 + $0x9a] sm:$0xff]
        %v827 = vld [vmem:[%s183 + $0xaa] sm:$0xff]
        %v828 = vld [vmem:[%s183 + $0xb2] sm:$0xff]
        %s829 = scalar_lea.vmem %s1, 40
        %v830 = vld [vmem:[%s829] sm:$0xff]
        %v832 = vsel %vm219, %v813, 0
        %v835 = vsel %vm219, %v814, 0
        %v838 = vsel %vm219, %v815, 0
        %v841 = vsel %vm219, %v816, 0
        %v844 = vsel %vm219, %v817, 0
        %v847 = vsel %vm219, %v818, 0
        %v850 = vsel %vm219, %v819, 0
        %v853 = vsel %vm219, %v820, 0
        %v856 = vsel %vm219, %v821, 0
        %v859 = vsel %vm219, %v822, 0
        %v862 = vsel %vm219, %v823, 0
        %v865 = vsel %vm219, %v824, 0
        %v868 = vsel %vm219, %v825, 0
        %v871 = vsel %vm219, %v826, 0
        %v874 = vsel %vm219, %v827, 0
        %v877 = vsel %vm219, %v828, 0
        %879 = vmatpush.msra.mxu0 0.0
        %880 = vmatpush.msra.mxu0 0.0
        %881 = vmatpush.msra.mxu0 0.0
        %882 = vmatpush.msra.mxu0 0.0
        %883 = vmatpush.msra.mxu0 0.0
        %884 = vmatpush.msra.mxu0 0.0
        %885 = vmatpush.msra.mxu0 0.0
        %886 = vmatpush.msra.mxu0 0.0
        %887 = vmatpush.msra.mxu0 0.0
        %888 = vmatpush.msra.mxu0 0.0
        %889 = vmatpush.msra.mxu0 0.0
        %890 = vmatpush.msra.mxu0 0.0
        %891 = vmatpush.msra.mxu0 0.0
        %892 = vmatpush.msra.mxu0 0.0
        %893 = vmatpush.msra.mxu0 0.0
        %894 = vmatpush.msra.mxu0 %v830
        %895 = vmatmul.f32.gmra.mxu0 %v832
        %v896 = vpop.f32.mrf.mxu0
        %v897 = vadd.f32 0.0, %v896
        %898 = vmatmul.f32.gmra.mxu0 %v835
        %v899 = vpop.f32.mrf.mxu0
        %v900 = vadd.f32 0.0, %v899
        %901 = vmatmul.f32.gmra.mxu0 %v838
        %v902 = vpop.f32.mrf.mxu0
        %v903 = vadd.f32 0.0, %v902
        %904 = vmatmul.f32.gmra.mxu0 %v841
        %v905 = vpop.f32.mrf.mxu0
        %v906 = vadd.f32 0.0, %v905
        %907 = vmatmul.f32.gmra.mxu0 %v844
        %v908 = vpop.f32.mrf.mxu0
        %v909 = vadd.f32 0.0, %v908
        %910 = vmatmul.f32.gmra.mxu0 %v847
        %v911 = vpop.f32.mrf.mxu0
        %v912 = vadd.f32 0.0, %v911
        %913 = vmatmul.f32.gmra.mxu0 %v850
        %v914 = vpop.f32.mrf.mxu0
        %v915 = vadd.f32 0.0, %v914
        %916 = vmatmul.f32.gmra.mxu0 %v853
        %v917 = vpop.f32.mrf.mxu0
        %v918 = vadd.f32 0.0, %v917
        %919 = vmatmul.f32.gmra.mxu0 %v856
        %v920 = vpop.f32.mrf.mxu0
        %v921 = vadd.f32 0.0, %v920
        %922 = vmatmul.f32.gmra.mxu0 %v859
        %v923 = vpop.f32.mrf.mxu0
        %v924 = vadd.f32 0.0, %v923
        %925 = vmatmul.f32.gmra.mxu0 %v862
        %v926 = vpop.f32.mrf.mxu0
        %v927 = vadd.f32 0.0, %v926
        %928 = vmatmul.f32.gmra.mxu0 %v865
        %v929 = vpop.f32.mrf.mxu0
        %v930 = vadd.f32 0.0, %v929
        %931 = vmatmul.f32.gmra.mxu0 %v868
        %v932 = vpop.f32.mrf.mxu0
        %v933 = vadd.f32 0.0, %v932
        %934 = vmatmul.f32.gmra.mxu0 %v871
        %v935 = vpop.f32.mrf.mxu0
        %v936 = vadd.f32 0.0, %v935
        %937 = vmatmul.f32.gmra.mxu0 %v874
        %v938 = vpop.f32.mrf.mxu0
        %v939 = vadd.f32 0.0, %v938
        %940 = vmatmul.f32.gmra.mxu0 %v877
        %v941 = vpop.f32.mrf.mxu0
        %v942 = vadd.f32 0.0, %v941
        %943 = vdwg.mxu0
        %v945 = vsel %vm219, %v795, 0
        %v948 = vsel %vm219, %v796, 0
        %v951 = vsel %vm219, %v797, 0
        %v954 = vsel %vm219, %v798, 0
        %v957 = vsel %vm219, %v799, 0
        %v960 = vsel %vm219, %v800, 0
        %v963 = vsel %vm219, %v801, 0
        %v966 = vsel %vm219, %v802, 0
        %v969 = vsel %vm219, %v803, 0
        %v972 = vsel %vm219, %v804, 0
        %v975 = vsel %vm219, %v805, 0
        %v978 = vsel %vm219, %v806, 0
        %v981 = vsel %vm219, %v807, 0
        %v984 = vsel %vm219, %v808, 0
        %v987 = vsel %vm219, %v809, 0
        %v990 = vsel %vm219, %v810, 0
        %992 = vmatpush.msra.mxu0 0.0
        %993 = vmatpush.msra.mxu0 0.0
        %994 = vmatpush.msra.mxu0 0.0
        %995 = vmatpush.msra.mxu0 0.0
        %996 = vmatpush.msra.mxu0 0.0
        %997 = vmatpush.msra.mxu0 0.0
        %998 = vmatpush.msra.mxu0 0.0
        %999 = vmatpush.msra.mxu0 0.0
        %1000 = vmatpush.msra.mxu0 0.0
        %1001 = vmatpush.msra.mxu0 0.0
        %1002 = vmatpush.msra.mxu0 0.0
        %1003 = vmatpush.msra.mxu0 0.0
        %1004 = vmatpush.msra.mxu0 0.0
        %1005 = vmatpush.msra.mxu0 0.0
        %1006 = vmatpush.msra.mxu0 0.0
        %1007 = vmatpush.msra.mxu0 %v812
        %1008 = vmatmul.f32.gmra.mxu0 %v945
        %v1009 = vpop.f32.mrf.mxu0
        %v1010 = vadd.f32 %v897, %v1009
        %1011 = vmatmul.f32.gmra.mxu0 %v948
        %v1012 = vpop.f32.mrf.mxu0
        %v1013 = vadd.f32 %v900, %v1012
        %1014 = vmatmul.f32.gmra.mxu0 %v951
        %v1015 = vpop.f32.mrf.mxu0
        %v1016 = vadd.f32 %v903, %v1015
        %1017 = vmatmul.f32.gmra.mxu0 %v954
        %v1018 = vpop.f32.mrf.mxu0
        %v1019 = vadd.f32 %v906, %v1018
        %1020 = vmatmul.f32.gmra.mxu0 %v957
        %v1021 = vpop.f32.mrf.mxu0
        %v1022 = vadd.f32 %v909, %v1021
        %1023 = vmatmul.f32.gmra.mxu0 %v960
        %v1024 = vpop.f32.mrf.mxu0
        %v1025 = vadd.f32 %v912, %v1024
        %1026 = vmatmul.f32.gmra.mxu0 %v963
        %v1027 = vpop.f32.mrf.mxu0
        %v1028 = vadd.f32 %v915, %v1027
        %1029 = vmatmul.f32.gmra.mxu0 %v966
        %v1030 = vpop.f32.mrf.mxu0
        %v1031 = vadd.f32 %v918, %v1030
        %1032 = vmatmul.f32.gmra.mxu0 %v969
        %v1033 = vpop.f32.mrf.mxu0
        %v1034 = vadd.f32 %v921, %v1033
        %1035 = vmatmul.f32.gmra.mxu0 %v972
        %v1036 = vpop.f32.mrf.mxu0
        %v1037 = vadd.f32 %v924, %v1036
        %1038 = vmatmul.f32.gmra.mxu0 %v975
        %v1039 = vpop.f32.mrf.mxu0
        %v1040 = vadd.f32 %v927, %v1039
        %1041 = vmatmul.f32.gmra.mxu0 %v978
        %v1042 = vpop.f32.mrf.mxu0
        %v1043 = vadd.f32 %v930, %v1042
        %1044 = vmatmul.f32.gmra.mxu0 %v981
        %v1045 = vpop.f32.mrf.mxu0
        %v1046 = vadd.f32 %v933, %v1045
        %1047 = vmatmul.f32.gmra.mxu0 %v984
        %v1048 = vpop.f32.mrf.mxu0
        %v1049 = vadd.f32 %v936, %v1048
        %1050 = vmatmul.f32.gmra.mxu0 %v987
        %v1051 = vpop.f32.mrf.mxu0
        %v1052 = vadd.f32 %v939, %v1051
        %1053 = vmatmul.f32.gmra.mxu0 %v990
        %v1054 = vpop.f32.mrf.mxu0
        %v1055 = vadd.f32 %v942, %v1054
        %1056 = vdwg.mxu0
        %v1057 = vld [vmem:[%s448 + $0x1] sm:$0xff]
        %v1058 = vld [vmem:[%s448 + $0x9] sm:$0xff]
        %v1059 = vld [vmem:[%s448 + $0x19] sm:$0xff]
        %v1060 = vld [vmem:[%s448 + $0x21] sm:$0xff]
        %v1061 = vld [vmem:[%s448 + $0x31] sm:$0xff]
        %v1062 = vld [vmem:[%s448 + $0x39] sm:$0xff]
        %v1063 = vld [vmem:[%s448 + $0x49] sm:$0xff]
        %v1064 = vld [vmem:[%s448 + $0x51] sm:$0xff]
        %v1065 = vld [vmem:[%s448 + $0x61] sm:$0xff]
        %v1066 = vld [vmem:[%s448 + $0x69] sm:$0xff]
        %v1067 = vld [vmem:[%s448 + $0x79] sm:$0xff]
        %v1068 = vld [vmem:[%s448 + $0x81] sm:$0xff]
        %v1069 = vld [vmem:[%s448 + $0x91] sm:$0xff]
        %v1070 = vld [vmem:[%s448 + $0x99] sm:$0xff]
        %v1071 = vld [vmem:[%s448 + $0xa9] sm:$0xff]
        %v1072 = vld [vmem:[%s448 + $0xb1] sm:$0xff]
        %s1073 = scalar_lea.vmem %s1, 48
        %v1074 = vld [vmem:[%s1073] sm:$0xff]
        %v1076 = vsel %vm219, %v1057, 0
        %v1079 = vsel %vm219, %v1058, 0
        %v1082 = vsel %vm219, %v1059, 0
        %v1085 = vsel %vm219, %v1060, 0
        %v1088 = vsel %vm219, %v1061, 0
        %v1091 = vsel %vm219, %v1062, 0
        %v1094 = vsel %vm219, %v1063, 0
        %v1097 = vsel %vm219, %v1064, 0
        %v1100 = vsel %vm219, %v1065, 0
        %v1103 = vsel %vm219, %v1066, 0
        %v1106 = vsel %vm219, %v1067, 0
        %v1109 = vsel %vm219, %v1068, 0
        %v1112 = vsel %vm219, %v1069, 0
        %v1115 = vsel %vm219, %v1070, 0
        %v1118 = vsel %vm219, %v1071, 0
        %v1121 = vsel %vm219, %v1072, 0
        %1123 = vmatpush.msra.mxu0 0.0
        %1124 = vmatpush.msra.mxu0 0.0
        %1125 = vmatpush.msra.mxu0 0.0
        %1126 = vmatpush.msra.mxu0 0.0
        %1127 = vmatpush.msra.mxu0 0.0
        %1128 = vmatpush.msra.mxu0 0.0
        %1129 = vmatpush.msra.mxu0 0.0
        %1130 = vmatpush.msra.mxu0 0.0
        %1131 = vmatpush.msra.mxu0 0.0
        %1132 = vmatpush.msra.mxu0 0.0
        %1133 = vmatpush.msra.mxu0 0.0
        %1134 = vmatpush.msra.mxu0 0.0
        %1135 = vmatpush.msra.mxu0 0.0
        %1136 = vmatpush.msra.mxu0 0.0
        %1137 = vmatpush.msra.mxu0 0.0
        %1138 = vmatpush.msra.mxu0 %v1074
        %1139 = vmatmul.f32.gmra.mxu0 %v1076
        %v1140 = vpop.f32.mrf.mxu0
        %v1141 = vadd.f32 0.0, %v1140
        %1142 = vmatmul.f32.gmra.mxu0 %v1079
        %v1143 = vpop.f32.mrf.mxu0
        %v1144 = vadd.f32 0.0, %v1143
        %1145 = vmatmul.f32.gmra.mxu0 %v1082
        %v1146 = vpop.f32.mrf.mxu0
        %v1147 = vadd.f32 0.0, %v1146
        %1148 = vmatmul.f32.gmra.mxu0 %v1085
        %v1149 = vpop.f32.mrf.mxu0
        %v1150 = vadd.f32 0.0, %v1149
        %1151 = vmatmul.f32.gmra.mxu0 %v1088
        %v1152 = vpop.f32.mrf.mxu0
        %v1153 = vadd.f32 0.0, %v1152
        %1154 = vmatmul.f32.gmra.mxu0 %v1091
        %v1155 = vpop.f32.mrf.mxu0
        %v1156 = vadd.f32 0.0, %v1155
        %1157 = vmatmul.f32.gmra.mxu0 %v1094
        %v1158 = vpop.f32.mrf.mxu0
        %v1159 = vadd.f32 0.0, %v1158
        %1160 = vmatmul.f32.gmra.mxu0 %v1097
        %v1161 = vpop.f32.mrf.mxu0
        %v1162 = vadd.f32 0.0, %v1161
        %1163 = vmatmul.f32.gmra.mxu0 %v1100
        %v1164 = vpop.f32.mrf.mxu0
        %v1165 = vadd.f32 0.0, %v1164
        %1166 = vmatmul.f32.gmra.mxu0 %v1103
        %v1167 = vpop.f32.mrf.mxu0
        %v1168 = vadd.f32 0.0, %v1167
        %1169 = vmatmul.f32.gmra.mxu0 %v1106
        %v1170 = vpop.f32.mrf.mxu0
        %v1171 = vadd.f32 0.0, %v1170
        %1172 = vmatmul.f32.gmra.mxu0 %v1109
        %v1173 = vpop.f32.mrf.mxu0
        %v1174 = vadd.f32 0.0, %v1173
        %1175 = vmatmul.f32.gmra.mxu0 %v1112
        %v1176 = vpop.f32.mrf.mxu0
        %v1177 = vadd.f32 0.0, %v1176
        %1178 = vmatmul.f32.gmra.mxu0 %v1115
        %v1179 = vpop.f32.mrf.mxu0
        %v1180 = vadd.f32 0.0, %v1179
        %1181 = vmatmul.f32.gmra.mxu0 %v1118
        %v1182 = vpop.f32.mrf.mxu0
        %v1183 = vadd.f32 0.0, %v1182
        %1184 = vmatmul.f32.gmra.mxu0 %v1121
        %v1185 = vpop.f32.mrf.mxu0
        %v1186 = vadd.f32 0.0, %v1185
        %1187 = vdwg.mxu0
        %v1188 = vadd.f32 %v1010, %v1141
        %v1189 = vadd.f32 %v1013, %v1144
        %v1190 = vadd.f32 %v1016, %v1147
        %v1191 = vadd.f32 %v1019, %v1150
        %v1192 = vadd.f32 %v1022, %v1153
        %v1193 = vadd.f32 %v1025, %v1156
        %v1194 = vadd.f32 %v1028, %v1159
        %v1195 = vadd.f32 %v1031, %v1162
        %v1196 = vadd.f32 %v1034, %v1165
        %v1197 = vadd.f32 %v1037, %v1168
        %v1198 = vadd.f32 %v1040, %v1171
        %v1199 = vadd.f32 %v1043, %v1174
        %v1200 = vadd.f32 %v1046, %v1177
        %v1201 = vadd.f32 %v1049, %v1180
        %v1202 = vadd.f32 %v1052, %v1183
        %v1203 = vadd.f32 %v1055, %v1186
        %v1204 = vld [vmem:[%s448 + $0x2] sm:$0xff]
        %v1205 = vld [vmem:[%s448 + $0xa] sm:$0xff]
        %v1206 = vld [vmem:[%s448 + $0x1a] sm:$0xff]
        %v1207 = vld [vmem:[%s448 + $0x22] sm:$0xff]
        %v1208 = vld [vmem:[%s448 + $0x32] sm:$0xff]
        %v1209 = vld [vmem:[%s448 + $0x3a] sm:$0xff]
        %v1210 = vld [vmem:[%s448 + $0x4a] sm:$0xff]
        %v1211 = vld [vmem:[%s448 + $0x52] sm:$0xff]
        %v1212 = vld [vmem:[%s448 + $0x62] sm:$0xff]
        %v1213 = vld [vmem:[%s448 + $0x6a] sm:$0xff]
        %v1214 = vld [vmem:[%s448 + $0x7a] sm:$0xff]
        %v1215 = vld [vmem:[%s448 + $0x82] sm:$0xff]
        %v1216 = vld [vmem:[%s448 + $0x92] sm:$0xff]
        %v1217 = vld [vmem:[%s448 + $0x9a] sm:$0xff]
        %v1218 = vld [vmem:[%s448 + $0xaa] sm:$0xff]
        %v1219 = vld [vmem:[%s448 + $0xb2] sm:$0xff]
        %s1220 = scalar_lea.vmem %s1, 56
        %v1221 = vld [vmem:[%s1220] sm:$0xff]
        %v1223 = vsel %vm219, %v1204, 0
        %v1226 = vsel %vm219, %v1205, 0
        %v1229 = vsel %vm219, %v1206, 0
        %v1232 = vsel %vm219, %v1207, 0
        %v1235 = vsel %vm219, %v1208, 0
        %v1238 = vsel %vm219, %v1209, 0
        %v1241 = vsel %vm219, %v1210, 0
        %v1244 = vsel %vm219, %v1211, 0
        %v1247 = vsel %vm219, %v1212, 0
        %v1250 = vsel %vm219, %v1213, 0
        %v1253 = vsel %vm219, %v1214, 0
        %v1256 = vsel %vm219, %v1215, 0
        %v1259 = vsel %vm219, %v1216, 0
        %v1262 = vsel %vm219, %v1217, 0
        %v1265 = vsel %vm219, %v1218, 0
        %v1268 = vsel %vm219, %v1219, 0
        %1270 = vmatpush.msra.mxu0 0.0
        %1271 = vmatpush.msra.mxu0 0.0
        %1272 = vmatpush.msra.mxu0 0.0
        %1273 = vmatpush.msra.mxu0 0.0
        %1274 = vmatpush.msra.mxu0 0.0
        %1275 = vmatpush.msra.mxu0 0.0
        %1276 = vmatpush.msra.mxu0 0.0
        %1277 = vmatpush.msra.mxu0 0.0
        %1278 = vmatpush.msra.mxu0 0.0
        %1279 = vmatpush.msra.mxu0 0.0
        %1280 = vmatpush.msra.mxu0 0.0
        %1281 = vmatpush.msra.mxu0 0.0
        %1282 = vmatpush.msra.mxu0 0.0
        %1283 = vmatpush.msra.mxu0 0.0
        %1284 = vmatpush.msra.mxu0 0.0
        %1285 = vmatpush.msra.mxu0 %v1221
        %1286 = vmatmul.f32.gmra.mxu0 %v1223
        %v1287 = vpop.f32.mrf.mxu0
        %v1288 = vadd.f32 0.0, %v1287
        %1289 = vmatmul.f32.gmra.mxu0 %v1226
        %v1290 = vpop.f32.mrf.mxu0
        %v1291 = vadd.f32 0.0, %v1290
        %1292 = vmatmul.f32.gmra.mxu0 %v1229
        %v1293 = vpop.f32.mrf.mxu0
        %v1294 = vadd.f32 0.0, %v1293
        %1295 = vmatmul.f32.gmra.mxu0 %v1232
        %v1296 = vpop.f32.mrf.mxu0
        %v1297 = vadd.f32 0.0, %v1296
        %1298 = vmatmul.f32.gmra.mxu0 %v1235
        %v1299 = vpop.f32.mrf.mxu0
        %v1300 = vadd.f32 0.0, %v1299
        %1301 = vmatmul.f32.gmra.mxu0 %v1238
        %v1302 = vpop.f32.mrf.mxu0
        %v1303 = vadd.f32 0.0, %v1302
        %1304 = vmatmul.f32.gmra.mxu0 %v1241
        %v1305 = vpop.f32.mrf.mxu0
        %v1306 = vadd.f32 0.0, %v1305
        %1307 = vmatmul.f32.gmra.mxu0 %v1244
        %v1308 = vpop.f32.mrf.mxu0
        %v1309 = vadd.f32 0.0, %v1308
        %1310 = vmatmul.f32.gmra.mxu0 %v1247
        %v1311 = vpop.f32.mrf.mxu0
        %v1312 = vadd.f32 0.0, %v1311
        %1313 = vmatmul.f32.gmra.mxu0 %v1250
        %v1314 = vpop.f32.mrf.mxu0
        %v1315 = vadd.f32 0.0, %v1314
        %1316 = vmatmul.f32.gmra.mxu0 %v1253
        %v1317 = vpop.f32.mrf.mxu0
        %v1318 = vadd.f32 0.0, %v1317
        %1319 = vmatmul.f32.gmra.mxu0 %v1256
        %v1320 = vpop.f32.mrf.mxu0
        %v1321 = vadd.f32 0.0, %v1320
        %1322 = vmatmul.f32.gmra.mxu0 %v1259
        %v1323 = vpop.f32.mrf.mxu0
        %v1324 = vadd.f32 0.0, %v1323
        %1325 = vmatmul.f32.gmra.mxu0 %v1262
        %v1326 = vpop.f32.mrf.mxu0
        %v1327 = vadd.f32 0.0, %v1326
        %1328 = vmatmul.f32.gmra.mxu0 %v1265
        %v1329 = vpop.f32.mrf.mxu0
        %v1330 = vadd.f32 0.0, %v1329
        %1331 = vmatmul.f32.gmra.mxu0 %v1268
        %v1332 = vpop.f32.mrf.mxu0
        %v1333 = vadd.f32 0.0, %v1332
        %1334 = vdwg.mxu0
        %v1335 = vadd.f32 %v1188, %v1288
        %v1336 = vadd.f32 %v1189, %v1291
        %v1337 = vadd.f32 %v1190, %v1294
        %v1338 = vadd.f32 %v1191, %v1297
        %v1339 = vadd.f32 %v1192, %v1300
        %v1340 = vadd.f32 %v1193, %v1303
        %v1341 = vadd.f32 %v1194, %v1306
        %v1342 = vadd.f32 %v1195, %v1309
        %v1343 = vadd.f32 %v1196, %v1312
        %v1344 = vadd.f32 %v1197, %v1315
        %v1345 = vadd.f32 %v1198, %v1318
        %v1346 = vadd.f32 %v1199, %v1321
        %v1347 = vadd.f32 %v1200, %v1324
        %v1348 = vadd.f32 %v1201, %v1327
        %v1349 = vadd.f32 %v1202, %v1330
        %v1350 = vadd.f32 %v1203, %v1333
        %v1351 = vadd.f32 %v1335, %v744
        %v1352 = vadd.f32 %v1336, %v744
        %v1353 = vadd.f32 %v1337, %v744
        %v1354 = vadd.f32 %v1338, %v744
        %v1355 = vadd.f32 %v1339, %v744
        %v1356 = vadd.f32 %v1340, %v744
        %v1357 = vadd.f32 %v1341, %v744
        %v1358 = vadd.f32 %v1342, %v744
        %v1359 = vadd.f32 %v1343, %v744
        %v1360 = vadd.f32 %v1344, %v744
        %v1361 = vadd.f32 %v1345, %v744
        %v1362 = vadd.f32 %v1346, %v744
        %v1363 = vadd.f32 %v1347, %v744
        %v1364 = vadd.f32 %v1348, %v744
        %v1365 = vadd.f32 %v1349, %v744
        %v1366 = vadd.f32 %v1350, %v744
        %v1367 = vmax.f32 %v1351, 0.0
        %v1368 = vmax.f32 %v1352, 0.0
        %v1369 = vmax.f32 %v1353, 0.0
        %v1370 = vmax.f32 %v1354, 0.0
        %v1371 = vmax.f32 %v1355, 0.0
        %v1372 = vmax.f32 %v1356, 0.0
        %v1373 = vmax.f32 %v1357, 0.0
        %v1374 = vmax.f32 %v1358, 0.0
        %v1375 = vmax.f32 %v1359, 0.0
        %v1376 = vmax.f32 %v1360, 0.0
        %v1377 = vmax.f32 %v1361, 0.0
        %v1378 = vmax.f32 %v1362, 0.0
        %v1379 = vmax.f32 %v1363, 0.0
        %v1380 = vmax.f32 %v1364, 0.0
        %v1381 = vmax.f32 %v1365, 0.0
        %v1382 = vmax.f32 %v1366, 0.0
        %s1383 = scalar_lea.vmem %s173, 128 [#allocation2]
        %1384 = vst.msk [vmem:[%s1383] sm:$0xff] %vm778, %v1367
        %1385 = vst.msk [vmem:[%s1383 + $0x8] sm:$0xff] %vm778, %v1368
        %1386 = vst.msk [vmem:[%s1383 + $0x10] sm:$0xff] %vm778, %v1369
        %1387 = vst.msk [vmem:[%s1383 + $0x18] sm:$0xff] %vm778, %v1370
        %1388 = vst.msk [vmem:[%s1383 + $0x20] sm:$0xff] %vm778, %v1371
        %1389 = vst.msk [vmem:[%s1383 + $0x28] sm:$0xff] %vm778, %v1372
        %1390 = vst.msk [vmem:[%s1383 + $0x30] sm:$0xff] %vm778, %v1373
        %1391 = vst.msk [vmem:[%s1383 + $0x38] sm:$0xff] %vm778, %v1374
        %1392 = vst.msk [vmem:[%s1383 + $0x40] sm:$0xff] %vm778, %v1375
        %1393 = vst.msk [vmem:[%s1383 + $0x48] sm:$0xff] %vm778, %v1376
        %1394 = vst.msk [vmem:[%s1383 + $0x50] sm:$0xff] %vm778, %v1377
        %1395 = vst.msk [vmem:[%s1383 + $0x58] sm:$0xff] %vm778, %v1378
        %1396 = vst.msk [vmem:[%s1383 + $0x60] sm:$0xff] %vm778, %v1379
        %1397 = vst.msk [vmem:[%s1383 + $0x68] sm:$0xff] %vm778, %v1380
        %1398 = vst.msk [vmem:[%s1383 + $0x70] sm:$0xff] %vm778, %v1381
        %1399 = vst.msk [vmem:[%s1383 + $0x78] sm:$0xff] %vm778, %v1382
        %v1400 = vld [vmem:[%s448] sm:$0xff]
        %v1401 = vld [vmem:[%s448 + $0x8] sm:$0xff]
        %v1402 = vld [vmem:[%s448 + $0x18] sm:$0xff]
        %v1403 = vld [vmem:[%s448 + $0x20] sm:$0xff]
        %v1404 = vld [vmem:[%s448 + $0x30] sm:$0xff]
        %v1405 = vld [vmem:[%s448 + $0x38] sm:$0xff]
        %v1406 = vld [vmem:[%s448 + $0x48] sm:$0xff]
        %v1407 = vld [vmem:[%s448 + $0x50] sm:$0xff]
        %v1408 = vld [vmem:[%s448 + $0x60] sm:$0xff]
        %v1409 = vld [vmem:[%s448 + $0x68] sm:$0xff]
        %v1410 = vld [vmem:[%s448 + $0x78] sm:$0xff]
        %v1411 = vld [vmem:[%s448 + $0x80] sm:$0xff]
        %v1412 = vld [vmem:[%s448 + $0x90] sm:$0xff]
        %v1413 = vld [vmem:[%s448 + $0x98] sm:$0xff]
        %v1414 = vld [vmem:[%s448 + $0xa8] sm:$0xff]
        %v1415 = vld [vmem:[%s448 + $0xb0] sm:$0xff]
        %s1416 = scalar_lea.vmem %s1, 64
        %v1417 = vld [vmem:[%s1416] sm:$0xff]
        %v1418 = vld [vmem:[%s448 + $0x1] sm:$0xff]
        %v1419 = vld [vmem:[%s448 + $0x9] sm:$0xff]
        %v1420 = vld [vmem:[%s448 + $0x19] sm:$0xff]
        %v1421 = vld [vmem:[%s448 + $0x21] sm:$0xff]
        %v1422 = vld [vmem:[%s448 + $0x31] sm:$0xff]
        %v1423 = vld [vmem:[%s448 + $0x39] sm:$0xff]
        %v1424 = vld [vmem:[%s448 + $0x49] sm:$0xff]
        %v1425 = vld [vmem:[%s448 + $0x51] sm:$0xff]
        %v1426 = vld [vmem:[%s448 + $0x61] sm:$0xff]
        %v1427 = vld [vmem:[%s448 + $0x69] sm:$0xff]
        %v1428 = vld [vmem:[%s448 + $0x79] sm:$0xff]
        %v1429 = vld [vmem:[%s448 + $0x81] sm:$0xff]
        %v1430 = vld [vmem:[%s448 + $0x91] sm:$0xff]
        %v1431 = vld [vmem:[%s448 + $0x99] sm:$0xff]
        %v1432 = vld [vmem:[%s448 + $0xa9] sm:$0xff]
        %v1433 = vld [vmem:[%s448 + $0xb1] sm:$0xff]
        %s1434 = scalar_lea.vmem %s1, 72
        %v1435 = vld [vmem:[%s1434] sm:$0xff]
        %v1437 = vsel %vm219, %v1418, 0
        %v1440 = vsel %vm219, %v1419, 0
        %v1443 = vsel %vm219, %v1420, 0
        %v1446 = vsel %vm219, %v1421, 0
        %v1449 = vsel %vm219, %v1422, 0
        %v1452 = vsel %vm219, %v1423, 0
        %v1455 = vsel %vm219, %v1424, 0
        %v1458 = vsel %vm219, %v1425, 0
        %v1461 = vsel %vm219, %v1426, 0
        %v1464 = vsel %vm219, %v1427, 0
        %v1467 = vsel %vm219, %v1428, 0
        %v1470 = vsel %vm219, %v1429, 0
        %v1473 = vsel %vm219, %v1430, 0
        %v1476 = vsel %vm219, %v1431, 0
        %v1479 = vsel %vm219, %v1432, 0
        %v1482 = vsel %vm219, %v1433, 0
        %1484 = vmatpush.msra.mxu0 0.0
        %1485 = vmatpush.msra.mxu0 0.0
        %1486 = vmatpush.msra.mxu0 0.0
        %1487 = vmatpush.msra.mxu0 0.0
        %1488 = vmatpush.msra.mxu0 0.0
        %1489 = vmatpush.msra.mxu0 0.0
        %1490 = vmatpush.msra.mxu0 0.0
        %1491 = vmatpush.msra.mxu0 0.0
        %1492 = vmatpush.msra.mxu0 0.0
        %1493 = vmatpush.msra.mxu0 0.0
        %1494 = vmatpush.msra.mxu0 0.0
        %1495 = vmatpush.msra.mxu0 0.0
        %1496 = vmatpush.msra.mxu0 0.0
        %1497 = vmatpush.msra.mxu0 0.0
        %1498 = vmatpush.msra.mxu0 0.0
        %1499 = vmatpush.msra.mxu0 %v1435
        %1500 = vmatmul.f32.gmra.mxu0 %v1437
        %v1501 = vpop.f32.mrf.mxu0
        %v1502 = vadd.f32 0.0, %v1501
        %1503 = vmatmul.f32.gmra.mxu0 %v1440
        %v1504 = vpop.f32.mrf.mxu0
        %v1505 = vadd.f32 0.0, %v1504
        %1506 = vmatmul.f32.gmra.mxu0 %v1443
        %v1507 = vpop.f32.mrf.mxu0
        %v1508 = vadd.f32 0.0, %v1507
        %1509 = vmatmul.f32.gmra.mxu0 %v1446
        %v1510 = vpop.f32.mrf.mxu0
        %v1511 = vadd.f32 0.0, %v1510
        %1512 = vmatmul.f32.gmra.mxu0 %v1449
        %v1513 = vpop.f32.mrf.mxu0
        %v1514 = vadd.f32 0.0, %v1513
        %1515 = vmatmul.f32.gmra.mxu0 %v1452
        %v1516 = vpop.f32.mrf.mxu0
        %v1517 = vadd.f32 0.0, %v1516
        %1518 = vmatmul.f32.gmra.mxu0 %v1455
        %v1519 = vpop.f32.mrf.mxu0
        %v1520 = vadd.f32 0.0, %v1519
        %1521 = vmatmul.f32.gmra.mxu0 %v1458
        %v1522 = vpop.f32.mrf.mxu0
        %v1523 = vadd.f32 0.0, %v1522
        %1524 = vmatmul.f32.gmra.mxu0 %v1461
        %v1525 = vpop.f32.mrf.mxu0
        %v1526 = vadd.f32 0.0, %v1525
        %1527 = vmatmul.f32.gmra.mxu0 %v1464
        %v1528 = vpop.f32.mrf.mxu0
        %v1529 = vadd.f32 0.0, %v1528
        %1530 = vmatmul.f32.gmra.mxu0 %v1467
        %v1531 = vpop.f32.mrf.mxu0
        %v1532 = vadd.f32 0.0, %v1531
        %1533 = vmatmul.f32.gmra.mxu0 %v1470
        %v1534 = vpop.f32.mrf.mxu0
        %v1535 = vadd.f32 0.0, %v1534
        %1536 = vmatmul.f32.gmra.mxu0 %v1473
        %v1537 = vpop.f32.mrf.mxu0
        %v1538 = vadd.f32 0.0, %v1537
        %1539 = vmatmul.f32.gmra.mxu0 %v1476
        %v1540 = vpop.f32.mrf.mxu0
        %v1541 = vadd.f32 0.0, %v1540
        %1542 = vmatmul.f32.gmra.mxu0 %v1479
        %v1543 = vpop.f32.mrf.mxu0
        %v1544 = vadd.f32 0.0, %v1543
        %1545 = vmatmul.f32.gmra.mxu0 %v1482
        %v1546 = vpop.f32.mrf.mxu0
        %v1547 = vadd.f32 0.0, %v1546
        %1548 = vdwg.mxu0
        %v1550 = vsel %vm219, %v1400, 0
        %v1553 = vsel %vm219, %v1401, 0
        %v1556 = vsel %vm219, %v1402, 0
        %v1559 = vsel %vm219, %v1403, 0
        %v1562 = vsel %vm219, %v1404, 0
        %v1565 = vsel %vm219, %v1405, 0
        %v1568 = vsel %vm219, %v1406, 0
        %v1571 = vsel %vm219, %v1407, 0
        %v1574 = vsel %vm219, %v1408, 0
        %v1577 = vsel %vm219, %v1409, 0
        %v1580 = vsel %vm219, %v1410, 0
        %v1583 = vsel %vm219, %v1411, 0
        %v1586 = vsel %vm219, %v1412, 0
        %v1589 = vsel %vm219, %v1413, 0
        %v1592 = vsel %vm219, %v1414, 0
        %v1595 = vsel %vm219, %v1415, 0
        %1597 = vmatpush.msra.mxu0 0.0
        %1598 = vmatpush.msra.mxu0 0.0
        %1599 = vmatpush.msra.mxu0 0.0
        %1600 = vmatpush.msra.mxu0 0.0
        %1601 = vmatpush.msra.mxu0 0.0
        %1602 = vmatpush.msra.mxu0 0.0
        %1603 = vmatpush.msra.mxu0 0.0
        %1604 = vmatpush.msra.mxu0 0.0
        %1605 = vmatpush.msra.mxu0 0.0
        %1606 = vmatpush.msra.mxu0 0.0
        %1607 = vmatpush.msra.mxu0 0.0
        %1608 = vmatpush.msra.mxu0 0.0
        %1609 = vmatpush.msra.mxu0 0.0
        %1610 = vmatpush.msra.mxu0 0.0
        %1611 = vmatpush.msra.mxu0 0.0
        %1612 = vmatpush.msra.mxu0 %v1417
        %1613 = vmatmul.f32.gmra.mxu0 %v1550
        %v1614 = vpop.f32.mrf.mxu0
        %v1615 = vadd.f32 %v1502, %v1614
        %1616 = vmatmul.f32.gmra.mxu0 %v1553
        %v1617 = vpop.f32.mrf.mxu0
        %v1618 = vadd.f32 %v1505, %v1617
        %1619 = vmatmul.f32.gmra.mxu0 %v1556
        %v1620 = vpop.f32.mrf.mxu0
        %v1621 = vadd.f32 %v1508, %v1620
        %1622 = vmatmul.f32.gmra.mxu0 %v1559
        %v1623 = vpop.f32.mrf.mxu0
        %v1624 = vadd.f32 %v1511, %v1623
        %1625 = vmatmul.f32.gmra.mxu0 %v1562
        %v1626 = vpop.f32.mrf.mxu0
        %v1627 = vadd.f32 %v1514, %v1626
        %1628 = vmatmul.f32.gmra.mxu0 %v1565
        %v1629 = vpop.f32.mrf.mxu0
        %v1630 = vadd.f32 %v1517, %v1629
        %1631 = vmatmul.f32.gmra.mxu0 %v1568
        %v1632 = vpop.f32.mrf.mxu0
        %v1633 = vadd.f32 %v1520, %v1632
        %1634 = vmatmul.f32.gmra.mxu0 %v1571
        %v1635 = vpop.f32.mrf.mxu0
        %v1636 = vadd.f32 %v1523, %v1635
        %1637 = vmatmul.f32.gmra.mxu0 %v1574
        %v1638 = vpop.f32.mrf.mxu0
        %v1639 = vadd.f32 %v1526, %v1638
        %1640 = vmatmul.f32.gmra.mxu0 %v1577
        %v1641 = vpop.f32.mrf.mxu0
        %v1642 = vadd.f32 %v1529, %v1641
        %1643 = vmatmul.f32.gmra.mxu0 %v1580
        %v1644 = vpop.f32.mrf.mxu0
        %v1645 = vadd.f32 %v1532, %v1644
        %1646 = vmatmul.f32.gmra.mxu0 %v1583
        %v1647 = vpop.f32.mrf.mxu0
        %v1648 = vadd.f32 %v1535, %v1647
        %1649 = vmatmul.f32.gmra.mxu0 %v1586
        %v1650 = vpop.f32.mrf.mxu0
        %v1651 = vadd.f32 %v1538, %v1650
        %1652 = vmatmul.f32.gmra.mxu0 %v1589
        %v1653 = vpop.f32.mrf.mxu0
        %v1654 = vadd.f32 %v1541, %v1653
        %1655 = vmatmul.f32.gmra.mxu0 %v1592
        %v1656 = vpop.f32.mrf.mxu0
        %v1657 = vadd.f32 %v1544, %v1656
        %1658 = vmatmul.f32.gmra.mxu0 %v1595
        %v1659 = vpop.f32.mrf.mxu0
        %v1660 = vadd.f32 %v1547, %v1659
        %1661 = vdwg.mxu0
        %s1662 = sadd.s32 %s180, 2
        %s1663 = smul.u32 %s1662, 24
        %s1664 = scalar_lea.vmem %s178, %s1663
        %v1665 = vld [vmem:[%s1664] sm:$0xff]
        %v1666 = vld [vmem:[%s1664 + $0x8] sm:$0xff]
        %v1667 = vld [vmem:[%s1664 + $0x18] sm:$0xff]
        %v1668 = vld [vmem:[%s1664 + $0x20] sm:$0xff]
        %v1669 = vld [vmem:[%s1664 + $0x30] sm:$0xff]
        %v1670 = vld [vmem:[%s1664 + $0x38] sm:$0xff]
        %v1671 = vld [vmem:[%s1664 + $0x48] sm:$0xff]
        %v1672 = vld [vmem:[%s1664 + $0x50] sm:$0xff]
        %v1673 = vld [vmem:[%s1664 + $0x60] sm:$0xff]
        %v1674 = vld [vmem:[%s1664 + $0x68] sm:$0xff]
        %v1675 = vld [vmem:[%s1664 + $0x78] sm:$0xff]
        %v1676 = vld [vmem:[%s1664 + $0x80] sm:$0xff]
        %v1677 = vld [vmem:[%s1664 + $0x90] sm:$0xff]
        %v1678 = vld [vmem:[%s1664 + $0x98] sm:$0xff]
        %v1679 = vld [vmem:[%s1664 + $0xa8] sm:$0xff]
        %v1680 = vld [vmem:[%s1664 + $0xb0] sm:$0xff]
        %s1681 = scalar_lea.vmem %s1, 80
        %v1682 = vld [vmem:[%s1681] sm:$0xff]
        %v1684 = vsel %vm219, %v1665, 0
        %v1687 = vsel %vm219, %v1666, 0
        %v1690 = vsel %vm219, %v1667, 0
        %v1693 = vsel %vm219, %v1668, 0
        %v1696 = vsel %vm219, %v1669, 0
        %v1699 = vsel %vm219, %v1670, 0
        %v1702 = vsel %vm219, %v1671, 0
        %v1705 = vsel %vm219, %v1672, 0
        %v1708 = vsel %vm219, %v1673, 0
        %v1711 = vsel %vm219, %v1674, 0
        %v1714 = vsel %vm219, %v1675, 0
        %v1717 = vsel %vm219, %v1676, 0
        %v1720 = vsel %vm219, %v1677, 0
        %v1723 = vsel %vm219, %v1678, 0
        %v1726 = vsel %vm219, %v1679, 0
        %v1729 = vsel %vm219, %v1680, 0
        %1731 = vmatpush.msra.mxu0 0.0
        %1732 = vmatpush.msra.mxu0 0.0
        %1733 = vmatpush.msra.mxu0 0.0
        %1734 = vmatpush.msra.mxu0 0.0
        %1735 = vmatpush.msra.mxu0 0.0
        %1736 = vmatpush.msra.mxu0 0.0
        %1737 = vmatpush.msra.mxu0 0.0
        %1738 = vmatpush.msra.mxu0 0.0
        %1739 = vmatpush.msra.mxu0 0.0
        %1740 = vmatpush.msra.mxu0 0.0
        %1741 = vmatpush.msra.mxu0 0.0
        %1742 = vmatpush.msra.mxu0 0.0
        %1743 = vmatpush.msra.mxu0 0.0
        %1744 = vmatpush.msra.mxu0 0.0
        %1745 = vmatpush.msra.mxu0 0.0
        %1746 = vmatpush.msra.mxu0 %v1682
        %1747 = vmatmul.f32.gmra.mxu0 %v1684
        %v1748 = vpop.f32.mrf.mxu0
        %v1749 = vadd.f32 0.0, %v1748
        %1750 = vmatmul.f32.gmra.mxu0 %v1687
        %v1751 = vpop.f32.mrf.mxu0
        %v1752 = vadd.f32 0.0, %v1751
        %1753 = vmatmul.f32.gmra.mxu0 %v1690
        %v1754 = vpop.f32.mrf.mxu0
        %v1755 = vadd.f32 0.0, %v1754
        %1756 = vmatmul.f32.gmra.mxu0 %v1693
        %v1757 = vpop.f32.mrf.mxu0
        %v1758 = vadd.f32 0.0, %v1757
        %1759 = vmatmul.f32.gmra.mxu0 %v1696
        %v1760 = vpop.f32.mrf.mxu0
        %v1761 = vadd.f32 0.0, %v1760
        %1762 = vmatmul.f32.gmra.mxu0 %v1699
        %v1763 = vpop.f32.mrf.mxu0
        %v1764 = vadd.f32 0.0, %v1763
        %1765 = vmatmul.f32.gmra.mxu0 %v1702
        %v1766 = vpop.f32.mrf.mxu0
        %v1767 = vadd.f32 0.0, %v1766
        %1768 = vmatmul.f32.gmra.mxu0 %v1705
        %v1769 = vpop.f32.mrf.mxu0
        %v1770 = vadd.f32 0.0, %v1769
        %1771 = vmatmul.f32.gmra.mxu0 %v1708
        %v1772 = vpop.f32.mrf.mxu0
        %v1773 = vadd.f32 0.0, %v1772
        %1774 = vmatmul.f32.gmra.mxu0 %v1711
        %v1775 = vpop.f32.mrf.mxu0
        %v1776 = vadd.f32 0.0, %v1775
        %1777 = vmatmul.f32.gmra.mxu0 %v1714
        %v1778 = vpop.f32.mrf.mxu0
        %v1779 = vadd.f32 0.0, %v1778
        %1780 = vmatmul.f32.gmra.mxu0 %v1717
        %v1781 = vpop.f32.mrf.mxu0
        %v1782 = vadd.f32 0.0, %v1781
        %1783 = vmatmul.f32.gmra.mxu0 %v1720
        %v1784 = vpop.f32.mrf.mxu0
        %v1785 = vadd.f32 0.0, %v1784
        %1786 = vmatmul.f32.gmra.mxu0 %v1723
        %v1787 = vpop.f32.mrf.mxu0
        %v1788 = vadd.f32 0.0, %v1787
        %1789 = vmatmul.f32.gmra.mxu0 %v1726
        %v1790 = vpop.f32.mrf.mxu0
        %v1791 = vadd.f32 0.0, %v1790
        %1792 = vmatmul.f32.gmra.mxu0 %v1729
        %v1793 = vpop.f32.mrf.mxu0
        %v1794 = vadd.f32 0.0, %v1793
        %1795 = vdwg.mxu0
        %v1796 = vadd.f32 %v1615, %v1749
        %v1797 = vadd.f32 %v1618, %v1752
        %v1798 = vadd.f32 %v1621, %v1755
        %v1799 = vadd.f32 %v1624, %v1758
        %v1800 = vadd.f32 %v1627, %v1761
        %v1801 = vadd.f32 %v1630, %v1764
        %v1802 = vadd.f32 %v1633, %v1767
        %v1803 = vadd.f32 %v1636, %v1770
        %v1804 = vadd.f32 %v1639, %v1773
        %v1805 = vadd.f32 %v1642, %v1776
        %v1806 = vadd.f32 %v1645, %v1779
        %v1807 = vadd.f32 %v1648, %v1782
        %v1808 = vadd.f32 %v1651, %v1785
        %v1809 = vadd.f32 %v1654, %v1788
        %v1810 = vadd.f32 %v1657, %v1791
        %v1811 = vadd.f32 %v1660, %v1794
        %v1812 = vld [vmem:[%s1664 + $0x1] sm:$0xff]
        %v1813 = vld [vmem:[%s1664 + $0x9] sm:$0xff]
        %v1814 = vld [vmem:[%s1664 + $0x19] sm:$0xff]
        %v1815 = vld [vmem:[%s1664 + $0x21] sm:$0xff]
        %v1816 = vld [vmem:[%s1664 + $0x31] sm:$0xff]
        %v1817 = vld [vmem:[%s1664 + $0x39] sm:$0xff]
        %v1818 = vld [vmem:[%s1664 + $0x49] sm:$0xff]
        %v1819 = vld [vmem:[%s1664 + $0x51] sm:$0xff]
        %v1820 = vld [vmem:[%s1664 + $0x61] sm:$0xff]
        %v1821 = vld [vmem:[%s1664 + $0x69] sm:$0xff]
        %v1822 = vld [vmem:[%s1664 + $0x79] sm:$0xff]
        %v1823 = vld [vmem:[%s1664 + $0x81] sm:$0xff]
        %v1824 = vld [vmem:[%s1664 + $0x91] sm:$0xff]
        %v1825 = vld [vmem:[%s1664 + $0x99] sm:$0xff]
        %v1826 = vld [vmem:[%s1664 + $0xa9] sm:$0xff]
        %v1827 = vld [vmem:[%s1664 + $0xb1] sm:$0xff]
        %s1828 = scalar_lea.vmem %s1, 88
        %v1829 = vld [vmem:[%s1828] sm:$0xff]
        %v1831 = vsel %vm219, %v1812, 0
        %v1834 = vsel %vm219, %v1813, 0
        %v1837 = vsel %vm219, %v1814, 0
        %v1840 = vsel %vm219, %v1815, 0
        %v1843 = vsel %vm219, %v1816, 0
        %v1846 = vsel %vm219, %v1817, 0
        %v1849 = vsel %vm219, %v1818, 0
        %v1852 = vsel %vm219, %v1819, 0
        %v1855 = vsel %vm219, %v1820, 0
        %v1858 = vsel %vm219, %v1821, 0
        %v1861 = vsel %vm219, %v1822, 0
        %v1864 = vsel %vm219, %v1823, 0
        %v1867 = vsel %vm219, %v1824, 0
        %v1870 = vsel %vm219, %v1825, 0
        %v1873 = vsel %vm219, %v1826, 0
        %v1876 = vsel %vm219, %v1827, 0
        %1878 = vmatpush.msra.mxu0 0.0
        %1879 = vmatpush.msra.mxu0 0.0
        %1880 = vmatpush.msra.mxu0 0.0
        %1881 = vmatpush.msra.mxu0 0.0
        %1882 = vmatpush.msra.mxu0 0.0
        %1883 = vmatpush.msra.mxu0 0.0
        %1884 = vmatpush.msra.mxu0 0.0
        %1885 = vmatpush.msra.mxu0 0.0
        %1886 = vmatpush.msra.mxu0 0.0
        %1887 = vmatpush.msra.mxu0 0.0
        %1888 = vmatpush.msra.mxu0 0.0
        %1889 = vmatpush.msra.mxu0 0.0
        %1890 = vmatpush.msra.mxu0 0.0
        %1891 = vmatpush.msra.mxu0 0.0
        %1892 = vmatpush.msra.mxu0 0.0
        %1893 = vmatpush.msra.mxu0 %v1829
        %1894 = vmatmul.f32.gmra.mxu0 %v1831
        %v1895 = vpop.f32.mrf.mxu0
        %v1896 = vadd.f32 0.0, %v1895
        %1897 = vmatmul.f32.gmra.mxu0 %v1834
        %v1898 = vpop.f32.mrf.mxu0
        %v1899 = vadd.f32 0.0, %v1898
        %1900 = vmatmul.f32.gmra.mxu0 %v1837
        %v1901 = vpop.f32.mrf.mxu0
        %v1902 = vadd.f32 0.0, %v1901
        %1903 = vmatmul.f32.gmra.mxu0 %v1840
        %v1904 = vpop.f32.mrf.mxu0
        %v1905 = vadd.f32 0.0, %v1904
        %1906 = vmatmul.f32.gmra.mxu0 %v1843
        %v1907 = vpop.f32.mrf.mxu0
        %v1908 = vadd.f32 0.0, %v1907
        %1909 = vmatmul.f32.gmra.mxu0 %v1846
        %v1910 = vpop.f32.mrf.mxu0
        %v1911 = vadd.f32 0.0, %v1910
        %1912 = vmatmul.f32.gmra.mxu0 %v1849
        %v1913 = vpop.f32.mrf.mxu0
        %v1914 = vadd.f32 0.0, %v1913
        %1915 = vmatmul.f32.gmra.mxu0 %v1852
        %v1916 = vpop.f32.mrf.mxu0
        %v1917 = vadd.f32 0.0, %v1916
        %1918 = vmatmul.f32.gmra.mxu0 %v1855
        %v1919 = vpop.f32.mrf.mxu0
        %v1920 = vadd.f32 0.0, %v1919
        %1921 = vmatmul.f32.gmra.mxu0 %v1858
        %v1922 = vpop.f32.mrf.mxu0
        %v1923 = vadd.f32 0.0, %v1922
        %1924 = vmatmul.f32.gmra.mxu0 %v1861
        %v1925 = vpop.f32.mrf.mxu0
        %v1926 = vadd.f32 0.0, %v1925
        %1927 = vmatmul.f32.gmra.mxu0 %v1864
        %v1928 = vpop.f32.mrf.mxu0
        %v1929 = vadd.f32 0.0, %v1928
        %1930 = vmatmul.f32.gmra.mxu0 %v1867
        %v1931 = vpop.f32.mrf.mxu0
        %v1932 = vadd.f32 0.0, %v1931
        %1933 = vmatmul.f32.gmra.mxu0 %v1870
        %v1934 = vpop.f32.mrf.mxu0
        %v1935 = vadd.f32 0.0, %v1934
        %1936 = vmatmul.f32.gmra.mxu0 %v1873
        %v1937 = vpop.f32.mrf.mxu0
        %v1938 = vadd.f32 0.0, %v1937
        %1939 = vmatmul.f32.gmra.mxu0 %v1876
        %v1940 = vpop.f32.mrf.mxu0
        %v1941 = vadd.f32 0.0, %v1940
        %1942 = vdwg.mxu0
        %v1943 = vadd.f32 %v1796, %v1896
        %v1944 = vadd.f32 %v1797, %v1899
        %v1945 = vadd.f32 %v1798, %v1902
        %v1946 = vadd.f32 %v1799, %v1905
        %v1947 = vadd.f32 %v1800, %v1908
        %v1948 = vadd.f32 %v1801, %v1911
        %v1949 = vadd.f32 %v1802, %v1914
        %v1950 = vadd.f32 %v1803, %v1917
        %v1951 = vadd.f32 %v1804, %v1920
        %v1952 = vadd.f32 %v1805, %v1923
        %v1953 = vadd.f32 %v1806, %v1926
        %v1954 = vadd.f32 %v1807, %v1929
        %v1955 = vadd.f32 %v1808, %v1932
        %v1956 = vadd.f32 %v1809, %v1935
        %v1957 = vadd.f32 %v1810, %v1938
        %v1958 = vadd.f32 %v1811, %v1941
        %v1959 = vadd.f32 %v1943, %v744
        %v1960 = vadd.f32 %v1944, %v744
        %v1961 = vadd.f32 %v1945, %v744
        %v1962 = vadd.f32 %v1946, %v744
        %v1963 = vadd.f32 %v1947, %v744
        %v1964 = vadd.f32 %v1948, %v744
        %v1965 = vadd.f32 %v1949, %v744
        %v1966 = vadd.f32 %v1950, %v744
        %v1967 = vadd.f32 %v1951, %v744
        %v1968 = vadd.f32 %v1952, %v744
        %v1969 = vadd.f32 %v1953, %v744
        %v1970 = vadd.f32 %v1954, %v744
        %v1971 = vadd.f32 %v1955, %v744
        %v1972 = vadd.f32 %v1956, %v744
        %v1973 = vadd.f32 %v1957, %v744
        %v1974 = vadd.f32 %v1958, %v744
        %v1975 = vmax.f32 %v1959, 0.0
        %v1976 = vmax.f32 %v1960, 0.0
        %v1977 = vmax.f32 %v1961, 0.0
        %v1978 = vmax.f32 %v1962, 0.0
        %v1979 = vmax.f32 %v1963, 0.0
        %v1980 = vmax.f32 %v1964, 0.0
        %v1981 = vmax.f32 %v1965, 0.0
        %v1982 = vmax.f32 %v1966, 0.0
        %v1983 = vmax.f32 %v1967, 0.0
        %v1984 = vmax.f32 %v1968, 0.0
        %v1985 = vmax.f32 %v1969, 0.0
        %v1986 = vmax.f32 %v1970, 0.0
        %v1987 = vmax.f32 %v1971, 0.0
        %v1988 = vmax.f32 %v1972, 0.0
        %v1989 = vmax.f32 %v1973, 0.0
        %v1990 = vmax.f32 %v1974, 0.0
        %s1991 = scalar_lea.vmem %s173, 256 [#allocation2]
        %1992 = vst.msk [vmem:[%s1991] sm:$0xff] %vm778, %v1975
        %1993 = vst.msk [vmem:[%s1991 + $0x8] sm:$0xff] %vm778, %v1976
        %1994 = vst.msk [vmem:[%s1991 + $0x10] sm:$0xff] %vm778, %v1977
        %1995 = vst.msk [vmem:[%s1991 + $0x18] sm:$0xff] %vm778, %v1978
        %1996 = vst.msk [vmem:[%s1991 + $0x20] sm:$0xff] %vm778, %v1979
        %1997 = vst.msk [vmem:[%s1991 + $0x28] sm:$0xff] %vm778, %v1980
        %1998 = vst.msk [vmem:[%s1991 + $0x30] sm:$0xff] %vm778, %v1981
        %1999 = vst.msk [vmem:[%s1991 + $0x38] sm:$0xff] %vm778, %v1982
        %2000 = vst.msk [vmem:[%s1991 + $0x40] sm:$0xff] %vm778, %v1983
        %2001 = vst.msk [vmem:[%s1991 + $0x48] sm:$0xff] %vm778, %v1984
        %2002 = vst.msk [vmem:[%s1991 + $0x50] sm:$0xff] %vm778, %v1985
        %2003 = vst.msk [vmem:[%s1991 + $0x58] sm:$0xff] %vm778, %v1986
        %2004 = vst.msk [vmem:[%s1991 + $0x60] sm:$0xff] %vm778, %v1987
        %2005 = vst.msk [vmem:[%s1991 + $0x68] sm:$0xff] %vm778, %v1988
        %2006 = vst.msk [vmem:[%s1991 + $0x70] sm:$0xff] %vm778, %v1989
        %2007 = vst.msk [vmem:[%s1991 + $0x78] sm:$0xff] %vm778, %v1990
        %v2008 = vld [vmem:[%s448 + $0x1] sm:$0xff]
        %v2009 = vld [vmem:[%s448 + $0x9] sm:$0xff]
        %v2010 = vld [vmem:[%s448 + $0x19] sm:$0xff]
        %v2011 = vld [vmem:[%s448 + $0x21] sm:$0xff]
        %v2012 = vld [vmem:[%s448 + $0x31] sm:$0xff]
        %v2013 = vld [vmem:[%s448 + $0x39] sm:$0xff]
        %v2014 = vld [vmem:[%s448 + $0x49] sm:$0xff]
        %v2015 = vld [vmem:[%s448 + $0x51] sm:$0xff]
        %v2016 = vld [vmem:[%s448 + $0x61] sm:$0xff]
        %v2017 = vld [vmem:[%s448 + $0x69] sm:$0xff]
        %v2018 = vld [vmem:[%s448 + $0x79] sm:$0xff]
        %v2019 = vld [vmem:[%s448 + $0x81] sm:$0xff]
        %v2020 = vld [vmem:[%s448 + $0x91] sm:$0xff]
        %v2021 = vld [vmem:[%s448 + $0x99] sm:$0xff]
        %v2022 = vld [vmem:[%s448 + $0xa9] sm:$0xff]
        %v2023 = vld [vmem:[%s448 + $0xb1] sm:$0xff]
        %s2024 = scalar_lea.vmem %s1, 96
        %v2025 = vld [vmem:[%s2024] sm:$0xff]
        %v2026 = vld [vmem:[%s448 + $0x2] sm:$0xff]
        %v2027 = vld [vmem:[%s448 + $0xa] sm:$0xff]
        %v2028 = vld [vmem:[%s448 + $0x1a] sm:$0xff]
        %v2029 = vld [vmem:[%s448 + $0x22] sm:$0xff]
        %v2030 = vld [vmem:[%s448 + $0x32] sm:$0xff]
        %v2031 = vld [vmem:[%s448 + $0x3a] sm:$0xff]
        %v2032 = vld [vmem:[%s448 + $0x4a] sm:$0xff]
        %v2033 = vld [vmem:[%s448 + $0x52] sm:$0xff]
        %v2034 = vld [vmem:[%s448 + $0x62] sm:$0xff]
        %v2035 = vld [vmem:[%s448 + $0x6a] sm:$0xff]
        %v2036 = vld [vmem:[%s448 + $0x7a] sm:$0xff]
        %v2037 = vld [vmem:[%s448 + $0x82] sm:$0xff]
        %v2038 = vld [vmem:[%s448 + $0x92] sm:$0xff]
        %v2039 = vld [vmem:[%s448 + $0x9a] sm:$0xff]
        %v2040 = vld [vmem:[%s448 + $0xaa] sm:$0xff]
        %v2041 = vld [vmem:[%s448 + $0xb2] sm:$0xff]
        %s2042 = scalar_lea.vmem %s1, 104
        %v2043 = vld [vmem:[%s2042] sm:$0xff]
        %v2045 = vsel %vm219, %v2026, 0
        %v2048 = vsel %vm219, %v2027, 0
        %v2051 = vsel %vm219, %v2028, 0
        %v2054 = vsel %vm219, %v2029, 0
        %v2057 = vsel %vm219, %v2030, 0
        %v2060 = vsel %vm219, %v2031, 0
        %v2063 = vsel %vm219, %v2032, 0
        %v2066 = vsel %vm219, %v2033, 0
        %v2069 = vsel %vm219, %v2034, 0
        %v2072 = vsel %vm219, %v2035, 0
        %v2075 = vsel %vm219, %v2036, 0
        %v2078 = vsel %vm219, %v2037, 0
        %v2081 = vsel %vm219, %v2038, 0
        %v2084 = vsel %vm219, %v2039, 0
        %v2087 = vsel %vm219, %v2040, 0
        %v2090 = vsel %vm219, %v2041, 0
        %2092 = vmatpush.msra.mxu0 0.0
        %2093 = vmatpush.msra.mxu0 0.0
        %2094 = vmatpush.msra.mxu0 0.0
        %2095 = vmatpush.msra.mxu0 0.0
        %2096 = vmatpush.msra.mxu0 0.0
        %2097 = vmatpush.msra.mxu0 0.0
        %2098 = vmatpush.msra.mxu0 0.0
        %2099 = vmatpush.msra.mxu0 0.0
        %2100 = vmatpush.msra.mxu0 0.0
        %2101 = vmatpush.msra.mxu0 0.0
        %2102 = vmatpush.msra.mxu0 0.0
        %2103 = vmatpush.msra.mxu0 0.0
        %2104 = vmatpush.msra.mxu0 0.0
        %2105 = vmatpush.msra.mxu0 0.0
        %2106 = vmatpush.msra.mxu0 0.0
        %2107 = vmatpush.msra.mxu0 %v2043
        %2108 = vmatmul.f32.gmra.mxu0 %v2045
        %v2109 = vpop.f32.mrf.mxu0
        %v2110 = vadd.f32 0.0, %v2109
        %2111 = vmatmul.f32.gmra.mxu0 %v2048
        %v2112 = vpop.f32.mrf.mxu0
        %v2113 = vadd.f32 0.0, %v2112
        %2114 = vmatmul.f32.gmra.mxu0 %v2051
        %v2115 = vpop.f32.mrf.mxu0
        %v2116 = vadd.f32 0.0, %v2115
        %2117 = vmatmul.f32.gmra.mxu0 %v2054
        %v2118 = vpop.f32.mrf.mxu0
        %v2119 = vadd.f32 0.0, %v2118
        %2120 = vmatmul.f32.gmra.mxu0 %v2057
        %v2121 = vpop.f32.mrf.mxu0
        %v2122 = vadd.f32 0.0, %v2121
        %2123 = vmatmul.f32.gmra.mxu0 %v2060
        %v2124 = vpop.f32.mrf.mxu0
        %v2125 = vadd.f32 0.0, %v2124
        %2126 = vmatmul.f32.gmra.mxu0 %v2063
        %v2127 = vpop.f32.mrf.mxu0
        %v2128 = vadd.f32 0.0, %v2127
        %2129 = vmatmul.f32.gmra.mxu0 %v2066
        %v2130 = vpop.f32.mrf.mxu0
        %v2131 = vadd.f32 0.0, %v2130
        %2132 = vmatmul.f32.gmra.mxu0 %v2069
        %v2133 = vpop.f32.mrf.mxu0
        %v2134 = vadd.f32 0.0, %v2133
        %2135 = vmatmul.f32.gmra.mxu0 %v2072
        %v2136 = vpop.f32.mrf.mxu0
        %v2137 = vadd.f32 0.0, %v2136
        %2138 = vmatmul.f32.gmra.mxu0 %v2075
        %v2139 = vpop.f32.mrf.mxu0
        %v2140 = vadd.f32 0.0, %v2139
        %2141 = vmatmul.f32.gmra.mxu0 %v2078
        %v2142 = vpop.f32.mrf.mxu0
        %v2143 = vadd.f32 0.0, %v2142
        %2144 = vmatmul.f32.gmra.mxu0 %v2081
        %v2145 = vpop.f32.mrf.mxu0
        %v2146 = vadd.f32 0.0, %v2145
        %2147 = vmatmul.f32.gmra.mxu0 %v2084
        %v2148 = vpop.f32.mrf.mxu0
        %v2149 = vadd.f32 0.0, %v2148
        %2150 = vmatmul.f32.gmra.mxu0 %v2087
        %v2151 = vpop.f32.mrf.mxu0
        %v2152 = vadd.f32 0.0, %v2151
        %2153 = vmatmul.f32.gmra.mxu0 %v2090
        %v2154 = vpop.f32.mrf.mxu0
        %v2155 = vadd.f32 0.0, %v2154
        %2156 = vdwg.mxu0
        %v2158 = vsel %vm219, %v2008, 0
        %v2161 = vsel %vm219, %v2009, 0
        %v2164 = vsel %vm219, %v2010, 0
        %v2167 = vsel %vm219, %v2011, 0
        %v2170 = vsel %vm219, %v2012, 0
        %v2173 = vsel %vm219, %v2013, 0
        %v2176 = vsel %vm219, %v2014, 0
        %v2179 = vsel %vm219, %v2015, 0
        %v2182 = vsel %vm219, %v2016, 0
        %v2185 = vsel %vm219, %v2017, 0
        %v2188 = vsel %vm219, %v2018, 0
        %v2191 = vsel %vm219, %v2019, 0
        %v2194 = vsel %vm219, %v2020, 0
        %v2197 = vsel %vm219, %v2021, 0
        %v2200 = vsel %vm219, %v2022, 0
        %v2203 = vsel %vm219, %v2023, 0
        %2205 = vmatpush.msra.mxu0 0.0
        %2206 = vmatpush.msra.mxu0 0.0
        %2207 = vmatpush.msra.mxu0 0.0
        %2208 = vmatpush.msra.mxu0 0.0
        %2209 = vmatpush.msra.mxu0 0.0
        %2210 = vmatpush.msra.mxu0 0.0
        %2211 = vmatpush.msra.mxu0 0.0
        %2212 = vmatpush.msra.mxu0 0.0
        %2213 = vmatpush.msra.mxu0 0.0
        %2214 = vmatpush.msra.mxu0 0.0
        %2215 = vmatpush.msra.mxu0 0.0
        %2216 = vmatpush.msra.mxu0 0.0
        %2217 = vmatpush.msra.mxu0 0.0
        %2218 = vmatpush.msra.mxu0 0.0
        %2219 = vmatpush.msra.mxu0 0.0
        %2220 = vmatpush.msra.mxu0 %v2025
        %2221 = vmatmul.f32.gmra.mxu0 %v2158
        %v2222 = vpop.f32.mrf.mxu0
        %v2223 = vadd.f32 %v2110, %v2222
        %2224 = vmatmul.f32.gmra.mxu0 %v2161
        %v2225 = vpop.f32.mrf.mxu0
        %v2226 = vadd.f32 %v2113, %v2225
        %2227 = vmatmul.f32.gmra.mxu0 %v2164
        %v2228 = vpop.f32.mrf.mxu0
        %v2229 = vadd.f32 %v2116, %v2228
        %2230 = vmatmul.f32.gmra.mxu0 %v2167
        %v2231 = vpop.f32.mrf.mxu0
        %v2232 = vadd.f32 %v2119, %v2231
        %2233 = vmatmul.f32.gmra.mxu0 %v2170
        %v2234 = vpop.f32.mrf.mxu0
        %v2235 = vadd.f32 %v2122, %v2234
        %2236 = vmatmul.f32.gmra.mxu0 %v2173
        %v2237 = vpop.f32.mrf.mxu0
        %v2238 = vadd.f32 %v2125, %v2237
        %2239 = vmatmul.f32.gmra.mxu0 %v2176
        %v2240 = vpop.f32.mrf.mxu0
        %v2241 = vadd.f32 %v2128, %v2240
        %2242 = vmatmul.f32.gmra.mxu0 %v2179
        %v2243 = vpop.f32.mrf.mxu0
        %v2244 = vadd.f32 %v2131, %v2243
        %2245 = vmatmul.f32.gmra.mxu0 %v2182
        %v2246 = vpop.f32.mrf.mxu0
        %v2247 = vadd.f32 %v2134, %v2246
        %2248 = vmatmul.f32.gmra.mxu0 %v2185
        %v2249 = vpop.f32.mrf.mxu0
        %v2250 = vadd.f32 %v2137, %v2249
        %2251 = vmatmul.f32.gmra.mxu0 %v2188
        %v2252 = vpop.f32.mrf.mxu0
        %v2253 = vadd.f32 %v2140, %v2252
        %2254 = vmatmul.f32.gmra.mxu0 %v2191
        %v2255 = vpop.f32.mrf.mxu0
        %v2256 = vadd.f32 %v2143, %v2255
        %2257 = vmatmul.f32.gmra.mxu0 %v2194
        %v2258 = vpop.f32.mrf.mxu0
        %v2259 = vadd.f32 %v2146, %v2258
        %2260 = vmatmul.f32.gmra.mxu0 %v2197
        %v2261 = vpop.f32.mrf.mxu0
        %v2262 = vadd.f32 %v2149, %v2261
        %2263 = vmatmul.f32.gmra.mxu0 %v2200
        %v2264 = vpop.f32.mrf.mxu0
        %v2265 = vadd.f32 %v2152, %v2264
        %2266 = vmatmul.f32.gmra.mxu0 %v2203
        %v2267 = vpop.f32.mrf.mxu0
        %v2268 = vadd.f32 %v2155, %v2267
        %2269 = vdwg.mxu0
        %v2270 = vld [vmem:[%s1664 + $0x1] sm:$0xff]
        %v2271 = vld [vmem:[%s1664 + $0x9] sm:$0xff]
        %v2272 = vld [vmem:[%s1664 + $0x19] sm:$0xff]
        %v2273 = vld [vmem:[%s1664 + $0x21] sm:$0xff]
        %v2274 = vld [vmem:[%s1664 + $0x31] sm:$0xff]
        %v2275 = vld [vmem:[%s1664 + $0x39] sm:$0xff]
        %v2276 = vld [vmem:[%s1664 + $0x49] sm:$0xff]
        %v2277 = vld [vmem:[%s1664 + $0x51] sm:$0xff]
        %v2278 = vld [vmem:[%s1664 + $0x61] sm:$0xff]
        %v2279 = vld [vmem:[%s1664 + $0x69] sm:$0xff]
        %v2280 = vld [vmem:[%s1664 + $0x79] sm:$0xff]
        %v2281 = vld [vmem:[%s1664 + $0x81] sm:$0xff]
        %v2282 = vld [vmem:[%s1664 + $0x91] sm:$0xff]
        %v2283 = vld [vmem:[%s1664 + $0x99] sm:$0xff]
        %v2284 = vld [vmem:[%s1664 + $0xa9] sm:$0xff]
        %v2285 = vld [vmem:[%s1664 + $0xb1] sm:$0xff]
        %s2286 = scalar_lea.vmem %s1, 112
        %v2287 = vld [vmem:[%s2286] sm:$0xff]
        %v2289 = vsel %vm219, %v2270, 0
        %v2292 = vsel %vm219, %v2271, 0
        %v2295 = vsel %vm219, %v2272, 0
        %v2298 = vsel %vm219, %v2273, 0
        %v2301 = vsel %vm219, %v2274, 0
        %v2304 = vsel %vm219, %v2275, 0
        %v2307 = vsel %vm219, %v2276, 0
        %v2310 = vsel %vm219, %v2277, 0
        %v2313 = vsel %vm219, %v2278, 0
        %v2316 = vsel %vm219, %v2279, 0
        %v2319 = vsel %vm219, %v2280, 0
        %v2322 = vsel %vm219, %v2281, 0
        %v2325 = vsel %vm219, %v2282, 0
        %v2328 = vsel %vm219, %v2283, 0
        %v2331 = vsel %vm219, %v2284, 0
        %v2334 = vsel %vm219, %v2285, 0
        %2336 = vmatpush.msra.mxu0 0.0
        %2337 = vmatpush.msra.mxu0 0.0
        %2338 = vmatpush.msra.mxu0 0.0
        %2339 = vmatpush.msra.mxu0 0.0
        %2340 = vmatpush.msra.mxu0 0.0
        %2341 = vmatpush.msra.mxu0 0.0
        %2342 = vmatpush.msra.mxu0 0.0
        %2343 = vmatpush.msra.mxu0 0.0
        %2344 = vmatpush.msra.mxu0 0.0
        %2345 = vmatpush.msra.mxu0 0.0
        %2346 = vmatpush.msra.mxu0 0.0
        %2347 = vmatpush.msra.mxu0 0.0
        %2348 = vmatpush.msra.mxu0 0.0
        %2349 = vmatpush.msra.mxu0 0.0
        %2350 = vmatpush.msra.mxu0 0.0
        %2351 = vmatpush.msra.mxu0 %v2287
        %2352 = vmatmul.f32.gmra.mxu0 %v2289
        %v2353 = vpop.f32.mrf.mxu0
        %v2354 = vadd.f32 0.0, %v2353
        %2355 = vmatmul.f32.gmra.mxu0 %v2292
        %v2356 = vpop.f32.mrf.mxu0
        %v2357 = vadd.f32 0.0, %v2356
        %2358 = vmatmul.f32.gmra.mxu0 %v2295
        %v2359 = vpop.f32.mrf.mxu0
        %v2360 = vadd.f32 0.0, %v2359
        %2361 = vmatmul.f32.gmra.mxu0 %v2298
        %v2362 = vpop.f32.mrf.mxu0
        %v2363 = vadd.f32 0.0, %v2362
        %2364 = vmatmul.f32.gmra.mxu0 %v2301
        %v2365 = vpop.f32.mrf.mxu0
        %v2366 = vadd.f32 0.0, %v2365
        %2367 = vmatmul.f32.gmra.mxu0 %v2304
        %v2368 = vpop.f32.mrf.mxu0
        %v2369 = vadd.f32 0.0, %v2368
        %2370 = vmatmul.f32.gmra.mxu0 %v2307
        %v2371 = vpop.f32.mrf.mxu0
        %v2372 = vadd.f32 0.0, %v2371
        %2373 = vmatmul.f32.gmra.mxu0 %v2310
        %v2374 = vpop.f32.mrf.mxu0
        %v2375 = vadd.f32 0.0, %v2374
        %2376 = vmatmul.f32.gmra.mxu0 %v2313
        %v2377 = vpop.f32.mrf.mxu0
        %v2378 = vadd.f32 0.0, %v2377
        %2379 = vmatmul.f32.gmra.mxu0 %v2316
        %v2380 = vpop.f32.mrf.mxu0
        %v2381 = vadd.f32 0.0, %v2380
        %2382 = vmatmul.f32.gmra.mxu0 %v2319
        %v2383 = vpop.f32.mrf.mxu0
        %v2384 = vadd.f32 0.0, %v2383
        %2385 = vmatmul.f32.gmra.mxu0 %v2322
        %v2386 = vpop.f32.mrf.mxu0
        %v2387 = vadd.f32 0.0, %v2386
        %2388 = vmatmul.f32.gmra.mxu0 %v2325
        %v2389 = vpop.f32.mrf.mxu0
        %v2390 = vadd.f32 0.0, %v2389
        %2391 = vmatmul.f32.gmra.mxu0 %v2328
        %v2392 = vpop.f32.mrf.mxu0
        %v2393 = vadd.f32 0.0, %v2392
        %2394 = vmatmul.f32.gmra.mxu0 %v2331
        %v2395 = vpop.f32.mrf.mxu0
        %v2396 = vadd.f32 0.0, %v2395
        %2397 = vmatmul.f32.gmra.mxu0 %v2334
        %v2398 = vpop.f32.mrf.mxu0
        %v2399 = vadd.f32 0.0, %v2398
        %2400 = vdwg.mxu0
        %v2401 = vadd.f32 %v2223, %v2354
        %v2402 = vadd.f32 %v2226, %v2357
        %v2403 = vadd.f32 %v2229, %v2360
        %v2404 = vadd.f32 %v2232, %v2363
        %v2405 = vadd.f32 %v2235, %v2366
        %v2406 = vadd.f32 %v2238, %v2369
        %v2407 = vadd.f32 %v2241, %v2372
        %v2408 = vadd.f32 %v2244, %v2375
        %v2409 = vadd.f32 %v2247, %v2378
        %v2410 = vadd.f32 %v2250, %v2381
        %v2411 = vadd.f32 %v2253, %v2384
        %v2412 = vadd.f32 %v2256, %v2387
        %v2413 = vadd.f32 %v2259, %v2390
        %v2414 = vadd.f32 %v2262, %v2393
        %v2415 = vadd.f32 %v2265, %v2396
        %v2416 = vadd.f32 %v2268, %v2399
        %v2417 = vld [vmem:[%s1664 + $0x2] sm:$0xff]
        %v2418 = vld [vmem:[%s1664 + $0xa] sm:$0xff]
        %v2419 = vld [vmem:[%s1664 + $0x1a] sm:$0xff]
        %v2420 = vld [vmem:[%s1664 + $0x22] sm:$0xff]
        %v2421 = vld [vmem:[%s1664 + $0x32] sm:$0xff]
        %v2422 = vld [vmem:[%s1664 + $0x3a] sm:$0xff]
        %v2423 = vld [vmem:[%s1664 + $0x4a] sm:$0xff]
        %v2424 = vld [vmem:[%s1664 + $0x52] sm:$0xff]
        %v2425 = vld [vmem:[%s1664 + $0x62] sm:$0xff]
        %v2426 = vld [vmem:[%s1664 + $0x6a] sm:$0xff]
        %v2427 = vld [vmem:[%s1664 + $0x7a] sm:$0xff]
        %v2428 = vld [vmem:[%s1664 + $0x82] sm:$0xff]
        %v2429 = vld [vmem:[%s1664 + $0x92] sm:$0xff]
        %v2430 = vld [vmem:[%s1664 + $0x9a] sm:$0xff]
        %v2431 = vld [vmem:[%s1664 + $0xaa] sm:$0xff]
        %v2432 = vld [vmem:[%s1664 + $0xb2] sm:$0xff]
        %s2433 = scalar_lea.vmem %s1, 120
        %v2434 = vld [vmem:[%s2433] sm:$0xff]
        %v2436 = vsel %vm219, %v2417, 0
        %v2439 = vsel %vm219, %v2418, 0
        %v2442 = vsel %vm219, %v2419, 0
        %v2445 = vsel %vm219, %v2420, 0
        %v2448 = vsel %vm219, %v2421, 0
        %v2451 = vsel %vm219, %v2422, 0
        %v2454 = vsel %vm219, %v2423, 0
        %v2457 = vsel %vm219, %v2424, 0
        %v2460 = vsel %vm219, %v2425, 0
        %v2463 = vsel %vm219, %v2426, 0
        %v2466 = vsel %vm219, %v2427, 0
        %v2469 = vsel %vm219, %v2428, 0
        %v2472 = vsel %vm219, %v2429, 0
        %v2475 = vsel %vm219, %v2430, 0
        %v2478 = vsel %vm219, %v2431, 0
        %v2481 = vsel %vm219, %v2432, 0
        %2483 = vmatpush.msra.mxu0 0.0
        %2484 = vmatpush.msra.mxu0 0.0
        %2485 = vmatpush.msra.mxu0 0.0
        %2486 = vmatpush.msra.mxu0 0.0
        %2487 = vmatpush.msra.mxu0 0.0
        %2488 = vmatpush.msra.mxu0 0.0
        %2489 = vmatpush.msra.mxu0 0.0
        %2490 = vmatpush.msra.mxu0 0.0
        %2491 = vmatpush.msra.mxu0 0.0
        %2492 = vmatpush.msra.mxu0 0.0
        %2493 = vmatpush.msra.mxu0 0.0
        %2494 = vmatpush.msra.mxu0 0.0
        %2495 = vmatpush.msra.mxu0 0.0
        %2496 = vmatpush.msra.mxu0 0.0
        %2497 = vmatpush.msra.mxu0 0.0
        %2498 = vmatpush.msra.mxu0 %v2434
        %2499 = vmatmul.f32.gmra.mxu0 %v2436
        %v2500 = vpop.f32.mrf.mxu0
        %v2501 = vadd.f32 0.0, %v2500
        %2502 = vmatmul.f32.gmra.mxu0 %v2439
        %v2503 = vpop.f32.mrf.mxu0
        %v2504 = vadd.f32 0.0, %v2503
        %2505 = vmatmul.f32.gmra.mxu0 %v2442
        %v2506 = vpop.f32.mrf.mxu0
        %v2507 = vadd.f32 0.0, %v2506
        %2508 = vmatmul.f32.gmra.mxu0 %v2445
        %v2509 = vpop.f32.mrf.mxu0
        %v2510 = vadd.f32 0.0, %v2509
        %2511 = vmatmul.f32.gmra.mxu0 %v2448
        %v2512 = vpop.f32.mrf.mxu0
        %v2513 = vadd.f32 0.0, %v2512
        %2514 = vmatmul.f32.gmra.mxu0 %v2451
        %v2515 = vpop.f32.mrf.mxu0
        %v2516 = vadd.f32 0.0, %v2515
        %2517 = vmatmul.f32.gmra.mxu0 %v2454
        %v2518 = vpop.f32.mrf.mxu0
        %v2519 = vadd.f32 0.0, %v2518
        %2520 = vmatmul.f32.gmra.mxu0 %v2457
        %v2521 = vpop.f32.mrf.mxu0
        %v2522 = vadd.f32 0.0, %v2521
        %2523 = vmatmul.f32.gmra.mxu0 %v2460
        %v2524 = vpop.f32.mrf.mxu0
        %v2525 = vadd.f32 0.0, %v2524
        %2526 = vmatmul.f32.gmra.mxu0 %v2463
        %v2527 = vpop.f32.mrf.mxu0
        %v2528 = vadd.f32 0.0, %v2527
        %2529 = vmatmul.f32.gmra.mxu0 %v2466
        %v2530 = vpop.f32.mrf.mxu0
        %v2531 = vadd.f32 0.0, %v2530
        %2532 = vmatmul.f32.gmra.mxu0 %v2469
        %v2533 = vpop.f32.mrf.mxu0
        %v2534 = vadd.f32 0.0, %v2533
        %2535 = vmatmul.f32.gmra.mxu0 %v2472
        %v2536 = vpop.f32.mrf.mxu0
        %v2537 = vadd.f32 0.0, %v2536
        %2538 = vmatmul.f32.gmra.mxu0 %v2475
        %v2539 = vpop.f32.mrf.mxu0
        %v2540 = vadd.f32 0.0, %v2539
        %2541 = vmatmul.f32.gmra.mxu0 %v2478
        %v2542 = vpop.f32.mrf.mxu0
        %v2543 = vadd.f32 0.0, %v2542
        %2544 = vmatmul.f32.gmra.mxu0 %v2481
        %v2545 = vpop.f32.mrf.mxu0
        %v2546 = vadd.f32 0.0, %v2545
        %2547 = vdwg.mxu0
        %v2548 = vadd.f32 %v2401, %v2501
        %v2549 = vadd.f32 %v2402, %v2504
        %v2550 = vadd.f32 %v2403, %v2507
        %v2551 = vadd.f32 %v2404, %v2510
        %v2552 = vadd.f32 %v2405, %v2513
        %v2553 = vadd.f32 %v2406, %v2516
        %v2554 = vadd.f32 %v2407, %v2519
        %v2555 = vadd.f32 %v2408, %v2522
        %v2556 = vadd.f32 %v2409, %v2525
        %v2557 = vadd.f32 %v2410, %v2528
        %v2558 = vadd.f32 %v2411, %v2531
        %v2559 = vadd.f32 %v2412, %v2534
        %v2560 = vadd.f32 %v2413, %v2537
        %v2561 = vadd.f32 %v2414, %v2540
        %v2562 = vadd.f32 %v2415, %v2543
        %v2563 = vadd.f32 %v2416, %v2546
        %v2564 = vadd.f32 %v2548, %v744
        %v2565 = vadd.f32 %v2549, %v744
        %v2566 = vadd.f32 %v2550, %v744
        %v2567 = vadd.f32 %v2551, %v744
        %v2568 = vadd.f32 %v2552, %v744
        %v2569 = vadd.f32 %v2553, %v744
        %v2570 = vadd.f32 %v2554, %v744
        %v2571 = vadd.f32 %v2555, %v744
        %v2572 = vadd.f32 %v2556, %v744
        %v2573 = vadd.f32 %v2557, %v744
        %v2574 = vadd.f32 %v2558, %v744
        %v2575 = vadd.f32 %v2559, %v744
        %v2576 = vadd.f32 %v2560, %v744
        %v2577 = vadd.f32 %v2561, %v744
        %v2578 = vadd.f32 %v2562, %v744
        %v2579 = vadd.f32 %v2563, %v744
        %v2580 = vmax.f32 %v2564, 0.0
        %v2581 = vmax.f32 %v2565, 0.0
        %v2582 = vmax.f32 %v2566, 0.0
        %v2583 = vmax.f32 %v2567, 0.0
        %v2584 = vmax.f32 %v2568, 0.0
        %v2585 = vmax.f32 %v2569, 0.0
        %v2586 = vmax.f32 %v2570, 0.0
        %v2587 = vmax.f32 %v2571, 0.0
        %v2588 = vmax.f32 %v2572, 0.0
        %v2589 = vmax.f32 %v2573, 0.0
        %v2590 = vmax.f32 %v2574, 0.0
        %v2591 = vmax.f32 %v2575, 0.0
        %v2592 = vmax.f32 %v2576, 0.0
        %v2593 = vmax.f32 %v2577, 0.0
        %v2594 = vmax.f32 %v2578, 0.0
        %v2595 = vmax.f32 %v2579, 0.0
        %s2596 = scalar_lea.vmem %s173, 384 [#allocation2]
        %2597 = vst.msk [vmem:[%s2596] sm:$0xff] %vm778, %v2580
        %2598 = vst.msk [vmem:[%s2596 + $0x8] sm:$0xff] %vm778, %v2581
        %2599 = vst.msk [vmem:[%s2596 + $0x10] sm:$0xff] %vm778, %v2582
        %2600 = vst.msk [vmem:[%s2596 + $0x18] sm:$0xff] %vm778, %v2583
        %2601 = vst.msk [vmem:[%s2596 + $0x20] sm:$0xff] %vm778, %v2584
        %2602 = vst.msk [vmem:[%s2596 + $0x28] sm:$0xff] %vm778, %v2585
        %2603 = vst.msk [vmem:[%s2596 + $0x30] sm:$0xff] %vm778, %v2586
        %2604 = vst.msk [vmem:[%s2596 + $0x38] sm:$0xff] %vm778, %v2587
        %2605 = vst.msk [vmem:[%s2596 + $0x40] sm:$0xff] %vm778, %v2588
        %2606 = vst.msk [vmem:[%s2596 + $0x48] sm:$0xff] %vm778, %v2589
        %2607 = vst.msk [vmem:[%s2596 + $0x50] sm:$0xff] %vm778, %v2590
        %2608 = vst.msk [vmem:[%s2596 + $0x58] sm:$0xff] %vm778, %v2591
        %2609 = vst.msk [vmem:[%s2596 + $0x60] sm:$0xff] %vm778, %v2592
        %2610 = vst.msk [vmem:[%s2596 + $0x68] sm:$0xff] %vm778, %v2593
        %2611 = vst.msk [vmem:[%s2596 + $0x70] sm:$0xff] %vm778, %v2594
        %2612 = vst.msk [vmem:[%s2596 + $0x78] sm:$0xff] %vm778, %v2595
        %s2613 = sand.u32 %s104, 1
        %s2614 = sand.u32 %s104, 1
        %s2615 = smul.addr %s2614, 512
        %s2616 = scalar_lea.vmem [#allocation2], %s2615
        // Predicated region
        $region33: #{tpu_custom_call.1} parent=31 // pred_check
          %p2617 = pneg %p114
        $region34: #{tpu_custom_call.1} parent=31 // pred_check_branch
          %2619 = sbr.rel (%p2617) target = $region36
        $region35: #{tpu_custom_call.1} parent=31 // pred_region
          %s2620 = smul.u32 16, %s19
          %s2621 = smul.addr %s18, 128
          %s2622 = sadd.s32 %s2620, %s2621
          %s2623 = smul.addr %s2622, 8
          %s2624 = scalar_lea.vmem %s3, %s2623
          // Predicated region
          $region37: #{tpu_custom_call.1} parent=35 // pred_check
            _
          $region38: #{tpu_custom_call.1} parent=35 // pred_check_branch
            %2626 = sbr.rel (0) target = $region40
          $region39: #{tpu_custom_call.1} parent=35 // pred_region
            // Predicated region
            $region41: #{tpu_custom_call.1} parent=39 // pred_check
              _
            $region42: #{tpu_custom_call.1} parent=39 // pred_check_branch
              %2628 = sbr.rel (0) target = $region44
            $region43: #{tpu_custom_call.1} parent=39 // pred_region
              // Predicated region
              $region56: #{tpu_custom_call.1} parent=43 // pred_check
                _
              $region57: #{tpu_custom_call.1} parent=43 // pred_check_branch
                %2770 = sbr.rel (0) target = $region59
              $region58: #{tpu_custom_call.1} parent=43 // pred_region
                loop: start=0, step=1, limit=1
                $region60: #{tpu_custom_call.1} parent=58 // loop_pre_header
                  _
                $region61: #{tpu_custom_call.1} parent=58 // loop_header
                  %s2772 = sphi 0, %s2776
                  %p2773 = scmp.ge.s32.totalorder %s2772, 1
                  %s2777 = sphi %s2616, %s2616
                  %s2778 = sphi %s2624, %s2624
                $region62: #{tpu_custom_call.1} parent=58 // loop_header_branch
                  %2775 = sbr.rel (%p2773) target = $region66
                $region63: #{tpu_custom_call.1} parent=58 // loop_body
                  %v2779 = vld [vmem:[%s2777] sm:$0xff]
                  %2780 = vst [vmem:[%s2778] sm:$0xff] %v2779
                  %v2781 = vld [vmem:[%s2777 + $0x8] sm:$0xff]
                  %2782 = vst [vmem:[%s2778 + $0x8] sm:$0xff] %v2781
                  %v2783 = vld [vmem:[%s2777 + $0x10] sm:$0xff]
                  %2784 = vst [vmem:[%s2778 + $0x10] sm:$0xff] %v2783
                  %v2785 = vld [vmem:[%s2777 + $0x18] sm:$0xff]
                  %2786 = vst [vmem:[%s2778 + $0x18] sm:$0xff] %v2785
                  %v2787 = vld [vmem:[%s2777 + $0x20] sm:$0xff]
                  %2788 = vst [vmem:[%s2778 + $0x20] sm:$0xff] %v2787
                  %v2789 = vld [vmem:[%s2777 + $0x28] sm:$0xff]
                  %2790 = vst [vmem:[%s2778 + $0x28] sm:$0xff] %v2789
                  %v2791 = vld [vmem:[%s2777 + $0x30] sm:$0xff]
                  %2792 = vst [vmem:[%s2778 + $0x30] sm:$0xff] %v2791
                  %v2793 = vld [vmem:[%s2777 + $0x38] sm:$0xff]
                  %2794 = vst [vmem:[%s2778 + $0x38] sm:$0xff] %v2793
                  %v2795 = vld [vmem:[%s2777 + $0x40] sm:$0xff]
                  %2796 = vst [vmem:[%s2778 + $0x40] sm:$0xff] %v2795
                  %v2797 = vld [vmem:[%s2777 + $0x48] sm:$0xff]
                  %2798 = vst [vmem:[%s2778 + $0x48] sm:$0xff] %v2797
                  %v2799 = vld [vmem:[%s2777 + $0x50] sm:$0xff]
                  %2800 = vst [vmem:[%s2778 + $0x50] sm:$0xff] %v2799
                  %v2801 = vld [vmem:[%s2777 + $0x58] sm:$0xff]
                  %2802 = vst [vmem:[%s2778 + $0x58] sm:$0xff] %v2801
                  %v2803 = vld [vmem:[%s2777 + $0x60] sm:$0xff]
                  %2804 = vst [vmem:[%s2778 + $0x60] sm:$0xff] %v2803
                  %v2805 = vld [vmem:[%s2777 + $0x68] sm:$0xff]
                  %2806 = vst [vmem:[%s2778 + $0x68] sm:$0xff] %v2805
                  %v2807 = vld [vmem:[%s2777 + $0x70] sm:$0xff]
                  %2808 = vst [vmem:[%s2778 + $0x70] sm:$0xff] %v2807
                  %v2809 = vld [vmem:[%s2777 + $0x78] sm:$0xff]
                  %2810 = vst [vmem:[%s2778 + $0x78] sm:$0xff] %v2809
                  %v2811 = vld [vmem:[%s2777 + $0x80] sm:$0xff]
                  %2812 = vst [vmem:[%s2778 + $0x100] sm:$0xff] %v2811
                  %v2813 = vld [vmem:[%s2777 + $0x88] sm:$0xff]
                  %2814 = vst [vmem:[%s2778 + $0x108] sm:$0xff] %v2813
                  %v2815 = vld [vmem:[%s2777 + $0x90] sm:$0xff]
                  %2816 = vst [vmem:[%s2778 + $0x110] sm:$0xff] %v2815
                  %v2817 = vld [vmem:[%s2777 + $0x98] sm:$0xff]
                  %2818 = vst [vmem:[%s2778 + $0x118] sm:$0xff] %v2817
                  %v2819 = vld [vmem:[%s2777 + $0xa0] sm:$0xff]
                  %2820 = vst [vmem:[%s2778 + $0x120] sm:$0xff] %v2819
                  %v2821 = vld [vmem:[%s2777 + $0xa8] sm:$0xff]
                  %2822 = vst [vmem:[%s2778 + $0x128] sm:$0xff] %v2821
                  %v2823 = vld [vmem:[%s2777 + $0xb0] sm:$0xff]
                  %2824 = vst [vmem:[%s2778 + $0x130] sm:$0xff] %v2823
                  %v2825 = vld [vmem:[%s2777 + $0xb8] sm:$0xff]
                  %2826 = vst [vmem:[%s2778 + $0x138] sm:$0xff] %v2825
                  %v2827 = vld [vmem:[%s2777 + $0xc0] sm:$0xff]
                  %2828 = vst [vmem:[%s2778 + $0x140] sm:$0xff] %v2827
                  %v2829 = vld [vmem:[%s2777 + $0xc8] sm:$0xff]
                  %2830 = vst [vmem:[%s2778 + $0x148] sm:$0xff] %v2829
                  %v2831 = vld [vmem:[%s2777 + $0xd0] sm:$0xff]
                  %2832 = vst [vmem:[%s2778 + $0x150] sm:$0xff] %v2831
                  %v2833 = vld [vmem:[%s2777 + $0xd8] sm:$0xff]
                  %2834 = vst [vmem:[%s2778 + $0x158] sm:$0xff] %v2833
                  %v2835 = vld [vmem:[%s2777 + $0xe0] sm:$0xff]
                  %2836 = vst [vmem:[%s2778 + $0x160] sm:$0xff] %v2835
                  %v2837 = vld [vmem:[%s2777 + $0xe8] sm:$0xff]
                  %2838 = vst [vmem:[%s2778 + $0x168] sm:$0xff] %v2837
                  %v2839 = vld [vmem:[%s2777 + $0xf0] sm:$0xff]
                  %2840 = vst [vmem:[%s2778 + $0x170] sm:$0xff] %v2839
                  %v2841 = vld [vmem:[%s2777 + $0xf8] sm:$0xff]
                  %2842 = vst [vmem:[%s2778 + $0x178] sm:$0xff] %v2841
                  %v2843 = vld [vmem:[%s2777 + $0x100] sm:$0xff]
                  %2844 = vst [vmem:[%s2778 + $0x200] sm:$0xff] %v2843
                  %v2845 = vld [vmem:[%s2777 + $0x108] sm:$0xff]
                  %2846 = vst [vmem:[%s2778 + $0x208] sm:$0xff] %v2845
                  %v2847 = vld [vmem:[%s2777 + $0x110] sm:$0xff]
                  %2848 = vst [vmem:[%s2778 + $0x210] sm:$0xff] %v2847
                  %v2849 = vld [vmem:[%s2777 + $0x118] sm:$0xff]
                  %2850 = vst [vmem:[%s2778 + $0x218] sm:$0xff] %v2849
                  %v2851 = vld [vmem:[%s2777 + $0x120] sm:$0xff]
                  %2852 = vst [vmem:[%s2778 + $0x220] sm:$0xff] %v2851
                  %v2853 = vld [vmem:[%s2777 + $0x128] sm:$0xff]
                  %2854 = vst [vmem:[%s2778 + $0x228] sm:$0xff] %v2853
                  %v2855 = vld [vmem:[%s2777 + $0x130] sm:$0xff]
                  %2856 = vst [vmem:[%s2778 + $0x230] sm:$0xff] %v2855
                  %v2857 = vld [vmem:[%s2777 + $0x138] sm:$0xff]
                  %2858 = vst [vmem:[%s2778 + $0x238] sm:$0xff] %v2857
                  %v2859 = vld [vmem:[%s2777 + $0x140] sm:$0xff]
                  %2860 = vst [vmem:[%s2778 + $0x240] sm:$0xff] %v2859
                  %v2861 = vld [vmem:[%s2777 + $0x148] sm:$0xff]
                  %2862 = vst [vmem:[%s2778 + $0x248] sm:$0xff] %v2861
                  %v2863 = vld [vmem:[%s2777 + $0x150] sm:$0xff]
                  %2864 = vst [vmem:[%s2778 + $0x250] sm:$0xff] %v2863
                  %v2865 = vld [vmem:[%s2777 + $0x158] sm:$0xff]
                  %2866 = vst [vmem:[%s2778 + $0x258] sm:$0xff] %v2865
                  %v2867 = vld [vmem:[%s2777 + $0x160] sm:$0xff]
                  %2868 = vst [vmem:[%s2778 + $0x260] sm:$0xff] %v2867
                  %v2869 = vld [vmem:[%s2777 + $0x168] sm:$0xff]
                  %2870 = vst [vmem:[%s2778 + $0x268] sm:$0xff] %v2869
                  %v2871 = vld [vmem:[%s2777 + $0x170] sm:$0xff]
                  %2872 = vst [vmem:[%s2778 + $0x270] sm:$0xff] %v2871
                  %v2873 = vld [vmem:[%s2777 + $0x178] sm:$0xff]
                  %2874 = vst [vmem:[%s2778 + $0x278] sm:$0xff] %v2873
                  %v2875 = vld [vmem:[%s2777 + $0x180] sm:$0xff]
                  %2876 = vst [vmem:[%s2778 + $0x300] sm:$0xff] %v2875
                  %v2877 = vld [vmem:[%s2777 + $0x188] sm:$0xff]
                  %2878 = vst [vmem:[%s2778 + $0x308] sm:$0xff] %v2877
                  %v2879 = vld [vmem:[%s2777 + $0x190] sm:$0xff]
                  %2880 = vst [vmem:[%s2778 + $0x310] sm:$0xff] %v2879
                  %v2881 = vld [vmem:[%s2777 + $0x198] sm:$0xff]
                  %2882 = vst [vmem:[%s2778 + $0x318] sm:$0xff] %v2881
                  %v2883 = vld [vmem:[%s2777 + $0x1a0] sm:$0xff]
                  %2884 = vst [vmem:[%s2778 + $0x320] sm:$0xff] %v2883
                  %v2885 = vld [vmem:[%s2777 + $0x1a8] sm:$0xff]
                  %2886 = vst [vmem:[%s2778 + $0x328] sm:$0xff] %v2885
                  %v2887 = vld [vmem:[%s2777 + $0x1b0] sm:$0xff]
                  %2888 = vst [vmem:[%s2778 + $0x330] sm:$0xff] %v2887
                  %v2889 = vld [vmem:[%s2777 + $0x1b8] sm:$0xff]
                  %2890 = vst [vmem:[%s2778 + $0x338] sm:$0xff] %v2889
                  %v2891 = vld [vmem:[%s2777 + $0x1c0] sm:$0xff]
                  %2892 = vst [vmem:[%s2778 + $0x340] sm:$0xff] %v2891
                  %v2893 = vld [vmem:[%s2777 + $0x1c8] sm:$0xff]
                  %2894 = vst [vmem:[%s2778 + $0x348] sm:$0xff] %v2893
                  %v2895 = vld [vmem:[%s2777 + $0x1d0] sm:$0xff]
                  %2896 = vst [vmem:[%s2778 + $0x350] sm:$0xff] %v2895
                  %v2897 = vld [vmem:[%s2777 + $0x1d8] sm:$0xff]
                  %2898 = vst [vmem:[%s2778 + $0x358] sm:$0xff] %v2897
                  %v2899 = vld [vmem:[%s2777 + $0x1e0] sm:$0xff]
                  %2900 = vst [vmem:[%s2778 + $0x360] sm:$0xff] %v2899
                  %v2901 = vld [vmem:[%s2777 + $0x1e8] sm:$0xff]
                  %2902 = vst [vmem:[%s2778 + $0x368] sm:$0xff] %v2901
                  %v2903 = vld [vmem:[%s2777 + $0x1f0] sm:$0xff]
                  %2904 = vst [vmem:[%s2778 + $0x370] sm:$0xff] %v2903
                  %v2905 = vld [vmem:[%s2777 + $0x1f8] sm:$0xff]
                  %2906 = vst [vmem:[%s2778 + $0x378] sm:$0xff] %v2905
                $region64: #{tpu_custom_call.1} parent=58 // loop_footer
                  %s2776 = sadd.s32 1, %s2772
                $region65: #{tpu_custom_call.1} parent=58 // loop_footer_branch
                  %2771 = sbr.rel target = $region61
                $region66: #{tpu_custom_call.1} parent=58 // loop_exit
                  _
              $region59: #{tpu_custom_call.1} parent=43 // pred_fallthru
                _
              // Predicated region
              $region67: #{tpu_custom_call.1} parent=43 // pred_check
                _
              $region68: #{tpu_custom_call.1} parent=43 // pred_check_branch
                %2908 = sbr.rel target = $region70
              $region69: #{tpu_custom_call.1} parent=43 // pred_region
                _
              $region70: #{tpu_custom_call.1} parent=43 // pred_fallthru
                _
            $region44: #{tpu_custom_call.1} parent=39 // pred_fallthru
              _
            // Predicated region
            $region45: #{tpu_custom_call.1} parent=39 // pred_check
              _
            $region46: #{tpu_custom_call.1} parent=39 // pred_check_branch
              %2630 = sbr.rel target = $region48
            $region47: #{tpu_custom_call.1} parent=39 // pred_region
              %s2632 = ssub.s32 256, 1
              loop: start=0, step=1, limit=1
              $region49: #{tpu_custom_call.1} parent=47 // loop_pre_header
                _
              $region50: #{tpu_custom_call.1} parent=47 // loop_header
                %s2634 = sphi 0, %s2638
                %p2635 = scmp.ge.s32.totalorder %s2634, 1
                %s2639 = sphi %s2616, %s2616
                %s2640 = sphi %s2624, %s2624
              $region51: #{tpu_custom_call.1} parent=47 // loop_header_branch
                %2637 = sbr.rel (%p2635) target = $region55
              $region52: #{tpu_custom_call.1} parent=47 // loop_body
                %v2641 = vld [vmem:[%s2639] sm:%s2632]
                %2642 = vst [vmem:[%s2640] sm:%s2632] %v2641
                %v2643 = vld [vmem:[%s2639 + $0x8] sm:%s2632]
                %2644 = vst [vmem:[%s2640 + $0x8] sm:%s2632] %v2643
                %v2645 = vld [vmem:[%s2639 + $0x10] sm:%s2632]
                %2646 = vst [vmem:[%s2640 + $0x10] sm:%s2632] %v2645
                %v2647 = vld [vmem:[%s2639 + $0x18] sm:%s2632]
                %2648 = vst [vmem:[%s2640 + $0x18] sm:%s2632] %v2647
                %v2649 = vld [vmem:[%s2639 + $0x20] sm:%s2632]
                %2650 = vst [vmem:[%s2640 + $0x20] sm:%s2632] %v2649
                %v2651 = vld [vmem:[%s2639 + $0x28] sm:%s2632]
                %2652 = vst [vmem:[%s2640 + $0x28] sm:%s2632] %v2651
                %v2653 = vld [vmem:[%s2639 + $0x30] sm:%s2632]
                %2654 = vst [vmem:[%s2640 + $0x30] sm:%s2632] %v2653
                %v2655 = vld [vmem:[%s2639 + $0x38] sm:%s2632]
                %2656 = vst [vmem:[%s2640 + $0x38] sm:%s2632] %v2655
                %v2657 = vld [vmem:[%s2639 + $0x40] sm:%s2632]
                %2658 = vst [vmem:[%s2640 + $0x40] sm:%s2632] %v2657
                %v2659 = vld [vmem:[%s2639 + $0x48] sm:%s2632]
                %2660 = vst [vmem:[%s2640 + $0x48] sm:%s2632] %v2659
                %v2661 = vld [vmem:[%s2639 + $0x50] sm:%s2632]
                %2662 = vst [vmem:[%s2640 + $0x50] sm:%s2632] %v2661
                %v2663 = vld [vmem:[%s2639 + $0x58] sm:%s2632]
                %2664 = vst [vmem:[%s2640 + $0x58] sm:%s2632] %v2663
                %v2665 = vld [vmem:[%s2639 + $0x60] sm:%s2632]
                %2666 = vst [vmem:[%s2640 + $0x60] sm:%s2632] %v2665
                %v2667 = vld [vmem:[%s2639 + $0x68] sm:%s2632]
                %2668 = vst [vmem:[%s2640 + $0x68] sm:%s2632] %v2667
                %v2669 = vld [vmem:[%s2639 + $0x70] sm:%s2632]
                %2670 = vst [vmem:[%s2640 + $0x70] sm:%s2632] %v2669
                %v2671 = vld [vmem:[%s2639 + $0x78] sm:%s2632]
                %2672 = vst [vmem:[%s2640 + $0x78] sm:%s2632] %v2671
                %v2673 = vld [vmem:[%s2639 + $0x80] sm:%s2632]
                %2674 = vst [vmem:[%s2640 + $0x100] sm:%s2632] %v2673
                %v2675 = vld [vmem:[%s2639 + $0x88] sm:%s2632]
                %2676 = vst [vmem:[%s2640 + $0x108] sm:%s2632] %v2675
                %v2677 = vld [vmem:[%s2639 + $0x90] sm:%s2632]
                %2678 = vst [vmem:[%s2640 + $0x110] sm:%s2632] %v2677
                %v2679 = vld [vmem:[%s2639 + $0x98] sm:%s2632]
                %2680 = vst [vmem:[%s2640 + $0x118] sm:%s2632] %v2679
                %v2681 = vld [vmem:[%s2639 + $0xa0] sm:%s2632]
                %2682 = vst [vmem:[%s2640 + $0x120] sm:%s2632] %v2681
                %v2683 = vld [vmem:[%s2639 + $0xa8] sm:%s2632]
                %2684 = vst [vmem:[%s2640 + $0x128] sm:%s2632] %v2683
                %v2685 = vld [vmem:[%s2639 + $0xb0] sm:%s2632]
                %2686 = vst [vmem:[%s2640 + $0x130] sm:%s2632] %v2685
                %v2687 = vld [vmem:[%s2639 + $0xb8] sm:%s2632]
                %2688 = vst [vmem:[%s2640 + $0x138] sm:%s2632] %v2687
                %v2689 = vld [vmem:[%s2639 + $0xc0] sm:%s2632]
                %2690 = vst [vmem:[%s2640 + $0x140] sm:%s2632] %v2689
                %v2691 = vld [vmem:[%s2639 + $0xc8] sm:%s2632]
                %2692 = vst [vmem:[%s2640 + $0x148] sm:%s2632] %v2691
                %v2693 = vld [vmem:[%s2639 + $0xd0] sm:%s2632]
                %2694 = vst [vmem:[%s2640 + $0x150] sm:%s2632] %v2693
                %v2695 = vld [vmem:[%s2639 + $0xd8] sm:%s2632]
                %2696 = vst [vmem:[%s2640 + $0x158] sm:%s2632] %v2695
                %v2697 = vld [vmem:[%s2639 + $0xe0] sm:%s2632]
                %2698 = vst [vmem:[%s2640 + $0x160] sm:%s2632] %v2697
                %v2699 = vld [vmem:[%s2639 + $0xe8] sm:%s2632]
                %2700 = vst [vmem:[%s2640 + $0x168] sm:%s2632] %v2699
                %v2701 = vld [vmem:[%s2639 + $0xf0] sm:%s2632]
                %2702 = vst [vmem:[%s2640 + $0x170] sm:%s2632] %v2701
                %v2703 = vld [vmem:[%s2639 + $0xf8] sm:%s2632]
                %2704 = vst [vmem:[%s2640 + $0x178] sm:%s2632] %v2703
                %v2705 = vld [vmem:[%s2639 + $0x100] sm:%s2632]
                %2706 = vst [vmem:[%s2640 + $0x200] sm:%s2632] %v2705
                %v2707 = vld [vmem:[%s2639 + $0x108] sm:%s2632]
                %2708 = vst [vmem:[%s2640 + $0x208] sm:%s2632] %v2707
                %v2709 = vld [vmem:[%s2639 + $0x110] sm:%s2632]
                %2710 = vst [vmem:[%s2640 + $0x210] sm:%s2632] %v2709
                %v2711 = vld [vmem:[%s2639 + $0x118] sm:%s2632]
                %2712 = vst [vmem:[%s2640 + $0x218] sm:%s2632] %v2711
                %v2713 = vld [vmem:[%s2639 + $0x120] sm:%s2632]
                %2714 = vst [vmem:[%s2640 + $0x220] sm:%s2632] %v2713
                %v2715 = vld [vmem:[%s2639 + $0x128] sm:%s2632]
                %2716 = vst [vmem:[%s2640 + $0x228] sm:%s2632] %v2715
                %v2717 = vld [vmem:[%s2639 + $0x130] sm:%s2632]
                %2718 = vst [vmem:[%s2640 + $0x230] sm:%s2632] %v2717
                %v2719 = vld [vmem:[%s2639 + $0x138] sm:%s2632]
                %2720 = vst [vmem:[%s2640 + $0x238] sm:%s2632] %v2719
                %v2721 = vld [vmem:[%s2639 + $0x140] sm:%s2632]
                %2722 = vst [vmem:[%s2640 + $0x240] sm:%s2632] %v2721
                %v2723 = vld [vmem:[%s2639 + $0x148] sm:%s2632]
                %2724 = vst [vmem:[%s2640 + $0x248] sm:%s2632] %v2723
                %v2725 = vld [vmem:[%s2639 + $0x150] sm:%s2632]
                %2726 = vst [vmem:[%s2640 + $0x250] sm:%s2632] %v2725
                %v2727 = vld [vmem:[%s2639 + $0x158] sm:%s2632]
                %2728 = vst [vmem:[%s2640 + $0x258] sm:%s2632] %v2727
                %v2729 = vld [vmem:[%s2639 + $0x160] sm:%s2632]
                %2730 = vst [vmem:[%s2640 + $0x260] sm:%s2632] %v2729
                %v2731 = vld [vmem:[%s2639 + $0x168] sm:%s2632]
                %2732 = vst [vmem:[%s2640 + $0x268] sm:%s2632] %v2731
                %v2733 = vld [vmem:[%s2639 + $0x170] sm:%s2632]
                %2734 = vst [vmem:[%s2640 + $0x270] sm:%s2632] %v2733
                %v2735 = vld [vmem:[%s2639 + $0x178] sm:%s2632]
                %2736 = vst [vmem:[%s2640 + $0x278] sm:%s2632] %v2735
                %v2737 = vld [vmem:[%s2639 + $0x180] sm:%s2632]
                %2738 = vst [vmem:[%s2640 + $0x300] sm:%s2632] %v2737
                %v2739 = vld [vmem:[%s2639 + $0x188] sm:%s2632]
                %2740 = vst [vmem:[%s2640 + $0x308] sm:%s2632] %v2739
                %v2741 = vld [vmem:[%s2639 + $0x190] sm:%s2632]
                %2742 = vst [vmem:[%s2640 + $0x310] sm:%s2632] %v2741
                %v2743 = vld [vmem:[%s2639 + $0x198] sm:%s2632]
                %2744 = vst [vmem:[%s2640 + $0x318] sm:%s2632] %v2743
                %v2745 = vld [vmem:[%s2639 + $0x1a0] sm:%s2632]
                %2746 = vst [vmem:[%s2640 + $0x320] sm:%s2632] %v2745
                %v2747 = vld [vmem:[%s2639 + $0x1a8] sm:%s2632]
                %2748 = vst [vmem:[%s2640 + $0x328] sm:%s2632] %v2747
                %v2749 = vld [vmem:[%s2639 + $0x1b0] sm:%s2632]
                %2750 = vst [vmem:[%s2640 + $0x330] sm:%s2632] %v2749
                %v2751 = vld [vmem:[%s2639 + $0x1b8] sm:%s2632]
                %2752 = vst [vmem:[%s2640 + $0x338] sm:%s2632] %v2751
                %v2753 = vld [vmem:[%s2639 + $0x1c0] sm:%s2632]
                %2754 = vst [vmem:[%s2640 + $0x340] sm:%s2632] %v2753
                %v2755 = vld [vmem:[%s2639 + $0x1c8] sm:%s2632]
                %2756 = vst [vmem:[%s2640 + $0x348] sm:%s2632] %v2755
                %v2757 = vld [vmem:[%s2639 + $0x1d0] sm:%s2632]
                %2758 = vst [vmem:[%s2640 + $0x350] sm:%s2632] %v2757
                %v2759 = vld [vmem:[%s2639 + $0x1d8] sm:%s2632]
                %2760 = vst [vmem:[%s2640 + $0x358] sm:%s2632] %v2759
                %v2761 = vld [vmem:[%s2639 + $0x1e0] sm:%s2632]
                %2762 = vst [vmem:[%s2640 + $0x360] sm:%s2632] %v2761
                %v2763 = vld [vmem:[%s2639 + $0x1e8] sm:%s2632]
                %2764 = vst [vmem:[%s2640 + $0x368] sm:%s2632] %v2763
                %v2765 = vld [vmem:[%s2639 + $0x1f0] sm:%s2632]
                %2766 = vst [vmem:[%s2640 + $0x370] sm:%s2632] %v2765
                %v2767 = vld [vmem:[%s2639 + $0x1f8] sm:%s2632]
                %2768 = vst [vmem:[%s2640 + $0x378] sm:%s2632] %v2767
              $region53: #{tpu_custom_call.1} parent=47 // loop_footer
                %s2638 = sadd.s32 1, %s2634
              $region54: #{tpu_custom_call.1} parent=47 // loop_footer_branch
                %2633 = sbr.rel target = $region50
              $region55: #{tpu_custom_call.1} parent=47 // loop_exit
                _
            $region48: #{tpu_custom_call.1} parent=39 // pred_fallthru
              _
          $region40: #{tpu_custom_call.1} parent=35 // pred_fallthru
            _
          %2909 = vnop
        $region36: #{tpu_custom_call.1} parent=31 // pred_fallthru
          _
      $region32: #{tpu_custom_call.1} parent=5 // pred_fallthru
        _
      %p2910 = scmp.le.s32.totalorder 2, %s9
      // Predicated region
      $region71: #{tpu_custom_call.1} parent=5 // pred_check
        %p2911 = pneg %p2910
      $region72: #{tpu_custom_call.1} parent=5 // pred_check_branch
        %2913 = sbr.rel (%p2911) target = $region74
      $region73: #{tpu_custom_call.1} parent=5 // pred_region
        %s2914 = ssub.s32 %s9, 2
        // Predicated region
        $region75: #{tpu_custom_call.1} parent=73 // pred_check
          %p2915 = pneg %p120
        $region76: #{tpu_custom_call.1} parent=73 // pred_check_branch
          %2917 = sbr.rel (%p2915) target = $region78
        $region77: #{tpu_custom_call.1} parent=73 // pred_region
          %s2918 = sand.u32 %s105, 1
          %s2919 = sand.u32 %s105, 1
          %s2920 = smul.addr %s2919, 512
          %s2921 = scalar_lea.vmem [#allocation2], %s2920
        $region78: #{tpu_custom_call.1} parent=73 // pred_fallthru
          _
      $region74: #{tpu_custom_call.1} parent=5 // pred_fallthru
        _
    $region6: #{tpu_custom_call.1} parent=1 // loop_footer
      %s13 = sadd.s32 1, %s9
    $region7: #{tpu_custom_call.1} parent=1 // loop_footer_branch
      %8 = sbr.rel target = $region3
    $region8: #{tpu_custom_call.1} parent=1 // loop_exit
      _

</llo_original>
